<compile_context>
chip_gen: v6e
topology: v6e:2x2x1
jax: 0.10.0
libtpu: 0.0.40
codegen_flags: <defaults>
</compile_context>

<pallas_src>
import jax
import jax.numpy as jnp
from jax.experimental import pallas as pl
from jax.experimental.pallas import tpu as pltpu

EPS = 1e-5  # nn.InstanceNorm2d default (affine=False, no running stats)


def _make_fused_block_kernel(H, W, C):
    """Kernel: x -> [pad->conv3x3->IN->ReLU] -> [pad->conv3x3->IN] -> + x."""
    Hp, Wp = H + 2, W + 2
    HW = H * W
    inv_hw = 1.0 / float(HW)

    def fill_reflect_pad(pad_ref, v):
        # ReflectionPad2d(1) of v (H, W, C) into pad_ref (H+2, W+2, C).
        pad_ref[1:H + 1, 1:W + 1, :] = v                      # interior
        pad_ref[0:1, 1:W + 1, :] = v[1:2]                     # top    <- row 1
        pad_ref[H + 1:H + 2, 1:W + 1, :] = v[H - 2:H - 1]     # bottom <- row H-2
        pad_ref[:, 0:1, :] = pad_ref[:, 2:3, :]               # left   <- col 1
        pad_ref[:, W + 1:W + 2, :] = pad_ref[:, W - 1:W, :]   # right  <- col W-2

    def conv3x3(pad_ref, w):
        # VALID 3x3 conv over the padded image as 9 bf16 MXU matmuls with f32
        # accumulation.  The three dx-shifted slabs are built & flattened ONCE,
        # so each tap is a contiguous row window of a 2-D slab — no per-tap
        # reshape / tile-boundary relayout in the inner loop.
        xp = pad_ref[...].astype(jnp.bfloat16)                # (Hp, Wp, C)
        cols = [xp[:, dx:dx + W, :].reshape(Hp * W, C) for dx in range(3)]
        acc = jnp.zeros((HW, C), jnp.float32)
        for dy in range(3):
            lo = dy * W
            for dx in range(3):
                acc = acc + jnp.dot(cols[dx][lo:lo + HW], w[dy, dx],
                                    preferred_element_type=jnp.float32)
        return acc                                            # (H*W, C) f32

    def instance_norm(acc):
        # One-pass stats in f32 (biased variance, matching InstanceNorm2d).
        mean = jnp.sum(acc, axis=0, keepdims=True) * inv_hw
        ex2 = jnp.sum(acc * acc, axis=0, keepdims=True) * inv_hw
        var = ex2 - mean * mean
        return (acc - mean) * jax.lax.rsqrt(var + EPS)

    def kernel(x_ref, w1_ref, w2_ref, out_ref, pad_ref):
        x = x_ref[0]                                          # (H, W, C) f32
        # Stage 1: reflection pad -> conv -> InstanceNorm -> ReLU.
        # (Conv bias dropped: exactly cancelled by the IN mean subtraction.)
        fill_reflect_pad(pad_ref, x)
        h = jnp.maximum(instance_norm(conv3x3(pad_ref, w1_ref[...])), 0.0)
        # Stage 2: reflection pad (in-kernel, same scratch) -> conv -> IN.
        # `h` stays in VMEM; no HBM round trip between the two stages.
        fill_reflect_pad(pad_ref, h.reshape(H, W, C))
        y = instance_norm(conv3x3(pad_ref, w2_ref[...]))
        # Residual add in f32.
        out_ref[0] = y.reshape(H, W, C) + x

    return kernel


@jax.jit
def resnet_block_forward(x_nchw, w1, b1, w2, b2):
    """Forward of ResNetBlock; input/output are NCHW to match PyTorch.

    Conv biases are accepted for parameter parity but unused: adding a
    per-channel constant before a non-affine InstanceNorm is algebraically a
    no-op (mean subtraction cancels it; variance is unchanged).
    """
    del b1, b2
    x = jnp.transpose(x_nchw, (0, 2, 3, 1)).astype(jnp.float32)   # -> NHWC
    N, H, W, C = x.shape
    w1b = w1.astype(jnp.bfloat16)   # bf16 weights for the MXU (f32 accumulate)
    w2b = w2.astype(jnp.bfloat16)

    # TODO(synk): at production sizes (e.g. 256x256x128) add spatial row-tiling
    # with a 2-row halo + a two-phase InstanceNorm reduction; whole-image
    # blocks would exceed v7x's 64 MiB VMEM and give its 2 TensorCores too few
    # grid steps.  Also pad C up to a multiple of 128 for lane-dense stores.
    out = pl.pallas_call(
        _make_fused_block_kernel(H, W, C),
        out_shape=jax.ShapeDtypeStruct((N, H, W, C), jnp.float32),
        grid=(N,),
        in_specs=[
            pl.BlockSpec((1, H, W, C), lambda n: (n, 0, 0, 0)),
            pl.BlockSpec((3, 3, C, C), lambda n: (0, 0, 0, 0)),
            pl.BlockSpec((3, 3, C, C), lambda n: (0, 0, 0, 0)),
        ],
        out_specs=pl.BlockSpec((1, H, W, C), lambda n: (n, 0, 0, 0)),
        scratch_shapes=[pltpu.VMEM((H + 2, W + 2, C), jnp.float32)],
        compiler_params=pltpu.CompilerParams(dimension_semantics=("parallel",)),
    )(x, w1b, w2b)
    return jnp.transpose(out, (0, 3, 1, 2))                       # -> NCHW


def _reference_forward(x_nchw, w1, b1, w2, b2, conv_dtype=jnp.float32):
    """Pure-JAX reference (lax.conv).  conv_dtype=bfloat16 matches the kernel's
    MXU input precision; conv_dtype=float32 is the full-precision module."""

    def stage(x_nhwc, w, b, relu):
        xp = jnp.pad(x_nhwc, ((0, 0), (1, 1), (1, 1), (0, 0)), mode="reflect")
        y = jax.lax.conv_general_dilated(
            xp.astype(conv_dtype), w.astype(conv_dtype),
            window_strides=(1, 1), padding="VALID",
            dimension_numbers=("NHWC", "HWIO", "NHWC"),
            preferred_element_type=jnp.float32,
            precision=jax.lax.Precision.HIGHEST,
        ) + b[0][None, None, None, :]
        mean = jnp.mean(y, axis=(1, 2), keepdims=True)
        var = jnp.mean((y - mean) ** 2, axis=(1, 2), keepdims=True)
        y = (y - mean) * jax.lax.rsqrt(var + EPS)
        return jnp.maximum(y, 0.0) if relu else y

    x = jnp.transpose(x_nchw, (0, 2, 3, 1)).astype(jnp.float32)
    h = stage(x, w1, b1, relu=True)
    o = stage(h, w2, b2, relu=False) + x
    return jnp.transpose(o, (0, 3, 1, 2))


def init_params(key, channels):
    """Deterministic init matching nn.Conv2d parameter shapes (weights HWIO)."""
    k1, k2, k3, k4 = jax.random.split(key, 4)
    fan_in = channels * 3 * 3
    bound = 1.0 / jnp.sqrt(fan_in)
    w1 = jax.random.uniform(k1, (3, 3, channels, channels), jnp.float32, -bound, bound)
    b1 = jax.random.uniform(k2, (1, channels), jnp.float32, -bound, bound)
    w2 = jax.random.uniform(k3, (3, 3, channels, channels), jnp.float32, -bound, bound)
    b2 = jax.random.uniform(k4, (1, channels), jnp.float32, -bound, bound)
    return w1, b1, w2, b2


if __name__ == "__main__":
    key = jax.random.PRNGKey(0)
    kx, kp = jax.random.split(key)

    N, C, H, W = 2, 4, 16, 16
    x = jax.random.normal(kx, (N, C, H, W), jnp.float32)
    w1, b1, w2, b2 = init_params(kp, C)

    out = jax.block_until_ready(resnet_block_forward(x, w1, b1, w2, b2))
    assert out.shape == (N, C, H, W)

    # Precision-matched check (reference also feeds bf16 to the conv).
    ref_bf16 = _reference_forward(x, w1, b1, w2, b2, conv_dtype=jnp.bfloat16)
    assert jnp.allclose(out, ref_bf16, atol=1e-2, rtol=1e-2), \
        "mismatch vs bf16-conv JAX reference"

    # Sanity check vs full-f32 module semantics (loose: kernel uses bf16 MXU inputs).
    ref_f32 = _reference_forward(x, w1, b1, w2, b2, conv_dtype=jnp.float32)
    assert jnp.allclose(out, ref_f32, atol=5e-2, rtol=5e-2), \
        "mismatch vs f32 JAX reference"

    print("KERNEL_OK")
</pallas_src>

<mosaic_0001>
module attributes {stable_mosaic.version = 11 : i64} {
  func.func @kernel(%arg0: i32, %arg1: memref<1x16x16x4xf32, #tpu.memory_space<vmem>>, %arg2: memref<3x3x4x4xbf16, #tpu.memory_space<vmem>>, %arg3: memref<3x3x4x4xbf16, #tpu.memory_space<vmem>>, %arg4: memref<1x16x16x4xf32, #tpu.memory_space<vmem>>, %arg5: memref<18x18x4xf32, #tpu.memory_space<vmem>>) attributes {dimension_semantics = [#tpu.dimension_semantics<parallel>], iteration_bounds = array<i64: 2>, scalar_prefetch = 0 : i64, scratch_operands = 1 : i64, tpu.core_type = #tpu.core_type<tc>, window_params = [{transform_indices = @transform_0, window_bounds = array<i64: 1, 16, 16, 4>}, {pipeline_mode = #tpu.pipeline_mode<synchronous>, transform_indices = @transform_1, window_bounds = array<i64: 3, 3, 4, 4>}, {pipeline_mode = #tpu.pipeline_mode<synchronous>, transform_indices = @transform_2, window_bounds = array<i64: 3, 3, 4, 4>}, {transform_indices = @transform_3, window_bounds = array<i64: 1, 16, 16, 4>}]} {
    %c0 = arith.constant 0 : index
    %c0_0 = arith.constant 0 : index
    %c0_1 = arith.constant 0 : index
    %c0_2 = arith.constant 0 : index
    %0 = vector.load %arg1[%c0, %c0_0, %c0_1, %c0_2] : memref<1x16x16x4xf32, #tpu.memory_space<vmem>>, vector<1x16x16x4xf32>
    %1 = vector.shape_cast %0 : vector<1x16x16x4xf32> to vector<16x16x4xf32>
    %c1 = arith.constant 1 : index
    %c1_3 = arith.constant 1 : index
    %c0_4 = arith.constant 0 : index
    %2 = vector.load %arg5[%c1, %c1_3, %c0_4] : memref<18x18x4xf32, #tpu.memory_space<vmem>>, vector<16x16x4xf32>
    tpu.vector_store %arg5[%c1, %c1_3, %c0_4], %1 {strides = array<i32>} : memref<18x18x4xf32, #tpu.memory_space<vmem>>, vector<16x16x4xf32>,
    %3 = vector.extract_strided_slice %1 {offsets = [1, 0, 0], sizes = [1, 16, 4], strides = [1, 1, 1]} : vector<16x16x4xf32> to vector<1x16x4xf32>
    %c0_5 = arith.constant 0 : index
    %c1_6 = arith.constant 1 : index
    %c0_7 = arith.constant 0 : index
    %4 = vector.load %arg5[%c0_5, %c1_6, %c0_7] : memref<18x18x4xf32, #tpu.memory_space<vmem>>, vector<1x16x4xf32>
    tpu.vector_store %arg5[%c0_5, %c1_6, %c0_7], %3 {strides = array<i32>} : memref<18x18x4xf32, #tpu.memory_space<vmem>>, vector<1x16x4xf32>,
    %5 = vector.extract_strided_slice %1 {offsets = [14, 0, 0], sizes = [1, 16, 4], strides = [1, 1, 1]} : vector<16x16x4xf32> to vector<1x16x4xf32>
    %c17 = arith.constant 17 : index
    %c1_8 = arith.constant 1 : index
    %c0_9 = arith.constant 0 : index
    %6 = vector.load %arg5[%c17, %c1_8, %c0_9] : memref<18x18x4xf32, #tpu.memory_space<vmem>>, vector<1x16x4xf32>
    tpu.vector_store %arg5[%c17, %c1_8, %c0_9], %5 {strides = array<i32>} : memref<18x18x4xf32, #tpu.memory_space<vmem>>, vector<1x16x4xf32>,
    %c0_10 = arith.constant 0 : index
    %c2 = arith.constant 2 : index
    %c0_11 = arith.constant 0 : index
    %7 = vector.load %arg5[%c0_10, %c2, %c0_11] : memref<18x18x4xf32, #tpu.memory_space<vmem>>, vector<18x1x4xf32>
    %c0_12 = arith.constant 0 : index
    %c0_13 = arith.constant 0 : index
    %c0_14 = arith.constant 0 : index
    %8 = vector.load %arg5[%c0_12, %c0_13, %c0_14] : memref<18x18x4xf32, #tpu.memory_space<vmem>>, vector<18x1x4xf32>
    tpu.vector_store %arg5[%c0_12, %c0_13, %c0_14], %7 {strides = array<i32>} : memref<18x18x4xf32, #tpu.memory_space<vmem>>, vector<18x1x4xf32>,
    %c0_15 = arith.constant 0 : index
    %c15 = arith.constant 15 : index
    %c0_16 = arith.constant 0 : index
    %9 = vector.load %arg5[%c0_15, %c15, %c0_16] : memref<18x18x4xf32, #tpu.memory_space<vmem>>, vector<18x1x4xf32>
    %c0_17 = arith.constant 0 : index
    %c17_18 = arith.constant 17 : index
    %c0_19 = arith.constant 0 : index
    %10 = vector.load %arg5[%c0_17, %c17_18, %c0_19] : memref<18x18x4xf32, #tpu.memory_space<vmem>>, vector<18x1x4xf32>
    tpu.vector_store %arg5[%c0_17, %c17_18, %c0_19], %9 {strides = array<i32>} : memref<18x18x4xf32, #tpu.memory_space<vmem>>, vector<18x1x4xf32>,
    %c0_20 = arith.constant 0 : index
    %c0_21 = arith.constant 0 : index
    %c0_22 = arith.constant 0 : index
    %c0_23 = arith.constant 0 : index
    %11 = vector.load %arg2[%c0_20, %c0_21, %c0_22, %c0_23] : memref<3x3x4x4xbf16, #tpu.memory_space<vmem>>, vector<3x3x4x4xbf16>
    %c0_24 = arith.constant 0 : index
    %c0_25 = arith.constant 0 : index
    %c0_26 = arith.constant 0 : index
    %12 = vector.load %arg5[%c0_24, %c0_25, %c0_26] : memref<18x18x4xf32, #tpu.memory_space<vmem>>, vector<18x18x4xf32>
    %13 = arith.truncf %12 : vector<18x18x4xf32> to vector<18x18x4xbf16>
    %14 = vector.extract_strided_slice %13 {offsets = [0, 0, 0], sizes = [18, 16, 4], strides = [1, 1, 1]} : vector<18x18x4xbf16> to vector<18x16x4xbf16>
    %15 = vector.shape_cast %14 : vector<18x16x4xbf16> to vector<288x4xbf16>
    %16 = vector.extract_strided_slice %13 {offsets = [0, 1, 0], sizes = [18, 16, 4], strides = [1, 1, 1]} : vector<18x18x4xbf16> to vector<18x16x4xbf16>
    %17 = vector.shape_cast %16 : vector<18x16x4xbf16> to vector<288x4xbf16>
    %18 = vector.extract_strided_slice %13 {offsets = [0, 2, 0], sizes = [18, 16, 4], strides = [1, 1, 1]} : vector<18x18x4xbf16> to vector<18x16x4xbf16>
    %19 = vector.shape_cast %18 : vector<18x16x4xbf16> to vector<288x4xbf16>
    %cst = arith.constant 0.000000e+00 : f32
    %20 = vector.broadcast %cst : f32 to vector<256x4xf32>
    %21 = vector.extract_strided_slice %15 {offsets = [0, 0], sizes = [256, 4], strides = [1, 1]} : vector<288x4xbf16> to vector<256x4xbf16>
    %22 = vector.extract_strided_slice %11 {offsets = [0, 0, 0, 0], sizes = [1, 1, 4, 4], strides = [1, 1, 1, 1]} : vector<3x3x4x4xbf16> to vector<1x1x4x4xbf16>
    %23 = vector.shape_cast %22 : vector<1x1x4x4xbf16> to vector<4x4xbf16>
    %cst_27 = arith.constant dense<0.000000e+00> : vector<256x4xf32>
    %24 = tpu.matmul %21, %23, %cst_27 {dimension_numbers = #tpu.dot_dimension_numbers<[1], [0], [0], [1], [0, 0, 1, 1], [], []>} : vector<256x4xbf16>, vector<4x4xbf16>, vector<256x4xf32> -> vector<256x4xf32>
    %25 = arith.addf %20, %24 : vector<256x4xf32>
    %26 = vector.extract_strided_slice %17 {offsets = [0, 0], sizes = [256, 4], strides = [1, 1]} : vector<288x4xbf16> to vector<256x4xbf16>
    %27 = vector.extract_strided_slice %11 {offsets = [0, 1, 0, 0], sizes = [1, 1, 4, 4], strides = [1, 1, 1, 1]} : vector<3x3x4x4xbf16> to vector<1x1x4x4xbf16>
    %28 = vector.shape_cast %27 : vector<1x1x4x4xbf16> to vector<4x4xbf16>
    %cst_28 = arith.constant dense<0.000000e+00> : vector<256x4xf32>
    %29 = tpu.matmul %26, %28, %cst_28 {dimension_numbers = #tpu.dot_dimension_numbers<[1], [0], [0], [1], [0, 0, 1, 1], [], []>} : vector<256x4xbf16>, vector<4x4xbf16>, vector<256x4xf32> -> vector<256x4xf32>
    %30 = arith.addf %25, %29 : vector<256x4xf32>
    %31 = vector.extract_strided_slice %19 {offsets = [0, 0], sizes = [256, 4], strides = [1, 1]} : vector<288x4xbf16> to vector<256x4xbf16>
    %32 = vector.extract_strided_slice %11 {offsets = [0, 2, 0, 0], sizes = [1, 1, 4, 4], strides = [1, 1, 1, 1]} : vector<3x3x4x4xbf16> to vector<1x1x4x4xbf16>
    %33 = vector.shape_cast %32 : vector<1x1x4x4xbf16> to vector<4x4xbf16>
    %cst_29 = arith.constant dense<0.000000e+00> : vector<256x4xf32>
    %34 = tpu.matmul %31, %33, %cst_29 {dimension_numbers = #tpu.dot_dimension_numbers<[1], [0], [0], [1], [0, 0, 1, 1], [], []>} : vector<256x4xbf16>, vector<4x4xbf16>, vector<256x4xf32> -> vector<256x4xf32>
    %35 = arith.addf %30, %34 : vector<256x4xf32>
    %36 = vector.extract_strided_slice %15 {offsets = [16, 0], sizes = [256, 4], strides = [1, 1]} : vector<288x4xbf16> to vector<256x4xbf16>
    %37 = vector.extract_strided_slice %11 {offsets = [1, 0, 0, 0], sizes = [1, 1, 4, 4], strides = [1, 1, 1, 1]} : vector<3x3x4x4xbf16> to vector<1x1x4x4xbf16>
    %38 = vector.shape_cast %37 : vector<1x1x4x4xbf16> to vector<4x4xbf16>
    %cst_30 = arith.constant dense<0.000000e+00> : vector<256x4xf32>
    %39 = tpu.matmul %36, %38, %cst_30 {dimension_numbers = #tpu.dot_dimension_numbers<[1], [0], [0], [1], [0, 0, 1, 1], [], []>} : vector<256x4xbf16>, vector<4x4xbf16>, vector<256x4xf32> -> vector<256x4xf32>
    %40 = arith.addf %35, %39 : vector<256x4xf32>
    %41 = vector.extract_strided_slice %17 {offsets = [16, 0], sizes = [256, 4], strides = [1, 1]} : vector<288x4xbf16> to vector<256x4xbf16>
    %42 = vector.extract_strided_slice %11 {offsets = [1, 1, 0, 0], sizes = [1, 1, 4, 4], strides = [1, 1, 1, 1]} : vector<3x3x4x4xbf16> to vector<1x1x4x4xbf16>
    %43 = vector.shape_cast %42 : vector<1x1x4x4xbf16> to vector<4x4xbf16>
    %cst_31 = arith.constant dense<0.000000e+00> : vector<256x4xf32>
    %44 = tpu.matmul %41, %43, %cst_31 {dimension_numbers = #tpu.dot_dimension_numbers<[1], [0], [0], [1], [0, 0, 1, 1], [], []>} : vector<256x4xbf16>, vector<4x4xbf16>, vector<256x4xf32> -> vector<256x4xf32>
    %45 = arith.addf %40, %44 : vector<256x4xf32>
    %46 = vector.extract_strided_slice %19 {offsets = [16, 0], sizes = [256, 4], strides = [1, 1]} : vector<288x4xbf16> to vector<256x4xbf16>
    %47 = vector.extract_strided_slice %11 {offsets = [1, 2, 0, 0], sizes = [1, 1, 4, 4], strides = [1, 1, 1, 1]} : vector<3x3x4x4xbf16> to vector<1x1x4x4xbf16>
    %48 = vector.shape_cast %47 : vector<1x1x4x4xbf16> to vector<4x4xbf16>
    %cst_32 = arith.constant dense<0.000000e+00> : vector<256x4xf32>
    %49 = tpu.matmul %46, %48, %cst_32 {dimension_numbers = #tpu.dot_dimension_numbers<[1], [0], [0], [1], [0, 0, 1, 1], [], []>} : vector<256x4xbf16>, vector<4x4xbf16>, vector<256x4xf32> -> vector<256x4xf32>
    %50 = arith.addf %45, %49 : vector<256x4xf32>
    %51 = vector.extract_strided_slice %15 {offsets = [32, 0], sizes = [256, 4], strides = [1, 1]} : vector<288x4xbf16> to vector<256x4xbf16>
    %52 = vector.extract_strided_slice %11 {offsets = [2, 0, 0, 0], sizes = [1, 1, 4, 4], strides = [1, 1, 1, 1]} : vector<3x3x4x4xbf16> to vector<1x1x4x4xbf16>
    %53 = vector.shape_cast %52 : vector<1x1x4x4xbf16> to vector<4x4xbf16>
    %cst_33 = arith.constant dense<0.000000e+00> : vector<256x4xf32>
    %54 = tpu.matmul %51, %53, %cst_33 {dimension_numbers = #tpu.dot_dimension_numbers<[1], [0], [0], [1], [0, 0, 1, 1], [], []>} : vector<256x4xbf16>, vector<4x4xbf16>, vector<256x4xf32> -> vector<256x4xf32>
    %55 = arith.addf %50, %54 : vector<256x4xf32>
    %56 = vector.extract_strided_slice %17 {offsets = [32, 0], sizes = [256, 4], strides = [1, 1]} : vector<288x4xbf16> to vector<256x4xbf16>
    %57 = vector.extract_strided_slice %11 {offsets = [2, 1, 0, 0], sizes = [1, 1, 4, 4], strides = [1, 1, 1, 1]} : vector<3x3x4x4xbf16> to vector<1x1x4x4xbf16>
    %58 = vector.shape_cast %57 : vector<1x1x4x4xbf16> to vector<4x4xbf16>
    %cst_34 = arith.constant dense<0.000000e+00> : vector<256x4xf32>
    %59 = tpu.matmul %56, %58, %cst_34 {dimension_numbers = #tpu.dot_dimension_numbers<[1], [0], [0], [1], [0, 0, 1, 1], [], []>} : vector<256x4xbf16>, vector<4x4xbf16>, vector<256x4xf32> -> vector<256x4xf32>
    %60 = arith.addf %55, %59 : vector<256x4xf32>
    %61 = vector.extract_strided_slice %19 {offsets = [32, 0], sizes = [256, 4], strides = [1, 1]} : vector<288x4xbf16> to vector<256x4xbf16>
    %62 = vector.extract_strided_slice %11 {offsets = [2, 2, 0, 0], sizes = [1, 1, 4, 4], strides = [1, 1, 1, 1]} : vector<3x3x4x4xbf16> to vector<1x1x4x4xbf16>
    %63 = vector.shape_cast %62 : vector<1x1x4x4xbf16> to vector<4x4xbf16>
    %cst_35 = arith.constant dense<0.000000e+00> : vector<256x4xf32>
    %64 = tpu.matmul %61, %63, %cst_35 {dimension_numbers = #tpu.dot_dimension_numbers<[1], [0], [0], [1], [0, 0, 1, 1], [], []>} : vector<256x4xbf16>, vector<4x4xbf16>, vector<256x4xf32> -> vector<256x4xf32>
    %65 = arith.addf %60, %64 : vector<256x4xf32>
    %cst_36 = arith.constant dense<0.000000e+00> : vector<4xf32>
    %66 = vector.multi_reduction <add>, %65, %cst_36 [0] : vector<256x4xf32> to vector<4xf32>
    %67 = vector.shape_cast %66 : vector<4xf32> to vector<1x4xf32>
    %cst_37 = arith.constant 3.906250e-03 : f32
    %68 = vector.broadcast %cst_37 : f32 to vector<1x4xf32>
    %69 = arith.mulf %67, %68 : vector<1x4xf32>
    %70 = arith.mulf %65, %65 : vector<256x4xf32>
    %cst_38 = arith.constant dense<0.000000e+00> : vector<4xf32>
    %71 = vector.multi_reduction <add>, %70, %cst_38 [0] : vector<256x4xf32> to vector<4xf32>
    %72 = vector.shape_cast %71 : vector<4xf32> to vector<1x4xf32>
    %cst_39 = arith.constant 3.906250e-03 : f32
    %73 = vector.broadcast %cst_39 : f32 to vector<1x4xf32>
    %74 = arith.mulf %72, %73 : vector<1x4xf32>
    %75 = arith.mulf %69, %69 : vector<1x4xf32>
    %76 = arith.subf %74, %75 : vector<1x4xf32>
    %77 = vector.broadcast %69 : vector<1x4xf32> to vector<256x4xf32>
    %78 = arith.subf %65, %77 : vector<256x4xf32>
    %cst_40 = arith.constant 9.99999974E-6 : f32
    %79 = vector.broadcast %cst_40 : f32 to vector<1x4xf32>
    %80 = arith.addf %76, %79 : vector<1x4xf32>
    %81 = math.rsqrt %80 : vector<1x4xf32>
    %82 = vector.broadcast %81 : vector<1x4xf32> to vector<256x4xf32>
    %83 = arith.mulf %78, %82 : vector<256x4xf32>
    %cst_41 = arith.constant 0.000000e+00 : f32
    %84 = vector.broadcast %cst_41 : f32 to vector<256x4xf32>
    %85 = arith.maximumf %83, %84 : vector<256x4xf32>
    %86 = vector.shape_cast %85 : vector<256x4xf32> to vector<16x16x4xf32>
    %c1_42 = arith.constant 1 : index
    %c1_43 = arith.constant 1 : index
    %c0_44 = arith.constant 0 : index
    %87 = vector.load %arg5[%c1_42, %c1_43, %c0_44] : memref<18x18x4xf32, #tpu.memory_space<vmem>>, vector<16x16x4xf32>
    tpu.vector_store %arg5[%c1_42, %c1_43, %c0_44], %86 {strides = array<i32>} : memref<18x18x4xf32, #tpu.memory_space<vmem>>, vector<16x16x4xf32>,
    %88 = vector.extract_strided_slice %86 {offsets = [1, 0, 0], sizes = [1, 16, 4], strides = [1, 1, 1]} : vector<16x16x4xf32> to vector<1x16x4xf32>
    %c0_45 = arith.constant 0 : index
    %c1_46 = arith.constant 1 : index
    %c0_47 = arith.constant 0 : index
    %89 = vector.load %arg5[%c0_45, %c1_46, %c0_47] : memref<18x18x4xf32, #tpu.memory_space<vmem>>, vector<1x16x4xf32>
    tpu.vector_store %arg5[%c0_45, %c1_46, %c0_47], %88 {strides = array<i32>} : memref<18x18x4xf32, #tpu.memory_space<vmem>>, vector<1x16x4xf32>,
    %90 = vector.extract_strided_slice %86 {offsets = [14, 0, 0], sizes = [1, 16, 4], strides = [1, 1, 1]} : vector<16x16x4xf32> to vector<1x16x4xf32>
    %c17_48 = arith.constant 17 : index
    %c1_49 = arith.constant 1 : index
    %c0_50 = arith.constant 0 : index
    %91 = vector.load %arg5[%c17_48, %c1_49, %c0_50] : memref<18x18x4xf32, #tpu.memory_space<vmem>>, vector<1x16x4xf32>
    tpu.vector_store %arg5[%c17_48, %c1_49, %c0_50], %90 {strides = array<i32>} : memref<18x18x4xf32, #tpu.memory_space<vmem>>, vector<1x16x4xf32>,
    %c0_51 = arith.constant 0 : index
    %c2_52 = arith.constant 2 : index
    %c0_53 = arith.constant 0 : index
    %92 = vector.load %arg5[%c0_51, %c2_52, %c0_53] : memref<18x18x4xf32, #tpu.memory_space<vmem>>, vector<18x1x4xf32>
    %c0_54 = arith.constant 0 : index
    %c0_55 = arith.constant 0 : index
    %c0_56 = arith.constant 0 : index
    %93 = vector.load %arg5[%c0_54, %c0_55, %c0_56] : memref<18x18x4xf32, #tpu.memory_space<vmem>>, vector<18x1x4xf32>
    tpu.vector_store %arg5[%c0_54, %c0_55, %c0_56], %92 {strides = array<i32>} : memref<18x18x4xf32, #tpu.memory_space<vmem>>, vector<18x1x4xf32>,
    %c0_57 = arith.constant 0 : index
    %c15_58 = arith.constant 15 : index
    %c0_59 = arith.constant 0 : index
    %94 = vector.load %arg5[%c0_57, %c15_58, %c0_59] : memref<18x18x4xf32, #tpu.memory_space<vmem>>, vector<18x1x4xf32>
    %c0_60 = arith.constant 0 : index
    %c17_61 = arith.constant 17 : index
    %c0_62 = arith.constant 0 : index
    %95 = vector.load %arg5[%c0_60, %c17_61, %c0_62] : memref<18x18x4xf32, #tpu.memory_space<vmem>>, vector<18x1x4xf32>
    tpu.vector_store %arg5[%c0_60, %c17_61, %c0_62], %94 {strides = array<i32>} : memref<18x18x4xf32, #tpu.memory_space<vmem>>, vector<18x1x4xf32>,
    %c0_63 = arith.constant 0 : index
    %c0_64 = arith.constant 0 : index
    %c0_65 = arith.constant 0 : index
    %c0_66 = arith.constant 0 : index
    %96 = vector.load %arg3[%c0_63, %c0_64, %c0_65, %c0_66] : memref<3x3x4x4xbf16, #tpu.memory_space<vmem>>, vector<3x3x4x4xbf16>
    %c0_67 = arith.constant 0 : index
    %c0_68 = arith.constant 0 : index
    %c0_69 = arith.constant 0 : index
    %97 = vector.load %arg5[%c0_67, %c0_68, %c0_69] : memref<18x18x4xf32, #tpu.memory_space<vmem>>, vector<18x18x4xf32>
    %98 = arith.truncf %97 : vector<18x18x4xf32> to vector<18x18x4xbf16>
    %99 = vector.extract_strided_slice %98 {offsets = [0, 0, 0], sizes = [18, 16, 4], strides = [1, 1, 1]} : vector<18x18x4xbf16> to vector<18x16x4xbf16>
    %100 = vector.shape_cast %99 : vector<18x16x4xbf16> to vector<288x4xbf16>
    %101 = vector.extract_strided_slice %98 {offsets = [0, 1, 0], sizes = [18, 16, 4], strides = [1, 1, 1]} : vector<18x18x4xbf16> to vector<18x16x4xbf16>
    %102 = vector.shape_cast %101 : vector<18x16x4xbf16> to vector<288x4xbf16>
    %103 = vector.extract_strided_slice %98 {offsets = [0, 2, 0], sizes = [18, 16, 4], strides = [1, 1, 1]} : vector<18x18x4xbf16> to vector<18x16x4xbf16>
    %104 = vector.shape_cast %103 : vector<18x16x4xbf16> to vector<288x4xbf16>
    %cst_70 = arith.constant 0.000000e+00 : f32
    %105 = vector.broadcast %cst_70 : f32 to vector<256x4xf32>
    %106 = vector.extract_strided_slice %100 {offsets = [0, 0], sizes = [256, 4], strides = [1, 1]} : vector<288x4xbf16> to vector<256x4xbf16>
    %107 = vector.extract_strided_slice %96 {offsets = [0, 0, 0, 0], sizes = [1, 1, 4, 4], strides = [1, 1, 1, 1]} : vector<3x3x4x4xbf16> to vector<1x1x4x4xbf16>
    %108 = vector.shape_cast %107 : vector<1x1x4x4xbf16> to vector<4x4xbf16>
    %cst_71 = arith.constant dense<0.000000e+00> : vector<256x4xf32>
    %109 = tpu.matmul %106, %108, %cst_71 {dimension_numbers = #tpu.dot_dimension_numbers<[1], [0], [0], [1], [0, 0, 1, 1], [], []>} : vector<256x4xbf16>, vector<4x4xbf16>, vector<256x4xf32> -> vector<256x4xf32>
    %110 = arith.addf %105, %109 : vector<256x4xf32>
    %111 = vector.extract_strided_slice %102 {offsets = [0, 0], sizes = [256, 4], strides = [1, 1]} : vector<288x4xbf16> to vector<256x4xbf16>
    %112 = vector.extract_strided_slice %96 {offsets = [0, 1, 0, 0], sizes = [1, 1, 4, 4], strides = [1, 1, 1, 1]} : vector<3x3x4x4xbf16> to vector<1x1x4x4xbf16>
    %113 = vector.shape_cast %112 : vector<1x1x4x4xbf16> to vector<4x4xbf16>
    %cst_72 = arith.constant dense<0.000000e+00> : vector<256x4xf32>
    %114 = tpu.matmul %111, %113, %cst_72 {dimension_numbers = #tpu.dot_dimension_numbers<[1], [0], [0], [1], [0, 0, 1, 1], [], []>} : vector<256x4xbf16>, vector<4x4xbf16>, vector<256x4xf32> -> vector<256x4xf32>
    %115 = arith.addf %110, %114 : vector<256x4xf32>
    %116 = vector.extract_strided_slice %104 {offsets = [0, 0], sizes = [256, 4], strides = [1, 1]} : vector<288x4xbf16> to vector<256x4xbf16>
    %117 = vector.extract_strided_slice %96 {offsets = [0, 2, 0, 0], sizes = [1, 1, 4, 4], strides = [1, 1, 1, 1]} : vector<3x3x4x4xbf16> to vector<1x1x4x4xbf16>
    %118 = vector.shape_cast %117 : vector<1x1x4x4xbf16> to vector<4x4xbf16>
    %cst_73 = arith.constant dense<0.000000e+00> : vector<256x4xf32>
    %119 = tpu.matmul %116, %118, %cst_73 {dimension_numbers = #tpu.dot_dimension_numbers<[1], [0], [0], [1], [0, 0, 1, 1], [], []>} : vector<256x4xbf16>, vector<4x4xbf16>, vector<256x4xf32> -> vector<256x4xf32>
    %120 = arith.addf %115, %119 : vector<256x4xf32>
    %121 = vector.extract_strided_slice %100 {offsets = [16, 0], sizes = [256, 4], strides = [1, 1]} : vector<288x4xbf16> to vector<256x4xbf16>
    %122 = vector.extract_strided_slice %96 {offsets = [1, 0, 0, 0], sizes = [1, 1, 4, 4], strides = [1, 1, 1, 1]} : vector<3x3x4x4xbf16> to vector<1x1x4x4xbf16>
    %123 = vector.shape_cast %122 : vector<1x1x4x4xbf16> to vector<4x4xbf16>
    %cst_74 = arith.constant dense<0.000000e+00> : vector<256x4xf32>
    %124 = tpu.matmul %121, %123, %cst_74 {dimension_numbers = #tpu.dot_dimension_numbers<[1], [0], [0], [1], [0, 0, 1, 1], [], []>} : vector<256x4xbf16>, vector<4x4xbf16>, vector<256x4xf32> -> vector<256x4xf32>
    %125 = arith.addf %120, %124 : vector<256x4xf32>
    %126 = vector.extract_strided_slice %102 {offsets = [16, 0], sizes = [256, 4], strides = [1, 1]} : vector<288x4xbf16> to vector<256x4xbf16>
    %127 = vector.extract_strided_slice %96 {offsets = [1, 1, 0, 0], sizes = [1, 1, 4, 4], strides = [1, 1, 1, 1]} : vector<3x3x4x4xbf16> to vector<1x1x4x4xbf16>
    %128 = vector.shape_cast %127 : vector<1x1x4x4xbf16> to vector<4x4xbf16>
    %cst_75 = arith.constant dense<0.000000e+00> : vector<256x4xf32>
    %129 = tpu.matmul %126, %128, %cst_75 {dimension_numbers = #tpu.dot_dimension_numbers<[1], [0], [0], [1], [0, 0, 1, 1], [], []>} : vector<256x4xbf16>, vector<4x4xbf16>, vector<256x4xf32> -> vector<256x4xf32>
    %130 = arith.addf %125, %129 : vector<256x4xf32>
    %131 = vector.extract_strided_slice %104 {offsets = [16, 0], sizes = [256, 4], strides = [1, 1]} : vector<288x4xbf16> to vector<256x4xbf16>
    %132 = vector.extract_strided_slice %96 {offsets = [1, 2, 0, 0], sizes = [1, 1, 4, 4], strides = [1, 1, 1, 1]} : vector<3x3x4x4xbf16> to vector<1x1x4x4xbf16>
    %133 = vector.shape_cast %132 : vector<1x1x4x4xbf16> to vector<4x4xbf16>
    %cst_76 = arith.constant dense<0.000000e+00> : vector<256x4xf32>
    %134 = tpu.matmul %131, %133, %cst_76 {dimension_numbers = #tpu.dot_dimension_numbers<[1], [0], [0], [1], [0, 0, 1, 1], [], []>} : vector<256x4xbf16>, vector<4x4xbf16>, vector<256x4xf32> -> vector<256x4xf32>
    %135 = arith.addf %130, %134 : vector<256x4xf32>
    %136 = vector.extract_strided_slice %100 {offsets = [32, 0], sizes = [256, 4], strides = [1, 1]} : vector<288x4xbf16> to vector<256x4xbf16>
    %137 = vector.extract_strided_slice %96 {offsets = [2, 0, 0, 0], sizes = [1, 1, 4, 4], strides = [1, 1, 1, 1]} : vector<3x3x4x4xbf16> to vector<1x1x4x4xbf16>
    %138 = vector.shape_cast %137 : vector<1x1x4x4xbf16> to vector<4x4xbf16>
    %cst_77 = arith.constant dense<0.000000e+00> : vector<256x4xf32>
    %139 = tpu.matmul %136, %138, %cst_77 {dimension_numbers = #tpu.dot_dimension_numbers<[1], [0], [0], [1], [0, 0, 1, 1], [], []>} : vector<256x4xbf16>, vector<4x4xbf16>, vector<256x4xf32> -> vector<256x4xf32>
    %140 = arith.addf %135, %139 : vector<256x4xf32>
    %141 = vector.extract_strided_slice %102 {offsets = [32, 0], sizes = [256, 4], strides = [1, 1]} : vector<288x4xbf16> to vector<256x4xbf16>
    %142 = vector.extract_strided_slice %96 {offsets = [2, 1, 0, 0], sizes = [1, 1, 4, 4], strides = [1, 1, 1, 1]} : vector<3x3x4x4xbf16> to vector<1x1x4x4xbf16>
    %143 = vector.shape_cast %142 : vector<1x1x4x4xbf16> to vector<4x4xbf16>
    %cst_78 = arith.constant dense<0.000000e+00> : vector<256x4xf32>
    %144 = tpu.matmul %141, %143, %cst_78 {dimension_numbers = #tpu.dot_dimension_numbers<[1], [0], [0], [1], [0, 0, 1, 1], [], []>} : vector<256x4xbf16>, vector<4x4xbf16>, vector<256x4xf32> -> vector<256x4xf32>
    %145 = arith.addf %140, %144 : vector<256x4xf32>
    %146 = vector.extract_strided_slice %104 {offsets = [32, 0], sizes = [256, 4], strides = [1, 1]} : vector<288x4xbf16> to vector<256x4xbf16>
    %147 = vector.extract_strided_slice %96 {offsets = [2, 2, 0, 0], sizes = [1, 1, 4, 4], strides = [1, 1, 1, 1]} : vector<3x3x4x4xbf16> to vector<1x1x4x4xbf16>
    %148 = vector.shape_cast %147 : vector<1x1x4x4xbf16> to vector<4x4xbf16>
    %cst_79 = arith.constant dense<0.000000e+00> : vector<256x4xf32>
    %149 = tpu.matmul %146, %148, %cst_79 {dimension_numbers = #tpu.dot_dimension_numbers<[1], [0], [0], [1], [0, 0, 1, 1], [], []>} : vector<256x4xbf16>, vector<4x4xbf16>, vector<256x4xf32> -> vector<256x4xf32>
    %150 = arith.addf %145, %149 : vector<256x4xf32>
    %cst_80 = arith.constant dense<0.000000e+00> : vector<4xf32>
    %151 = vector.multi_reduction <add>, %150, %cst_80 [0] : vector<256x4xf32> to vector<4xf32>
    %152 = vector.shape_cast %151 : vector<4xf32> to vector<1x4xf32>
    %cst_81 = arith.constant 3.906250e-03 : f32
    %153 = vector.broadcast %cst_81 : f32 to vector<1x4xf32>
    %154 = arith.mulf %152, %153 : vector<1x4xf32>
    %155 = arith.mulf %150, %150 : vector<256x4xf32>
    %cst_82 = arith.constant dense<0.000000e+00> : vector<4xf32>
    %156 = vector.multi_reduction <add>, %155, %cst_82 [0] : vector<256x4xf32> to vector<4xf32>
    %157 = vector.shape_cast %156 : vector<4xf32> to vector<1x4xf32>
    %cst_83 = arith.constant 3.906250e-03 : f32
    %158 = vector.broadcast %cst_83 : f32 to vector<1x4xf32>
    %159 = arith.mulf %157, %158 : vector<1x4xf32>
    %160 = arith.mulf %154, %154 : vector<1x4xf32>
    %161 = arith.subf %159, %160 : vector<1x4xf32>
    %162 = vector.broadcast %154 : vector<1x4xf32> to vector<256x4xf32>
    %163 = arith.subf %150, %162 : vector<256x4xf32>
    %cst_84 = arith.constant 9.99999974E-6 : f32
    %164 = vector.broadcast %cst_84 : f32 to vector<1x4xf32>
    %165 = arith.addf %161, %164 : vector<1x4xf32>
    %166 = math.rsqrt %165 : vector<1x4xf32>
    %167 = vector.broadcast %166 : vector<1x4xf32> to vector<256x4xf32>
    %168 = arith.mulf %163, %167 : vector<256x4xf32>
    %169 = vector.shape_cast %168 : vector<256x4xf32> to vector<16x16x4xf32>
    %170 = arith.addf %169, %1 : vector<16x16x4xf32>
    %c0_85 = arith.constant 0 : index
    %c0_86 = arith.constant 0 : index
    %c0_87 = arith.constant 0 : index
    %c0_88 = arith.constant 0 : index
    %171 = vector.load %arg4[%c0_85, %c0_86, %c0_87, %c0_88] : memref<1x16x16x4xf32, #tpu.memory_space<vmem>>, vector<1x16x16x4xf32>
    %172 = vector.shape_cast %171 : vector<1x16x16x4xf32> to vector<16x16x4xf32>
    %173 = vector.shape_cast %170 : vector<16x16x4xf32> to vector<1x16x16x4xf32>
    tpu.vector_store %arg4[%c0_85, %c0_86, %c0_87, %c0_88], %173 {strides = array<i32>} : memref<1x16x16x4xf32, #tpu.memory_space<vmem>>, vector<1x16x16x4xf32>,
    return
  }
  func.func @transform_0(%arg0: i32) -> (i32, i32, i32, i32) {
    %c0_i32 = arith.constant 0 : i32
    %c0_i32_0 = arith.constant 0 : i32
    %c0_i32_1 = arith.constant 0 : i32
    %c0_i32_2 = arith.constant 0 : i32
    return %arg0, %c0_i32, %c0_i32_0, %c0_i32_1 : i32, i32, i32, i32
  }
  func.func @transform_1(%arg0: i32) -> (i32, i32, i32, i32) {
    %c0_i32 = arith.constant 0 : i32
    %c0_i32_0 = arith.constant 0 : i32
    %c0_i32_1 = arith.constant 0 : i32
    %c0_i32_2 = arith.constant 0 : i32
    %c0_i32_3 = arith.constant 0 : i32
    return %c0_i32, %c0_i32_0, %c0_i32_1, %c0_i32_2 : i32, i32, i32, i32
  }
  func.func @transform_2(%arg0: i32) -> (i32, i32, i32, i32) {
    %c0_i32 = arith.constant 0 : i32
    %c0_i32_0 = arith.constant 0 : i32
    %c0_i32_1 = arith.constant 0 : i32
    %c0_i32_2 = arith.constant 0 : i32
    %c0_i32_3 = arith.constant 0 : i32
    return %c0_i32, %c0_i32_0, %c0_i32_1, %c0_i32_2 : i32, i32, i32, i32
  }
  func.func @transform_3(%arg0: i32) -> (i32, i32, i32, i32) {
    %c0_i32 = arith.constant 0 : i32
    %c0_i32_0 = arith.constant 0 : i32
    %c0_i32_1 = arith.constant 0 : i32
    %c0_i32_2 = arith.constant 0 : i32
    return %arg0, %c0_i32, %c0_i32_0, %c0_i32_1 : i32, i32, i32, i32
  }
}

</mosaic_0001>

<llo_original>
// kernel: resnet_block_forward.1
$region0: #{resnet_block_forward.1}
  #allocation0 [shape = 'u32[]', space=smem, size = 0x4, offset = 0x4, fixed_abs, tag = 'smem constant byte address 0x4 - core index']
  #allocation1 [shape = 'u32[144,128]{1,0:T(1,128)}', space=vmem, size = 0x12000, scoped, tag = 'internal scratch']
  #allocation2 [shape = 'f32[18,18,4]{2,1,0:T(8,128)}', space=vmem, size = 0x36000, scoped, tag = 'scratch operand']
  %s0 = inlined_call_operand.vmem [shape: f32[2,16,16,4], index: 0, kind: input, shape index: {}]
  %s1 = inlined_call_operand.vmem [shape: bf16[3,3,4,4], index: 1, kind: input, shape index: {}]
  %s2 = inlined_call_operand.vmem [shape: bf16[3,3,4,4], index: 2, kind: input, shape index: {}]
  %s3 = inlined_call_operand.vmem [shape: f32[2,16,16,4], index: 3, kind: output, shape index: {}]
  %s4 = sld [smem:[#allocation0]]
  $region45: #{resnet_block_forward.1} parent=0
    _
  %s6 = ssub.s32 1, %s4
  %s7 = scalar_select 0, %s6, %s4
  loop: start=0, step=1, limit=4
  $region2: #{resnet_block_forward.1} parent=0 // loop_pre_header
    _
  $region3: #{resnet_block_forward.1} parent=0 // loop_header
    %s9 = sphi 0, %s13
    %p10 = scmp.ge.s32.totalorder %s9, 4
    %s19 = sphi 0, %s21
    %s22 = sphi 0, %s19
    %s23 = sphi 0, %s22
    %s39 = sphi 0, %s23
    %s43 = sphi 0, %s43
    %s45 = sphi 0, %s43
    %s46 = sphi 0, %s45
    %s60 = sphi 0, %s46
    %s64 = sphi 0, %s64
    %s66 = sphi 0, %s64
    %s67 = sphi 0, %s66
    %s81 = sphi 0, %s67
    %s87 = sphi 0, %s89
    %s90 = sphi 0, %s87
    %s91 = sphi 0, %s90
    %s107 = sphi 0, %s91
  $region4: #{resnet_block_forward.1} parent=0 // loop_header_branch
    %12 = sbr.rel (%p10) target = $region8
  $region5: #{resnet_block_forward.1} parent=0 // loop_body
    %s14 = ssub.s32 %s9, 1
    %s15 = ssub.s32 %s9, 2
    %s16 = sadd.s32 %s9, 1
    %s17 = ssub.s32 %s9, %s16
    %p18 = scmp.eq.s32.totalorder %s17, 0
    %s20 = sadd.s32 %s19, 1
    %s21 = scalar_select %p18, %s19, %s20
    %p24 = pneg %p18
    %p25 = scmp.eq.s32.totalorder %s9, 1
    %p26 = por %p24, %p25
    %p27 = scmp.ne.s32.totalorder %s19, %s22
    %p28 = scmp.eq.s32.totalorder %s9, 0
    %p29 = por %p27, %p28
    %p30 = scmp.ne.s32.totalorder %s19, %s22
    %p31 = scmp.eq.s32.totalorder %s14, 1
    %p32 = por %p30, %p31
    %p33 = scmp.ne.s32.totalorder %s22, %s23
    %p34 = scmp.eq.s32.totalorder %s14, 0
    %p35 = por %p33, %p34
    %p36 = scmp.ne.s32.totalorder %s22, %s23
    %p37 = scmp.eq.s32.totalorder %s15, 1
    %p38 = por %p36, %p37
    %p40 = scmp.ne.s32.totalorder %s23, %s39
    %p41 = scmp.eq.s32.totalorder %s15, 0
    %p42 = por %p40, %p41
    %s44 = sadd.s32 %s43, 1
    %p47 = scmp.eq.s32.totalorder %s9, 1
    %p48 = scmp.ne.s32.totalorder %s43, %s45
    %p49 = scmp.eq.s32.totalorder %s9, 0
    %p50 = por %p48, %p49
    %p51 = scmp.ne.s32.totalorder %s43, %s45
    %p52 = scmp.eq.s32.totalorder %s14, 1
    %p53 = por %p51, %p52
    %p54 = scmp.ne.s32.totalorder %s45, %s46
    %p55 = scmp.eq.s32.totalorder %s14, 0
    %p56 = por %p54, %p55
    %p57 = scmp.ne.s32.totalorder %s45, %s46
    %p58 = scmp.eq.s32.totalorder %s15, 1
    %p59 = por %p57, %p58
    %p61 = scmp.ne.s32.totalorder %s46, %s60
    %p62 = scmp.eq.s32.totalorder %s15, 0
    %p63 = por %p61, %p62
    %s65 = sadd.s32 %s64, 1
    %p68 = scmp.eq.s32.totalorder %s9, 1
    %p69 = scmp.ne.s32.totalorder %s64, %s66
    %p70 = scmp.eq.s32.totalorder %s9, 0
    %p71 = por %p69, %p70
    %p72 = scmp.ne.s32.totalorder %s64, %s66
    %p73 = scmp.eq.s32.totalorder %s14, 1
    %p74 = por %p72, %p73
    %p75 = scmp.ne.s32.totalorder %s66, %s67
    %p76 = scmp.eq.s32.totalorder %s14, 0
    %p77 = por %p75, %p76
    %p78 = scmp.ne.s32.totalorder %s66, %s67
    %p79 = scmp.eq.s32.totalorder %s15, 1
    %p80 = por %p78, %p79
    %p82 = scmp.ne.s32.totalorder %s67, %s81
    %p83 = scmp.eq.s32.totalorder %s15, 0
    %p84 = por %p82, %p83
    %s85 = ssub.s32 %s9, %s16
    %p86 = scmp.eq.s32.totalorder %s85, 0
    %s88 = sadd.s32 %s87, 1
    %s89 = scalar_select %p86, %s87, %s88
    %p92 = pneg %p86
    %p93 = scmp.eq.s32.totalorder %s9, 1
    %p94 = por %p92, %p93
    %p95 = scmp.ne.s32.totalorder %s87, %s90
    %p96 = scmp.eq.s32.totalorder %s9, 0
    %p97 = por %p95, %p96
    %p98 = scmp.ne.s32.totalorder %s87, %s90
    %p99 = scmp.eq.s32.totalorder %s14, 1
    %p100 = por %p98, %p99
    %p101 = scmp.ne.s32.totalorder %s90, %s91
    %p102 = scmp.eq.s32.totalorder %s14, 0
    %p103 = por %p101, %p102
    %p104 = scmp.ne.s32.totalorder %s90, %s91
    %p105 = scmp.eq.s32.totalorder %s15, 1
    %p106 = por %p104, %p105
    %p108 = scmp.ne.s32.totalorder %s91, %s107
    %p109 = scmp.eq.s32.totalorder %s15, 0
    %p110 = por %p108, %p109
    %p111 = scmp.le.s32.totalorder 1, %s9
    %p112 = scmp.lt.s32.totalorder %s9, 3
    %p113 = pnand %p111, %p112
    %p114 = pneg %p113
    // Predicated region
    $region9: #{resnet_block_forward.1} parent=5 // pred_check
      _
    $region10: #{resnet_block_forward.1} parent=5 // pred_check_branch
      %116 = sbr.rel (%p113) target = $region12
    $region11: #{resnet_block_forward.1} parent=5 // pred_region
      %s117 = ssub.s32 %s9, 1
      // Predicated region
      $region13: #{resnet_block_forward.1} parent=11 // pred_check
        %p118 = pneg %p56
      $region14: #{resnet_block_forward.1} parent=11 // pred_check_branch
        %120 = sbr.rel (%p118) target = $region16
      $region15: #{resnet_block_forward.1} parent=11 // pred_region
        _
      $region16: #{resnet_block_forward.1} parent=11 // pred_fallthru
        _
      // Predicated region
      $region17: #{resnet_block_forward.1} parent=11 // pred_check
        %p121 = pneg %p77
      $region18: #{resnet_block_forward.1} parent=11 // pred_check_branch
        %123 = sbr.rel (%p121) target = $region20
      $region19: #{resnet_block_forward.1} parent=11 // pred_region
        _
      $region20: #{resnet_block_forward.1} parent=11 // pred_fallthru
        _
    $region12: #{resnet_block_forward.1} parent=5 // pred_fallthru
      _
    %p124 = scmp.lt.s32.totalorder %s9, 2
    // Predicated region
    $region21: #{resnet_block_forward.1} parent=5 // pred_check
      %p125 = pneg %p124
    $region22: #{resnet_block_forward.1} parent=5 // pred_check_branch
      %127 = sbr.rel (%p125) target = $region24
    $region23: #{resnet_block_forward.1} parent=5 // pred_region
      // Predicated region
      $region25: #{resnet_block_forward.1} parent=23 // pred_check
        %p128 = pneg %p29
      $region26: #{resnet_block_forward.1} parent=23 // pred_check_branch
        %130 = sbr.rel (%p128) target = $region28
      $region27: #{resnet_block_forward.1} parent=23 // pred_region
        %p131 = scmp.lt.s32.totalorder %s9, 1
        %s132 = scalar_select %p131, %s9, 1
        %s133 = smul.addr %s132, 32
        %s134 = smul.addr %s133, 8
        %s135 = scalar_lea.vmem %s0, %s134
      $region28: #{resnet_block_forward.1} parent=23 // pred_fallthru
        _
    $region24: #{resnet_block_forward.1} parent=5 // pred_fallthru
      _
    %p136 = scmp.le.s32.totalorder 1, %s9
    %p137 = scmp.lt.s32.totalorder %s9, 3
    %p138 = pnand %p136, %p137
    %p139 = pneg %p138
    // Predicated region
    $region29: #{resnet_block_forward.1} parent=5 // pred_check
      _
    $region30: #{resnet_block_forward.1} parent=5 // pred_check_branch
      %141 = sbr.rel (%p138) target = $region32
    $region31: #{resnet_block_forward.1} parent=5 // pred_region
      %s142 = ssub.s32 %s9, 1
      %p143 = scmp.lt.s32.totalorder %s14, 1
      %s144 = scalar_select %p143, %s14, 1
      %s145 = smul.addr %s144, 32
      %s146 = smul.addr %s145, 8
      %s147 = scalar_lea.vmem %s0, %s146
      %p148 = pneg %p35
      %p149 = pneg %p32
      %p150 = pneg %p56
      %p151 = pneg %p53
      %p152 = pneg %p77
      %p153 = pneg %p74
      %p154 = pneg %p103
      %p155 = pneg %p100
      %p156 = scmp.lt.s32.totalorder %s14, 1
      %s157 = scalar_select %p156, %s14, 1
      %s158 = smul.addr %s157, 32
      %s159 = smul.addr %s158, 8
      %s160 = scalar_lea.vmem %s3, %s159
      %p161 = scmp.lt.s32.totalorder %s14, 1
      %s162 = scalar_select %p161, %s14, 1
      %s163 = smul.addr %s162, 32
      %s164 = smul.addr %s163, 8
      %s165 = scalar_lea.vmem %s0, %s164
      %p166 = scmp.lt.s32.totalorder %s14, 1
      %s167 = scalar_select %p166, %s14, 1
      %s168 = smul.addr %s167, 32
      %s169 = smul.addr %s168, 8
      %s170 = scalar_lea.vmem %s3, %s169
      %v172 = vld [vmem:[%s165] sm:$0xff]
      %v173 = vld [vmem:[%s165 + $0x8] sm:$0xff]
      %v174 = vld [vmem:[%s165 + $0x10] sm:$0xff]
      %v175 = vld [vmem:[%s165 + $0x18] sm:$0xff]
      %v176 = vld [vmem:[%s165 + $0x20] sm:$0xff]
      %v177 = vld [vmem:[%s165 + $0x28] sm:$0xff]
      %v178 = vld [vmem:[%s165 + $0x30] sm:$0xff]
      %v179 = vld [vmem:[%s165 + $0x38] sm:$0xff]
      %v180 = vld [vmem:[%s165 + $0x40] sm:$0xff]
      %v181 = vld [vmem:[%s165 + $0x48] sm:$0xff]
      %v182 = vld [vmem:[%s165 + $0x50] sm:$0xff]
      %v183 = vld [vmem:[%s165 + $0x58] sm:$0xff]
      %v184 = vld [vmem:[%s165 + $0x60] sm:$0xff]
      %v185 = vld [vmem:[%s165 + $0x68] sm:$0xff]
      %v186 = vld [vmem:[%s165 + $0x70] sm:$0xff]
      %v187 = vld [vmem:[%s165 + $0x78] sm:$0xff]
      %v188 = vld [vmem:[%s165 + $0x80] sm:$0xff]
      %v189 = vld [vmem:[%s165 + $0x88] sm:$0xff]
      %v190 = vld [vmem:[%s165 + $0x90] sm:$0xff]
      %v191 = vld [vmem:[%s165 + $0x98] sm:$0xff]
      %v192 = vld [vmem:[%s165 + $0xa0] sm:$0xff]
      %v193 = vld [vmem:[%s165 + $0xa8] sm:$0xff]
      %v194 = vld [vmem:[%s165 + $0xb0] sm:$0xff]
      %v195 = vld [vmem:[%s165 + $0xb8] sm:$0xff]
      %v196 = vld [vmem:[%s165 + $0xc0] sm:$0xff]
      %v197 = vld [vmem:[%s165 + $0xc8] sm:$0xff]
      %v198 = vld [vmem:[%s165 + $0xd0] sm:$0xff]
      %v199 = vld [vmem:[%s165 + $0xd8] sm:$0xff]
      %v200 = vld [vmem:[%s165 + $0xe0] sm:$0xff]
      %v201 = vld [vmem:[%s165 + $0xe8] sm:$0xff]
      %v202 = vld [vmem:[%s165 + $0xf0] sm:$0xff]
      %v203 = vld [vmem:[%s165 + $0xf8] sm:$0xff]
      %s204 = scalar_lea.vmem [#allocation2], 24
      %vm205 = vcmask 31744
      %206 = vst.msk [vmem:[%s204 + $0x1] sm:$0xff] %vm205, %v172
      %207 = vst.msk [vmem:[%s204 + $0x9] sm:$0xff] %vm205, %v173
      %208 = vst.msk [vmem:[%s204 + $0x19] sm:$0xff] %vm205, %v174
      %209 = vst.msk [vmem:[%s204 + $0x21] sm:$0xff] %vm205, %v175
      %210 = vst.msk [vmem:[%s204 + $0x31] sm:$0xff] %vm205, %v176
      %211 = vst.msk [vmem:[%s204 + $0x39] sm:$0xff] %vm205, %v177
      %212 = vst.msk [vmem:[%s204 + $0x49] sm:$0xff] %vm205, %v178
      %213 = vst.msk [vmem:[%s204 + $0x51] sm:$0xff] %vm205, %v179
      %214 = vst.msk [vmem:[%s204 + $0x61] sm:$0xff] %vm205, %v180
      %215 = vst.msk [vmem:[%s204 + $0x69] sm:$0xff] %vm205, %v181
      %216 = vst.msk [vmem:[%s204 + $0x79] sm:$0xff] %vm205, %v182
      %217 = vst.msk [vmem:[%s204 + $0x81] sm:$0xff] %vm205, %v183
      %218 = vst.msk [vmem:[%s204 + $0x91] sm:$0xff] %vm205, %v184
      %219 = vst.msk [vmem:[%s204 + $0x99] sm:$0xff] %vm205, %v185
      %220 = vst.msk [vmem:[%s204 + $0xa9] sm:$0xff] %vm205, %v186
      %221 = vst.msk [vmem:[%s204 + $0xb1] sm:$0xff] %vm205, %v187
      %222 = vst.msk [vmem:[%s204 + $0xc1] sm:$0xff] %vm205, %v188
      %223 = vst.msk [vmem:[%s204 + $0xc9] sm:$0xff] %vm205, %v189
      %224 = vst.msk [vmem:[%s204 + $0xd9] sm:$0xff] %vm205, %v190
      %225 = vst.msk [vmem:[%s204 + $0xe1] sm:$0xff] %vm205, %v191
      %226 = vst.msk [vmem:[%s204 + $0xf1] sm:$0xff] %vm205, %v192
      %227 = vst.msk [vmem:[%s204 + $0xf9] sm:$0xff] %vm205, %v193
      %228 = vst.msk [vmem:[%s204 + $0x109] sm:$0xff] %vm205, %v194
      %229 = vst.msk [vmem:[%s204 + $0x111] sm:$0xff] %vm205, %v195
      %230 = vst.msk [vmem:[%s204 + $0x121] sm:$0xff] %vm205, %v196
      %231 = vst.msk [vmem:[%s204 + $0x129] sm:$0xff] %vm205, %v197
      %232 = vst.msk [vmem:[%s204 + $0x139] sm:$0xff] %vm205, %v198
      %233 = vst.msk [vmem:[%s204 + $0x141] sm:$0xff] %vm205, %v199
      %234 = vst.msk [vmem:[%s204 + $0x151] sm:$0xff] %vm205, %v200
      %235 = vst.msk [vmem:[%s204 + $0x159] sm:$0xff] %vm205, %v201
      %236 = vst.msk [vmem:[%s204 + $0x169] sm:$0xff] %vm205, %v202
      %237 = vst.msk [vmem:[%s204 + $0x171] sm:$0xff] %vm205, %v203
      %238 = vst.msk [vmem:[#allocation2 + $0x1] sm:$0xff] %vm205, %v174
      %239 = vst.msk [vmem:[#allocation2 + $0x9] sm:$0xff] %vm205, %v175
      %s240 = scalar_lea.vmem [#allocation2], 408
      %241 = vst.msk [vmem:[%s240 + $0x1] sm:$0xff] %vm205, %v200
      %242 = vst.msk [vmem:[%s240 + $0x9] sm:$0xff] %vm205, %v201
      %v243 = vld [vmem:[#allocation2 + $0x2] sm:$0x1]
      %v244 = vld [vmem:[#allocation2 + $0x1a] sm:$0x1]
      %v245 = vld [vmem:[#allocation2 + $0x32] sm:$0x1]
      %v246 = vld [vmem:[#allocation2 + $0x4a] sm:$0x1]
      %v247 = vld [vmem:[#allocation2 + $0x62] sm:$0x1]
      %v248 = vld [vmem:[#allocation2 + $0x7a] sm:$0x1]
      %v249 = vld [vmem:[#allocation2 + $0x92] sm:$0x1]
      %v250 = vld [vmem:[#allocation2 + $0xaa] sm:$0x1]
      %v251 = vld [vmem:[#allocation2 + $0xc2] sm:$0x1]
      %v252 = vld [vmem:[#allocation2 + $0xda] sm:$0x1]
      %v253 = vld [vmem:[#allocation2 + $0xf2] sm:$0x1]
      %v254 = vld [vmem:[#allocation2 + $0x10a] sm:$0x1]
      %v255 = vld [vmem:[#allocation2 + $0x122] sm:$0x1]
      %v256 = vld [vmem:[#allocation2 + $0x13a] sm:$0x1]
      %v257 = vld [vmem:[#allocation2 + $0x152] sm:$0x1]
      %v258 = vld [vmem:[#allocation2 + $0x16a] sm:$0x1]
      %v259 = vld [vmem:[#allocation2 + $0x182] sm:$0x1]
      %v260 = vld [vmem:[#allocation2 + $0x19a] sm:$0x1]
      %vm261 = vcmask 24576
      %262 = vst.msk [vmem:[#allocation2] sm:$0x1] %vm261, %v243
      %263 = vst.msk [vmem:[#allocation2 + $0x18] sm:$0x1] %vm261, %v244
      %264 = vst.msk [vmem:[#allocation2 + $0x30] sm:$0x1] %vm261, %v245
      %265 = vst.msk [vmem:[#allocation2 + $0x48] sm:$0x1] %vm261, %v246
      %266 = vst.msk [vmem:[#allocation2 + $0x60] sm:$0x1] %vm261, %v247
      %267 = vst.msk [vmem:[#allocation2 + $0x78] sm:$0x1] %vm261, %v248
      %268 = vst.msk [vmem:[#allocation2 + $0x90] sm:$0x1] %vm261, %v249
      %269 = vst.msk [vmem:[#allocation2 + $0xa8] sm:$0x1] %vm261, %v250
      %270 = vst.msk [vmem:[#allocation2 + $0xc0] sm:$0x1] %vm261, %v251
      %271 = vst.msk [vmem:[#allocation2 + $0xd8] sm:$0x1] %vm261, %v252
      %272 = vst.msk [vmem:[#allocation2 + $0xf0] sm:$0x1] %vm261, %v253
      %273 = vst.msk [vmem:[#allocation2 + $0x108] sm:$0x1] %vm261, %v254
      %274 = vst.msk [vmem:[#allocation2 + $0x120] sm:$0x1] %vm261, %v255
      %275 = vst.msk [vmem:[#allocation2 + $0x138] sm:$0x1] %vm261, %v256
      %276 = vst.msk [vmem:[#allocation2 + $0x150] sm:$0x1] %vm261, %v257
      %277 = vst.msk [vmem:[#allocation2 + $0x168] sm:$0x1] %vm261, %v258
      %278 = vst.msk [vmem:[#allocation2 + $0x180] sm:$0x1] %vm261, %v259
      %279 = vst.msk [vmem:[#allocation2 + $0x198] sm:$0x1] %vm261, %v260
      %v280 = vld [vmem:[#allocation2 + $0xf] sm:$0x1]
      %v281 = vld [vmem:[#allocation2 + $0x27] sm:$0x1]
      %v282 = vld [vmem:[#allocation2 + $0x3f] sm:$0x1]
      %v283 = vld [vmem:[#allocation2 + $0x57] sm:$0x1]
      %v284 = vld [vmem:[#allocation2 + $0x6f] sm:$0x1]
      %v285 = vld [vmem:[#allocation2 + $0x87] sm:$0x1]
      %v286 = vld [vmem:[#allocation2 + $0x9f] sm:$0x1]
      %v287 = vld [vmem:[#allocation2 + $0xb7] sm:$0x1]
      %v288 = vld [vmem:[#allocation2 + $0xcf] sm:$0x1]
      %v289 = vld [vmem:[#allocation2 + $0xe7] sm:$0x1]
      %v290 = vld [vmem:[#allocation2 + $0xff] sm:$0x1]
      %v291 = vld [vmem:[#allocation2 + $0x117] sm:$0x1]
      %v292 = vld [vmem:[#allocation2 + $0x12f] sm:$0x1]
      %v293 = vld [vmem:[#allocation2 + $0x147] sm:$0x1]
      %v294 = vld [vmem:[#allocation2 + $0x15f] sm:$0x1]
      %v295 = vld [vmem:[#allocation2 + $0x177] sm:$0x1]
      %v296 = vld [vmem:[#allocation2 + $0x18f] sm:$0x1]
      %v297 = vld [vmem:[#allocation2 + $0x1a7] sm:$0x1]
      %298 = vst.msk [vmem:[#allocation2 + $0x11] sm:$0x1] %vm261, %v280
      %299 = vst.msk [vmem:[#allocation2 + $0x29] sm:$0x1] %vm261, %v281
      %300 = vst.msk [vmem:[#allocation2 + $0x41] sm:$0x1] %vm261, %v282
      %301 = vst.msk [vmem:[#allocation2 + $0x59] sm:$0x1] %vm261, %v283
      %302 = vst.msk [vmem:[#allocation2 + $0x71] sm:$0x1] %vm261, %v284
      %303 = vst.msk [vmem:[#allocation2 + $0x89] sm:$0x1] %vm261, %v285
      %304 = vst.msk [vmem:[#allocation2 + $0xa1] sm:$0x1] %vm261, %v286
      %305 = vst.msk [vmem:[#allocation2 + $0xb9] sm:$0x1] %vm261, %v287
      %306 = vst.msk [vmem:[#allocation2 + $0xd1] sm:$0x1] %vm261, %v288
      %307 = vst.msk [vmem:[#allocation2 + $0xe9] sm:$0x1] %vm261, %v289
      %308 = vst.msk [vmem:[#allocation2 + $0x101] sm:$0x1] %vm261, %v290
      %309 = vst.msk [vmem:[#allocation2 + $0x119] sm:$0x1] %vm261, %v291
      %310 = vst.msk [vmem:[#allocation2 + $0x131] sm:$0x1] %vm261, %v292
      %311 = vst.msk [vmem:[#allocation2 + $0x149] sm:$0x1] %vm261, %v293
      %312 = vst.msk [vmem:[#allocation2 + $0x161] sm:$0x1] %vm261, %v294
      %313 = vst.msk [vmem:[#allocation2 + $0x179] sm:$0x1] %vm261, %v295
      %314 = vst.msk [vmem:[#allocation2 + $0x191] sm:$0x1] %vm261, %v296
      %315 = vst.msk [vmem:[#allocation2 + $0x1a9] sm:$0x1] %vm261, %v297
      %v316 = vld [vmem:[%s1] sm:$0x3]
      %v317 = vld [vmem:[%s1 + $0x2] sm:$0x3]
      %v318 = vld [vmem:[%s1 + $0x4] sm:$0x3]
      %v319 = vld [vmem:[%s1 + $0x6] sm:$0x3]
      %v320 = vld [vmem:[%s1 + $0x8] sm:$0x3]
      %v321 = vld [vmem:[%s1 + $0xa] sm:$0x3]
      %v322 = vld [vmem:[%s1 + $0xc] sm:$0x3]
      %v323 = vld [vmem:[%s1 + $0xe] sm:$0x3]
      %v324 = vld [vmem:[%s1 + $0x10] sm:$0x3]
      %v325 = vld [vmem:[#allocation2] sm:$0xff]
      %v326 = vld [vmem:[#allocation2 + $0x8] sm:$0xff]
      %v327 = vld [vmem:[#allocation2 + $0x10] sm:$0x3]
      %v328 = vld [vmem:[#allocation2 + $0x18] sm:$0xff]
      %v329 = vld [vmem:[#allocation2 + $0x20] sm:$0xff]
      %v330 = vld [vmem:[#allocation2 + $0x28] sm:$0x3]
      %v331 = vld [vmem:[#allocation2 + $0x30] sm:$0xff]
      %v332 = vld [vmem:[#allocation2 + $0x38] sm:$0xff]
      %v333 = vld [vmem:[#allocation2 + $0x40] sm:$0x3]
      %v334 = vld [vmem:[#allocation2 + $0x48] sm:$0xff]
      %v335 = vld [vmem:[#allocation2 + $0x50] sm:$0xff]
      %v336 = vld [vmem:[#allocation2 + $0x58] sm:$0x3]
      %v337 = vld [vmem:[#allocation2 + $0x60] sm:$0xff]
      %v338 = vld [vmem:[#allocation2 + $0x68] sm:$0xff]
      %v339 = vld [vmem:[#allocation2 + $0x70] sm:$0x3]
      %v340 = vld [vmem:[#allocation2 + $0x78] sm:$0xff]
      %v341 = vld [vmem:[#allocation2 + $0x80] sm:$0xff]
      %v342 = vld [vmem:[#allocation2 + $0x88] sm:$0x3]
      %v343 = vld [vmem:[#allocation2 + $0x90] sm:$0xff]
      %v344 = vld [vmem:[#allocation2 + $0x98] sm:$0xff]
      %v345 = vld [vmem:[#allocation2 + $0xa0] sm:$0x3]
      %v346 = vld [vmem:[#allocation2 + $0xa8] sm:$0xff]
      %v347 = vld [vmem:[#allocation2 + $0xb0] sm:$0xff]
      %v348 = vld [vmem:[#allocation2 + $0xb8] sm:$0x3]
      %v349 = vld [vmem:[#allocation2 + $0xc0] sm:$0xff]
      %v350 = vld [vmem:[#allocation2 + $0xc8] sm:$0xff]
      %v351 = vld [vmem:[#allocation2 + $0xd0] sm:$0x3]
      %v352 = vld [vmem:[#allocation2 + $0xd8] sm:$0xff]
      %v353 = vld [vmem:[#allocation2 + $0xe0] sm:$0xff]
      %v354 = vld [vmem:[#allocation2 + $0xe8] sm:$0x3]
      %v355 = vld [vmem:[#allocation2 + $0xf0] sm:$0xff]
      %v356 = vld [vmem:[#allocation2 + $0xf8] sm:$0xff]
      %v357 = vld [vmem:[#allocation2 + $0x100] sm:$0x3]
      %v358 = vld [vmem:[#allocation2 + $0x108] sm:$0xff]
      %v359 = vld [vmem:[#allocation2 + $0x110] sm:$0xff]
      %v360 = vld [vmem:[#allocation2 + $0x118] sm:$0x3]
      %v361 = vld [vmem:[#allocation2 + $0x120] sm:$0xff]
      %v362 = vld [vmem:[#allocation2 + $0x128] sm:$0xff]
      %v363 = vld [vmem:[#allocation2 + $0x130] sm:$0x3]
      %v364 = vld [vmem:[#allocation2 + $0x138] sm:$0xff]
      %v365 = vld [vmem:[#allocation2 + $0x140] sm:$0xff]
      %v366 = vld [vmem:[#allocation2 + $0x148] sm:$0x3]
      %v367 = vld [vmem:[#allocation2 + $0x150] sm:$0xff]
      %v368 = vld [vmem:[#allocation2 + $0x158] sm:$0xff]
      %v369 = vld [vmem:[#allocation2 + $0x160] sm:$0x3]
      %v370 = vld [vmem:[#allocation2 + $0x168] sm:$0xff]
      %v371 = vld [vmem:[#allocation2 + $0x170] sm:$0xff]
      %v372 = vld [vmem:[#allocation2 + $0x178] sm:$0x3]
      %v373 = vld [vmem:[#allocation2 + $0x180] sm:$0xff]
      %v374 = vld [vmem:[#allocation2 + $0x188] sm:$0xff]
      %v375 = vld [vmem:[#allocation2 + $0x190] sm:$0x3]
      %v376 = vld [vmem:[#allocation2 + $0x198] sm:$0xff]
      %v377 = vld [vmem:[#allocation2 + $0x1a0] sm:$0xff]
      %v378 = vld [vmem:[#allocation2 + $0x1a8] sm:$0x3]
      %v379 = vpack.c.bf16 %v326, %v325
      %v380 = vpack.c.bf16 %v327, %v327
      %v381 = vpack.c.bf16 %v329, %v328
      %v382 = vpack.c.bf16 %v330, %v330
      %v383 = vpack.c.bf16 %v332, %v331
      %v384 = vpack.c.bf16 %v333, %v333
      %v385 = vpack.c.bf16 %v335, %v334
      %v386 = vpack.c.bf16 %v336, %v336
      %v387 = vpack.c.bf16 %v338, %v337
      %v388 = vpack.c.bf16 %v339, %v339
      %v389 = vpack.c.bf16 %v341, %v340
      %v390 = vpack.c.bf16 %v342, %v342
      %v391 = vpack.c.bf16 %v344, %v343
      %v392 = vpack.c.bf16 %v345, %v345
      %v393 = vpack.c.bf16 %v347, %v346
      %v394 = vpack.c.bf16 %v348, %v348
      %v395 = vpack.c.bf16 %v350, %v349
      %v396 = vpack.c.bf16 %v351, %v351
      %v397 = vpack.c.bf16 %v353, %v352
      %v398 = vpack.c.bf16 %v354, %v354
      %v399 = vpack.c.bf16 %v356, %v355
      %v400 = vpack.c.bf16 %v357, %v357
      %v401 = vpack.c.bf16 %v359, %v358
      %v402 = vpack.c.bf16 %v360, %v360
      %v403 = vpack.c.bf16 %v362, %v361
      %v404 = vpack.c.bf16 %v363, %v363
      %v405 = vpack.c.bf16 %v365, %v364
      %v406 = vpack.c.bf16 %v366, %v366
      %v407 = vpack.c.bf16 %v368, %v367
      %v408 = vpack.c.bf16 %v369, %v369
      %v409 = vpack.c.bf16 %v371, %v370
      %v410 = vpack.c.bf16 %v372, %v372
      %v411 = vpack.c.bf16 %v374, %v373
      %v412 = vpack.c.bf16 %v375, %v375
      %v413 = vpack.c.bf16 %v377, %v376
      %v414 = vpack.c.bf16 %v378, %v378
      %vm415 = vsmask.f32 7424
      %v417 = vshrl.u32 %v379, 16
      %v419 = vshll.u32 %v379, 16
      %v421 = vrot.slane %v419, 1
      %v422 = vor.u32 %v417, %v421
      %v424 = vshll.u32 %v380, 16
      %v426 = vrot.slane %v424, 1
      %v427 = vsel %vm415, %v422, %v426
      %v429 = vshrl.u32 %v381, 16
      %v431 = vshll.u32 %v381, 16
      %v433 = vrot.slane %v431, 1
      %v434 = vor.u32 %v429, %v433
      %v436 = vshll.u32 %v382, 16
      %v438 = vrot.slane %v436, 1
      %v439 = vsel %vm415, %v434, %v438
      %v441 = vshrl.u32 %v383, 16
      %v443 = vshll.u32 %v383, 16
      %v445 = vrot.slane %v443, 1
      %v446 = vor.u32 %v441, %v445
      %v448 = vshll.u32 %v384, 16
      %v450 = vrot.slane %v448, 1
      %v451 = vsel %vm415, %v446, %v450
      %v453 = vshrl.u32 %v385, 16
      %v455 = vshll.u32 %v385, 16
      %v457 = vrot.slane %v455, 1
      %v458 = vor.u32 %v453, %v457
      %v460 = vshll.u32 %v386, 16
      %v462 = vrot.slane %v460, 1
      %v463 = vsel %vm415, %v458, %v462
      %v465 = vshrl.u32 %v387, 16
      %v467 = vshll.u32 %v387, 16
      %v469 = vrot.slane %v467, 1
      %v470 = vor.u32 %v465, %v469
      %v472 = vshll.u32 %v388, 16
      %v474 = vrot.slane %v472, 1
      %v475 = vsel %vm415, %v470, %v474
      %v477 = vshrl.u32 %v389, 16
      %v479 = vshll.u32 %v389, 16
      %v481 = vrot.slane %v479, 1
      %v482 = vor.u32 %v477, %v481
      %v484 = vshll.u32 %v390, 16
      %v486 = vrot.slane %v484, 1
      %v487 = vsel %vm415, %v482, %v486
      %v489 = vshrl.u32 %v391, 16
      %v491 = vshll.u32 %v391, 16
      %v493 = vrot.slane %v491, 1
      %v494 = vor.u32 %v489, %v493
      %v496 = vshll.u32 %v392, 16
      %v498 = vrot.slane %v496, 1
      %v499 = vsel %vm415, %v494, %v498
      %v501 = vshrl.u32 %v393, 16
      %v503 = vshll.u32 %v393, 16
      %v505 = vrot.slane %v503, 1
      %v506 = vor.u32 %v501, %v505
      %v508 = vshll.u32 %v394, 16
      %v510 = vrot.slane %v508, 1
      %v511 = vsel %vm415, %v506, %v510
      %v513 = vshrl.u32 %v395, 16
      %v515 = vshll.u32 %v395, 16
      %v517 = vrot.slane %v515, 1
      %v518 = vor.u32 %v513, %v517
      %v520 = vshll.u32 %v396, 16
      %v522 = vrot.slane %v520, 1
      %v523 = vsel %vm415, %v518, %v522
      %v525 = vshrl.u32 %v397, 16
      %v527 = vshll.u32 %v397, 16
      %v529 = vrot.slane %v527, 1
      %v530 = vor.u32 %v525, %v529
      %v532 = vshll.u32 %v398, 16
      %v534 = vrot.slane %v532, 1
      %v535 = vsel %vm415, %v530, %v534
      %v537 = vshrl.u32 %v399, 16
      %v539 = vshll.u32 %v399, 16
      %v541 = vrot.slane %v539, 1
      %v542 = vor.u32 %v537, %v541
      %v544 = vshll.u32 %v400, 16
      %v546 = vrot.slane %v544, 1
      %v547 = vsel %vm415, %v542, %v546
      %v549 = vshrl.u32 %v401, 16
      %v551 = vshll.u32 %v401, 16
      %v553 = vrot.slane %v551, 1
      %v554 = vor.u32 %v549, %v553
      %v556 = vshll.u32 %v402, 16
      %v558 = vrot.slane %v556, 1
      %v559 = vsel %vm415, %v554, %v558
      %v561 = vshrl.u32 %v403, 16
      %v563 = vshll.u32 %v403, 16
      %v565 = vrot.slane %v563, 1
      %v566 = vor.u32 %v561, %v565
      %v568 = vshll.u32 %v404, 16
      %v570 = vrot.slane %v568, 1
      %v571 = vsel %vm415, %v566, %v570
      %v573 = vshrl.u32 %v405, 16
      %v575 = vshll.u32 %v405, 16
      %v577 = vrot.slane %v575, 1
      %v578 = vor.u32 %v573, %v577
      %v580 = vshll.u32 %v406, 16
      %v582 = vrot.slane %v580, 1
      %v583 = vsel %vm415, %v578, %v582
      %v585 = vshrl.u32 %v407, 16
      %v587 = vshll.u32 %v407, 16
      %v589 = vrot.slane %v587, 1
      %v590 = vor.u32 %v585, %v589
      %v592 = vshll.u32 %v408, 16
      %v594 = vrot.slane %v592, 1
      %v595 = vsel %vm415, %v590, %v594
      %v597 = vshrl.u32 %v409, 16
      %v599 = vshll.u32 %v409, 16
      %v601 = vrot.slane %v599, 1
      %v602 = vor.u32 %v597, %v601
      %v604 = vshll.u32 %v410, 16
      %v606 = vrot.slane %v604, 1
      %v607 = vsel %vm415, %v602, %v606
      %v609 = vshrl.u32 %v411, 16
      %v611 = vshll.u32 %v411, 16
      %v613 = vrot.slane %v611, 1
      %v614 = vor.u32 %v609, %v613
      %v616 = vshll.u32 %v412, 16
      %v618 = vrot.slane %v616, 1
      %v619 = vsel %vm415, %v614, %v618
      %v621 = vshrl.u32 %v413, 16
      %v623 = vshll.u32 %v413, 16
      %v625 = vrot.slane %v623, 1
      %v626 = vor.u32 %v621, %v625
      %v628 = vshll.u32 %v414, 16
      %v630 = vrot.slane %v628, 1
      %v631 = vsel %vm415, %v626, %v630
      %vm668 = vcmask 1046528
      %v669 = vrot.slane %v379, 1
      %v670 = vrot.slane %v380, 1
      %v671 = vsel %vm668, %v669, %v670
      %v672 = vrot.slane %v381, 1
      %v673 = vrot.slane %v382, 1
      %v674 = vsel %vm668, %v672, %v673
      %v675 = vrot.slane %v383, 1
      %v676 = vrot.slane %v384, 1
      %v677 = vsel %vm668, %v675, %v676
      %v678 = vrot.slane %v385, 1
      %v679 = vrot.slane %v386, 1
      %v680 = vsel %vm668, %v678, %v679
      %v681 = vrot.slane %v387, 1
      %v682 = vrot.slane %v388, 1
      %v683 = vsel %vm668, %v681, %v682
      %v684 = vrot.slane %v389, 1
      %v685 = vrot.slane %v390, 1
      %v686 = vsel %vm668, %v684, %v685
      %v687 = vrot.slane %v391, 1
      %v688 = vrot.slane %v392, 1
      %v689 = vsel %vm668, %v687, %v688
      %v690 = vrot.slane %v393, 1
      %v691 = vrot.slane %v394, 1
      %v692 = vsel %vm668, %v690, %v691
      %v693 = vrot.slane %v395, 1
      %v694 = vrot.slane %v396, 1
      %v695 = vsel %vm668, %v693, %v694
      %v696 = vrot.slane %v397, 1
      %v697 = vrot.slane %v398, 1
      %v698 = vsel %vm668, %v696, %v697
      %v699 = vrot.slane %v399, 1
      %v700 = vrot.slane %v400, 1
      %v701 = vsel %vm668, %v699, %v700
      %v702 = vrot.slane %v401, 1
      %v703 = vrot.slane %v402, 1
      %v704 = vsel %vm668, %v702, %v703
      %v705 = vrot.slane %v403, 1
      %v706 = vrot.slane %v404, 1
      %v707 = vsel %vm668, %v705, %v706
      %v708 = vrot.slane %v405, 1
      %v709 = vrot.slane %v406, 1
      %v710 = vsel %vm668, %v708, %v709
      %v711 = vrot.slane %v407, 1
      %v712 = vrot.slane %v408, 1
      %v713 = vsel %vm668, %v711, %v712
      %v714 = vrot.slane %v409, 1
      %v715 = vrot.slane %v410, 1
      %v716 = vsel %vm668, %v714, %v715
      %v717 = vrot.slane %v411, 1
      %v718 = vrot.slane %v412, 1
      %v719 = vsel %vm668, %v717, %v718
      %v720 = vrot.slane %v413, 1
      %v721 = vrot.slane %v414, 1
      %v722 = vsel %vm668, %v720, %v721
      %v724 = vsel %vm205, %v427, 0
      %v727 = vsel %vm205, %v439, 0
      %v730 = vsel %vm205, %v451, 0
      %v733 = vsel %vm205, %v463, 0
      %v736 = vsel %vm205, %v475, 0
      %v739 = vsel %vm205, %v487, 0
      %v742 = vsel %vm205, %v499, 0
      %v745 = vsel %vm205, %v511, 0
      %v748 = vsel %vm205, %v523, 0
      %v751 = vsel %vm205, %v535, 0
      %v754 = vsel %vm205, %v547, 0
      %v757 = vsel %vm205, %v559, 0
      %v760 = vsel %vm205, %v571, 0
      %v763 = vsel %vm205, %v583, 0
      %v766 = vsel %vm205, %v595, 0
      %v769 = vsel %vm205, %v607, 0
      %vm771 = vcmask 1041408
      %v773 = vsel %vm771, %v317, 0
      %775 = vmatprep.subr.bf16.mxu0 0
      %776 = vmatpush1.bf16.msra.mxu0 0
      %777 = vmatprep.subr.bf16.mxu0 0
      %778 = vmatpush1.bf16.msra.mxu0 0
      %779 = vmatprep.subr.bf16.mxu0 0
      %780 = vmatpush1.bf16.msra.mxu0 0
      %781 = vmatprep.subr.bf16.mxu0 0
      %782 = vmatpush1.bf16.msra.mxu0 0
      %783 = vmatprep.subr.bf16.mxu0 0
      %784 = vmatpush1.bf16.msra.mxu0 0
      %785 = vmatprep.subr.bf16.mxu0 0
      %786 = vmatpush1.bf16.msra.mxu0 0
      %787 = vmatprep.subr.bf16.mxu0 0
      %788 = vmatpush1.bf16.msra.mxu0 0
      %789 = vmatprep.subr.bf16.mxu0 0
      %790 = vmatpush1.bf16.msra.mxu0 %v773
      %791 = vmatprep.subr.bf16.mxu0 0
      %792 = vmatpush2.bf16.msra.mxu0 0
      %793 = vmatprep.subr.bf16.mxu0 0
      %794 = vmatpush2.bf16.msra.mxu0 0
      %795 = vmatprep.subr.bf16.mxu0 0
      %796 = vmatpush2.bf16.msra.mxu0 0
      %797 = vmatprep.subr.bf16.mxu0 0
      %798 = vmatpush2.bf16.msra.mxu0 0
      %799 = vmatprep.subr.bf16.mxu0 0
      %800 = vmatpush2.bf16.msra.mxu0 0
      %801 = vmatprep.subr.bf16.mxu0 0
      %802 = vmatpush2.bf16.msra.mxu0 0
      %803 = vmatprep.subr.bf16.mxu0 0
      %804 = vmatpush2.bf16.msra.mxu0 0
      %805 = vmatprep.subr.bf16.mxu0 0
      %806 = vmatpush2.bf16.msra.mxu0 0
      %807 = vmatprep.mubr.bf16.mxu0 0
      %808 = vmatmul.mubr.bf16.gmra.mxu0 %v724
      %v809 = vpop.f32.mrf.mxu0
      %v810 = vadd.f32 0.0, %v809
      %v811 = vpop.f32.mrf.mxu0
      %v812 = vpop.f32.mrf.mxu0
      %v813 = vadd.f32 0.0, %v812
      %v814 = vpop.f32.mrf.mxu0
      %815 = vmatprep.mubr.bf16.mxu0 0
      %816 = vmatmul.mubr.bf16.gmra.mxu0 %v727
      %v817 = vpop.f32.mrf.mxu0
      %v818 = vadd.f32 0.0, %v817
      %v819 = vpop.f32.mrf.mxu0
      %v820 = vpop.f32.mrf.mxu0
      %v821 = vadd.f32 0.0, %v820
      %v822 = vpop.f32.mrf.mxu0
      %823 = vmatprep.mubr.bf16.mxu0 0
      %824 = vmatmul.mubr.bf16.gmra.mxu0 %v730
      %v825 = vpop.f32.mrf.mxu0
      %v826 = vadd.f32 0.0, %v825
      %v827 = vpop.f32.mrf.mxu0
      %v828 = vpop.f32.mrf.mxu0
      %v829 = vadd.f32 0.0, %v828
      %v830 = vpop.f32.mrf.mxu0
      %831 = vmatprep.mubr.bf16.mxu0 0
      %832 = vmatmul.mubr.bf16.gmra.mxu0 %v733
      %v833 = vpop.f32.mrf.mxu0
      %v834 = vadd.f32 0.0, %v833
      %v835 = vpop.f32.mrf.mxu0
      %v836 = vpop.f32.mrf.mxu0
      %v837 = vadd.f32 0.0, %v836
      %v838 = vpop.f32.mrf.mxu0
      %839 = vmatprep.mubr.bf16.mxu0 0
      %840 = vmatmul.mubr.bf16.gmra.mxu0 %v736
      %v841 = vpop.f32.mrf.mxu0
      %v842 = vadd.f32 0.0, %v841
      %v843 = vpop.f32.mrf.mxu0
      %v844 = vpop.f32.mrf.mxu0
      %v845 = vadd.f32 0.0, %v844
      %v846 = vpop.f32.mrf.mxu0
      %847 = vmatprep.mubr.bf16.mxu0 0
      %848 = vmatmul.mubr.bf16.gmra.mxu0 %v739
      %v849 = vpop.f32.mrf.mxu0
      %v850 = vadd.f32 0.0, %v849
      %v851 = vpop.f32.mrf.mxu0
      %v852 = vpop.f32.mrf.mxu0
      %v853 = vadd.f32 0.0, %v852
      %v854 = vpop.f32.mrf.mxu0
      %855 = vmatprep.mubr.bf16.mxu0 0
      %856 = vmatmul.mubr.bf16.gmra.mxu0 %v742
      %v857 = vpop.f32.mrf.mxu0
      %v858 = vadd.f32 0.0, %v857
      %v859 = vpop.f32.mrf.mxu0
      %v860 = vpop.f32.mrf.mxu0
      %v861 = vadd.f32 0.0, %v860
      %v862 = vpop.f32.mrf.mxu0
      %863 = vmatprep.mubr.bf16.mxu0 0
      %864 = vmatmul.mubr.bf16.gmra.mxu0 %v745
      %v865 = vpop.f32.mrf.mxu0
      %v866 = vadd.f32 0.0, %v865
      %v867 = vpop.f32.mrf.mxu0
      %v868 = vpop.f32.mrf.mxu0
      %v869 = vadd.f32 0.0, %v868
      %v870 = vpop.f32.mrf.mxu0
      %871 = vmatprep.mubr.bf16.mxu0 0
      %872 = vmatmul.mubr.bf16.gmra.mxu0 %v748
      %v873 = vpop.f32.mrf.mxu0
      %v874 = vadd.f32 0.0, %v873
      %v875 = vpop.f32.mrf.mxu0
      %v876 = vpop.f32.mrf.mxu0
      %v877 = vadd.f32 0.0, %v876
      %v878 = vpop.f32.mrf.mxu0
      %879 = vmatprep.mubr.bf16.mxu0 0
      %880 = vmatmul.mubr.bf16.gmra.mxu0 %v751
      %v881 = vpop.f32.mrf.mxu0
      %v882 = vadd.f32 0.0, %v881
      %v883 = vpop.f32.mrf.mxu0
      %v884 = vpop.f32.mrf.mxu0
      %v885 = vadd.f32 0.0, %v884
      %v886 = vpop.f32.mrf.mxu0
      %887 = vmatprep.mubr.bf16.mxu0 0
      %888 = vmatmul.mubr.bf16.gmra.mxu0 %v754
      %v889 = vpop.f32.mrf.mxu0
      %v890 = vadd.f32 0.0, %v889
      %v891 = vpop.f32.mrf.mxu0
      %v892 = vpop.f32.mrf.mxu0
      %v893 = vadd.f32 0.0, %v892
      %v894 = vpop.f32.mrf.mxu0
      %895 = vmatprep.mubr.bf16.mxu0 0
      %896 = vmatmul.mubr.bf16.gmra.mxu0 %v757
      %v897 = vpop.f32.mrf.mxu0
      %v898 = vadd.f32 0.0, %v897
      %v899 = vpop.f32.mrf.mxu0
      %v900 = vpop.f32.mrf.mxu0
      %v901 = vadd.f32 0.0, %v900
      %v902 = vpop.f32.mrf.mxu0
      %903 = vmatprep.mubr.bf16.mxu0 0
      %904 = vmatmul.mubr.bf16.gmra.mxu0 %v760
      %v905 = vpop.f32.mrf.mxu0
      %v906 = vadd.f32 0.0, %v905
      %v907 = vpop.f32.mrf.mxu0
      %v908 = vpop.f32.mrf.mxu0
      %v909 = vadd.f32 0.0, %v908
      %v910 = vpop.f32.mrf.mxu0
      %911 = vmatprep.mubr.bf16.mxu0 0
      %912 = vmatmul.mubr.bf16.gmra.mxu0 %v763
      %v913 = vpop.f32.mrf.mxu0
      %v914 = vadd.f32 0.0, %v913
      %v915 = vpop.f32.mrf.mxu0
      %v916 = vpop.f32.mrf.mxu0
      %v917 = vadd.f32 0.0, %v916
      %v918 = vpop.f32.mrf.mxu0
      %919 = vmatprep.mubr.bf16.mxu0 0
      %920 = vmatmul.mubr.bf16.gmra.mxu0 %v766
      %v921 = vpop.f32.mrf.mxu0
      %v922 = vadd.f32 0.0, %v921
      %v923 = vpop.f32.mrf.mxu0
      %v924 = vpop.f32.mrf.mxu0
      %v925 = vadd.f32 0.0, %v924
      %v926 = vpop.f32.mrf.mxu0
      %927 = vmatprep.mubr.bf16.mxu0 0
      %928 = vmatmul.mubr.bf16.gmra.mxu0 %v769
      %v929 = vpop.f32.mrf.mxu0
      %v930 = vadd.f32 0.0, %v929
      %v931 = vpop.f32.mrf.mxu0
      %v932 = vpop.f32.mrf.mxu0
      %v933 = vadd.f32 0.0, %v932
      %v934 = vpop.f32.mrf.mxu0
      %935 = vdwg.mxu0
      %v936 = vsel %vm205, %v379, 0
      %v938 = vsel %vm205, %v381, 0
      %v940 = vsel %vm205, %v383, 0
      %v942 = vsel %vm205, %v385, 0
      %v944 = vsel %vm205, %v387, 0
      %v946 = vsel %vm205, %v389, 0
      %v948 = vsel %vm205, %v391, 0
      %v950 = vsel %vm205, %v393, 0
      %v952 = vsel %vm205, %v395, 0
      %v954 = vsel %vm205, %v397, 0
      %v956 = vsel %vm205, %v399, 0
      %v958 = vsel %vm205, %v401, 0
      %v960 = vsel %vm205, %v403, 0
      %v962 = vsel %vm205, %v405, 0
      %v964 = vsel %vm205, %v407, 0
      %v966 = vsel %vm205, %v409, 0
      %v969 = vsel %vm771, %v316, 0
      %971 = vmatprep.subr.bf16.mxu0 0
      %972 = vmatpush1.bf16.msra.mxu0 0
      %973 = vmatprep.subr.bf16.mxu0 0
      %974 = vmatpush1.bf16.msra.mxu0 0
      %975 = vmatprep.subr.bf16.mxu0 0
      %976 = vmatpush1.bf16.msra.mxu0 0
      %977 = vmatprep.subr.bf16.mxu0 0
      %978 = vmatpush1.bf16.msra.mxu0 0
      %979 = vmatprep.subr.bf16.mxu0 0
      %980 = vmatpush1.bf16.msra.mxu0 0
      %981 = vmatprep.subr.bf16.mxu0 0
      %982 = vmatpush1.bf16.msra.mxu0 0
      %983 = vmatprep.subr.bf16.mxu0 0
      %984 = vmatpush1.bf16.msra.mxu0 0
      %985 = vmatprep.subr.bf16.mxu0 0
      %986 = vmatpush1.bf16.msra.mxu0 %v969
      %987 = vmatprep.subr.bf16.mxu0 0
      %988 = vmatpush2.bf16.msra.mxu0 0
      %989 = vmatprep.subr.bf16.mxu0 0
      %990 = vmatpush2.bf16.msra.mxu0 0
      %991 = vmatprep.subr.bf16.mxu0 0
      %992 = vmatpush2.bf16.msra.mxu0 0
      %993 = vmatprep.subr.bf16.mxu0 0
      %994 = vmatpush2.bf16.msra.mxu0 0
      %995 = vmatprep.subr.bf16.mxu0 0
      %996 = vmatpush2.bf16.msra.mxu0 0
      %997 = vmatprep.subr.bf16.mxu0 0
      %998 = vmatpush2.bf16.msra.mxu0 0
      %999 = vmatprep.subr.bf16.mxu0 0
      %1000 = vmatpush2.bf16.msra.mxu0 0
      %1001 = vmatprep.subr.bf16.mxu0 0
      %1002 = vmatpush2.bf16.msra.mxu0 0
      %1003 = vmatprep.mubr.bf16.mxu0 0
      %1004 = vmatmul.mubr.bf16.gmra.mxu0 %v936
      %v1005 = vpop.f32.mrf.mxu0
      %v1006 = vadd.f32 %v810, %v1005
      %v1007 = vpop.f32.mrf.mxu0
      %v1008 = vpop.f32.mrf.mxu0
      %v1009 = vadd.f32 %v813, %v1008
      %v1010 = vpop.f32.mrf.mxu0
      %1011 = vmatprep.mubr.bf16.mxu0 0
      %1012 = vmatmul.mubr.bf16.gmra.mxu0 %v938
      %v1013 = vpop.f32.mrf.mxu0
      %v1014 = vadd.f32 %v818, %v1013
      %v1015 = vpop.f32.mrf.mxu0
      %v1016 = vpop.f32.mrf.mxu0
      %v1017 = vadd.f32 %v821, %v1016
      %v1018 = vpop.f32.mrf.mxu0
      %1019 = vmatprep.mubr.bf16.mxu0 0
      %1020 = vmatmul.mubr.bf16.gmra.mxu0 %v940
      %v1021 = vpop.f32.mrf.mxu0
      %v1022 = vadd.f32 %v826, %v1021
      %v1023 = vpop.f32.mrf.mxu0
      %v1024 = vpop.f32.mrf.mxu0
      %v1025 = vadd.f32 %v829, %v1024
      %v1026 = vpop.f32.mrf.mxu0
      %1027 = vmatprep.mubr.bf16.mxu0 0
      %1028 = vmatmul.mubr.bf16.gmra.mxu0 %v942
      %v1029 = vpop.f32.mrf.mxu0
      %v1030 = vadd.f32 %v834, %v1029
      %v1031 = vpop.f32.mrf.mxu0
      %v1032 = vpop.f32.mrf.mxu0
      %v1033 = vadd.f32 %v837, %v1032
      %v1034 = vpop.f32.mrf.mxu0
      %1035 = vmatprep.mubr.bf16.mxu0 0
      %1036 = vmatmul.mubr.bf16.gmra.mxu0 %v944
      %v1037 = vpop.f32.mrf.mxu0
      %v1038 = vadd.f32 %v842, %v1037
      %v1039 = vpop.f32.mrf.mxu0
      %v1040 = vpop.f32.mrf.mxu0
      %v1041 = vadd.f32 %v845, %v1040
      %v1042 = vpop.f32.mrf.mxu0
      %1043 = vmatprep.mubr.bf16.mxu0 0
      %1044 = vmatmul.mubr.bf16.gmra.mxu0 %v946
      %v1045 = vpop.f32.mrf.mxu0
      %v1046 = vadd.f32 %v850, %v1045
      %v1047 = vpop.f32.mrf.mxu0
      %v1048 = vpop.f32.mrf.mxu0
      %v1049 = vadd.f32 %v853, %v1048
      %v1050 = vpop.f32.mrf.mxu0
      %1051 = vmatprep.mubr.bf16.mxu0 0
      %1052 = vmatmul.mubr.bf16.gmra.mxu0 %v948
      %v1053 = vpop.f32.mrf.mxu0
      %v1054 = vadd.f32 %v858, %v1053
      %v1055 = vpop.f32.mrf.mxu0
      %v1056 = vpop.f32.mrf.mxu0
      %v1057 = vadd.f32 %v861, %v1056
      %v1058 = vpop.f32.mrf.mxu0
      %1059 = vmatprep.mubr.bf16.mxu0 0
      %1060 = vmatmul.mubr.bf16.gmra.mxu0 %v950
      %v1061 = vpop.f32.mrf.mxu0
      %v1062 = vadd.f32 %v866, %v1061
      %v1063 = vpop.f32.mrf.mxu0
      %v1064 = vpop.f32.mrf.mxu0
      %v1065 = vadd.f32 %v869, %v1064
      %v1066 = vpop.f32.mrf.mxu0
      %1067 = vmatprep.mubr.bf16.mxu0 0
      %1068 = vmatmul.mubr.bf16.gmra.mxu0 %v952
      %v1069 = vpop.f32.mrf.mxu0
      %v1070 = vadd.f32 %v874, %v1069
      %v1071 = vpop.f32.mrf.mxu0
      %v1072 = vpop.f32.mrf.mxu0
      %v1073 = vadd.f32 %v877, %v1072
      %v1074 = vpop.f32.mrf.mxu0
      %1075 = vmatprep.mubr.bf16.mxu0 0
      %1076 = vmatmul.mubr.bf16.gmra.mxu0 %v954
      %v1077 = vpop.f32.mrf.mxu0
      %v1078 = vadd.f32 %v882, %v1077
      %v1079 = vpop.f32.mrf.mxu0
      %v1080 = vpop.f32.mrf.mxu0
      %v1081 = vadd.f32 %v885, %v1080
      %v1082 = vpop.f32.mrf.mxu0
      %1083 = vmatprep.mubr.bf16.mxu0 0
      %1084 = vmatmul.mubr.bf16.gmra.mxu0 %v956
      %v1085 = vpop.f32.mrf.mxu0
      %v1086 = vadd.f32 %v890, %v1085
      %v1087 = vpop.f32.mrf.mxu0
      %v1088 = vpop.f32.mrf.mxu0
      %v1089 = vadd.f32 %v893, %v1088
      %v1090 = vpop.f32.mrf.mxu0
      %1091 = vmatprep.mubr.bf16.mxu0 0
      %1092 = vmatmul.mubr.bf16.gmra.mxu0 %v958
      %v1093 = vpop.f32.mrf.mxu0
      %v1094 = vadd.f32 %v898, %v1093
      %v1095 = vpop.f32.mrf.mxu0
      %v1096 = vpop.f32.mrf.mxu0
      %v1097 = vadd.f32 %v901, %v1096
      %v1098 = vpop.f32.mrf.mxu0
      %1099 = vmatprep.mubr.bf16.mxu0 0
      %1100 = vmatmul.mubr.bf16.gmra.mxu0 %v960
      %v1101 = vpop.f32.mrf.mxu0
      %v1102 = vadd.f32 %v906, %v1101
      %v1103 = vpop.f32.mrf.mxu0
      %v1104 = vpop.f32.mrf.mxu0
      %v1105 = vadd.f32 %v909, %v1104
      %v1106 = vpop.f32.mrf.mxu0
      %1107 = vmatprep.mubr.bf16.mxu0 0
      %1108 = vmatmul.mubr.bf16.gmra.mxu0 %v962
      %v1109 = vpop.f32.mrf.mxu0
      %v1110 = vadd.f32 %v914, %v1109
      %v1111 = vpop.f32.mrf.mxu0
      %v1112 = vpop.f32.mrf.mxu0
      %v1113 = vadd.f32 %v917, %v1112
      %v1114 = vpop.f32.mrf.mxu0
      %1115 = vmatprep.mubr.bf16.mxu0 0
      %1116 = vmatmul.mubr.bf16.gmra.mxu0 %v964
      %v1117 = vpop.f32.mrf.mxu0
      %v1118 = vadd.f32 %v922, %v1117
      %v1119 = vpop.f32.mrf.mxu0
      %v1120 = vpop.f32.mrf.mxu0
      %v1121 = vadd.f32 %v925, %v1120
      %v1122 = vpop.f32.mrf.mxu0
      %1123 = vmatprep.mubr.bf16.mxu0 0
      %1124 = vmatmul.mubr.bf16.gmra.mxu0 %v966
      %v1125 = vpop.f32.mrf.mxu0
      %v1126 = vadd.f32 %v930, %v1125
      %v1127 = vpop.f32.mrf.mxu0
      %v1128 = vpop.f32.mrf.mxu0
      %v1129 = vadd.f32 %v933, %v1128
      %v1130 = vpop.f32.mrf.mxu0
      %1131 = vdwg.mxu0
      %v1133 = vsel %vm205, %v671, 0
      %v1136 = vsel %vm205, %v674, 0
      %v1139 = vsel %vm205, %v677, 0
      %v1142 = vsel %vm205, %v680, 0
      %v1145 = vsel %vm205, %v683, 0
      %v1148 = vsel %vm205, %v686, 0
      %v1151 = vsel %vm205, %v689, 0
      %v1154 = vsel %vm205, %v692, 0
      %v1157 = vsel %vm205, %v695, 0
      %v1160 = vsel %vm205, %v698, 0
      %v1163 = vsel %vm205, %v701, 0
      %v1166 = vsel %vm205, %v704, 0
      %v1169 = vsel %vm205, %v707, 0
      %v1172 = vsel %vm205, %v710, 0
      %v1175 = vsel %vm205, %v713, 0
      %v1178 = vsel %vm205, %v716, 0
      %v1181 = vsel %vm771, %v318, 0
      %1183 = vmatprep.subr.bf16.mxu0 0
      %1184 = vmatpush1.bf16.msra.mxu0 0
      %1185 = vmatprep.subr.bf16.mxu0 0
      %1186 = vmatpush1.bf16.msra.mxu0 0
      %1187 = vmatprep.subr.bf16.mxu0 0
      %1188 = vmatpush1.bf16.msra.mxu0 0
      %1189 = vmatprep.subr.bf16.mxu0 0
      %1190 = vmatpush1.bf16.msra.mxu0 0
      %1191 = vmatprep.subr.bf16.mxu0 0
      %1192 = vmatpush1.bf16.msra.mxu0 0
      %1193 = vmatprep.subr.bf16.mxu0 0
      %1194 = vmatpush1.bf16.msra.mxu0 0
      %1195 = vmatprep.subr.bf16.mxu0 0
      %1196 = vmatpush1.bf16.msra.mxu0 0
      %1197 = vmatprep.subr.bf16.mxu0 0
      %1198 = vmatpush1.bf16.msra.mxu0 %v1181
      %1199 = vmatprep.subr.bf16.mxu0 0
      %1200 = vmatpush2.bf16.msra.mxu0 0
      %1201 = vmatprep.subr.bf16.mxu0 0
      %1202 = vmatpush2.bf16.msra.mxu0 0
      %1203 = vmatprep.subr.bf16.mxu0 0
      %1204 = vmatpush2.bf16.msra.mxu0 0
      %1205 = vmatprep.subr.bf16.mxu0 0
      %1206 = vmatpush2.bf16.msra.mxu0 0
      %1207 = vmatprep.subr.bf16.mxu0 0
      %1208 = vmatpush2.bf16.msra.mxu0 0
      %1209 = vmatprep.subr.bf16.mxu0 0
      %1210 = vmatpush2.bf16.msra.mxu0 0
      %1211 = vmatprep.subr.bf16.mxu0 0
      %1212 = vmatpush2.bf16.msra.mxu0 0
      %1213 = vmatprep.subr.bf16.mxu0 0
      %1214 = vmatpush2.bf16.msra.mxu0 0
      %1215 = vmatprep.mubr.bf16.mxu0 0
      %1216 = vmatmul.mubr.bf16.gmra.mxu0 %v1133
      %v1217 = vpop.f32.mrf.mxu0
      %v1218 = vadd.f32 0.0, %v1217
      %v1219 = vpop.f32.mrf.mxu0
      %v1220 = vpop.f32.mrf.mxu0
      %v1221 = vadd.f32 0.0, %v1220
      %v1222 = vpop.f32.mrf.mxu0
      %1223 = vmatprep.mubr.bf16.mxu0 0
      %1224 = vmatmul.mubr.bf16.gmra.mxu0 %v1136
      %v1225 = vpop.f32.mrf.mxu0
      %v1226 = vadd.f32 0.0, %v1225
      %v1227 = vpop.f32.mrf.mxu0
      %v1228 = vpop.f32.mrf.mxu0
      %v1229 = vadd.f32 0.0, %v1228
      %v1230 = vpop.f32.mrf.mxu0
      %1231 = vmatprep.mubr.bf16.mxu0 0
      %1232 = vmatmul.mubr.bf16.gmra.mxu0 %v1139
      %v1233 = vpop.f32.mrf.mxu0
      %v1234 = vadd.f32 0.0, %v1233
      %v1235 = vpop.f32.mrf.mxu0
      %v1236 = vpop.f32.mrf.mxu0
      %v1237 = vadd.f32 0.0, %v1236
      %v1238 = vpop.f32.mrf.mxu0
      %1239 = vmatprep.mubr.bf16.mxu0 0
      %1240 = vmatmul.mubr.bf16.gmra.mxu0 %v1142
      %v1241 = vpop.f32.mrf.mxu0
      %v1242 = vadd.f32 0.0, %v1241
      %v1243 = vpop.f32.mrf.mxu0
      %v1244 = vpop.f32.mrf.mxu0
      %v1245 = vadd.f32 0.0, %v1244
      %v1246 = vpop.f32.mrf.mxu0
      %1247 = vmatprep.mubr.bf16.mxu0 0
      %1248 = vmatmul.mubr.bf16.gmra.mxu0 %v1145
      %v1249 = vpop.f32.mrf.mxu0
      %v1250 = vadd.f32 0.0, %v1249
      %v1251 = vpop.f32.mrf.mxu0
      %v1252 = vpop.f32.mrf.mxu0
      %v1253 = vadd.f32 0.0, %v1252
      %v1254 = vpop.f32.mrf.mxu0
      %1255 = vmatprep.mubr.bf16.mxu0 0
      %1256 = vmatmul.mubr.bf16.gmra.mxu0 %v1148
      %v1257 = vpop.f32.mrf.mxu0
      %v1258 = vadd.f32 0.0, %v1257
      %v1259 = vpop.f32.mrf.mxu0
      %v1260 = vpop.f32.mrf.mxu0
      %v1261 = vadd.f32 0.0, %v1260
      %v1262 = vpop.f32.mrf.mxu0
      %1263 = vmatprep.mubr.bf16.mxu0 0
      %1264 = vmatmul.mubr.bf16.gmra.mxu0 %v1151
      %v1265 = vpop.f32.mrf.mxu0
      %v1266 = vadd.f32 0.0, %v1265
      %v1267 = vpop.f32.mrf.mxu0
      %v1268 = vpop.f32.mrf.mxu0
      %v1269 = vadd.f32 0.0, %v1268
      %v1270 = vpop.f32.mrf.mxu0
      %1271 = vmatprep.mubr.bf16.mxu0 0
      %1272 = vmatmul.mubr.bf16.gmra.mxu0 %v1154
      %v1273 = vpop.f32.mrf.mxu0
      %v1274 = vadd.f32 0.0, %v1273
      %v1275 = vpop.f32.mrf.mxu0
      %v1276 = vpop.f32.mrf.mxu0
      %v1277 = vadd.f32 0.0, %v1276
      %v1278 = vpop.f32.mrf.mxu0
      %1279 = vmatprep.mubr.bf16.mxu0 0
      %1280 = vmatmul.mubr.bf16.gmra.mxu0 %v1157
      %v1281 = vpop.f32.mrf.mxu0
      %v1282 = vadd.f32 0.0, %v1281
      %v1283 = vpop.f32.mrf.mxu0
      %v1284 = vpop.f32.mrf.mxu0
      %v1285 = vadd.f32 0.0, %v1284
      %v1286 = vpop.f32.mrf.mxu0
      %1287 = vmatprep.mubr.bf16.mxu0 0
      %1288 = vmatmul.mubr.bf16.gmra.mxu0 %v1160
      %v1289 = vpop.f32.mrf.mxu0
      %v1290 = vadd.f32 0.0, %v1289
      %v1291 = vpop.f32.mrf.mxu0
      %v1292 = vpop.f32.mrf.mxu0
      %v1293 = vadd.f32 0.0, %v1292
      %v1294 = vpop.f32.mrf.mxu0
      %1295 = vmatprep.mubr.bf16.mxu0 0
      %1296 = vmatmul.mubr.bf16.gmra.mxu0 %v1163
      %v1297 = vpop.f32.mrf.mxu0
      %v1298 = vadd.f32 0.0, %v1297
      %v1299 = vpop.f32.mrf.mxu0
      %v1300 = vpop.f32.mrf.mxu0
      %v1301 = vadd.f32 0.0, %v1300
      %v1302 = vpop.f32.mrf.mxu0
      %1303 = vmatprep.mubr.bf16.mxu0 0
      %1304 = vmatmul.mubr.bf16.gmra.mxu0 %v1166
      %v1305 = vpop.f32.mrf.mxu0
      %v1306 = vadd.f32 0.0, %v1305
      %v1307 = vpop.f32.mrf.mxu0
      %v1308 = vpop.f32.mrf.mxu0
      %v1309 = vadd.f32 0.0, %v1308
      %v1310 = vpop.f32.mrf.mxu0
      %1311 = vmatprep.mubr.bf16.mxu0 0
      %1312 = vmatmul.mubr.bf16.gmra.mxu0 %v1169
      %v1313 = vpop.f32.mrf.mxu0
      %v1314 = vadd.f32 0.0, %v1313
      %v1315 = vpop.f32.mrf.mxu0
      %v1316 = vpop.f32.mrf.mxu0
      %v1317 = vadd.f32 0.0, %v1316
      %v1318 = vpop.f32.mrf.mxu0
      %1319 = vmatprep.mubr.bf16.mxu0 0
      %1320 = vmatmul.mubr.bf16.gmra.mxu0 %v1172
      %v1321 = vpop.f32.mrf.mxu0
      %v1322 = vadd.f32 0.0, %v1321
      %v1323 = vpop.f32.mrf.mxu0
      %v1324 = vpop.f32.mrf.mxu0
      %v1325 = vadd.f32 0.0, %v1324
      %v1326 = vpop.f32.mrf.mxu0
      %1327 = vmatprep.mubr.bf16.mxu0 0
      %1328 = vmatmul.mubr.bf16.gmra.mxu0 %v1175
      %v1329 = vpop.f32.mrf.mxu0
      %v1330 = vadd.f32 0.0, %v1329
      %v1331 = vpop.f32.mrf.mxu0
      %v1332 = vpop.f32.mrf.mxu0
      %v1333 = vadd.f32 0.0, %v1332
      %v1334 = vpop.f32.mrf.mxu0
      %1335 = vmatprep.mubr.bf16.mxu0 0
      %1336 = vmatmul.mubr.bf16.gmra.mxu0 %v1178
      %v1337 = vpop.f32.mrf.mxu0
      %v1338 = vadd.f32 0.0, %v1337
      %v1339 = vpop.f32.mrf.mxu0
      %v1340 = vpop.f32.mrf.mxu0
      %v1341 = vadd.f32 0.0, %v1340
      %v1342 = vpop.f32.mrf.mxu0
      %1343 = vdwg.mxu0
      %v1344 = vadd.f32 %v1006, %v1218
      %v1345 = vadd.f32 %v1009, %v1221
      %v1346 = vadd.f32 %v1014, %v1226
      %v1347 = vadd.f32 %v1017, %v1229
      %v1348 = vadd.f32 %v1022, %v1234
      %v1349 = vadd.f32 %v1025, %v1237
      %v1350 = vadd.f32 %v1030, %v1242
      %v1351 = vadd.f32 %v1033, %v1245
      %v1352 = vadd.f32 %v1038, %v1250
      %v1353 = vadd.f32 %v1041, %v1253
      %v1354 = vadd.f32 %v1046, %v1258
      %v1355 = vadd.f32 %v1049, %v1261
      %v1356 = vadd.f32 %v1054, %v1266
      %v1357 = vadd.f32 %v1057, %v1269
      %v1358 = vadd.f32 %v1062, %v1274
      %v1359 = vadd.f32 %v1065, %v1277
      %v1360 = vadd.f32 %v1070, %v1282
      %v1361 = vadd.f32 %v1073, %v1285
      %v1362 = vadd.f32 %v1078, %v1290
      %v1363 = vadd.f32 %v1081, %v1293
      %v1364 = vadd.f32 %v1086, %v1298
      %v1365 = vadd.f32 %v1089, %v1301
      %v1366 = vadd.f32 %v1094, %v1306
      %v1367 = vadd.f32 %v1097, %v1309
      %v1368 = vadd.f32 %v1102, %v1314
      %v1369 = vadd.f32 %v1105, %v1317
      %v1370 = vadd.f32 %v1110, %v1322
      %v1371 = vadd.f32 %v1113, %v1325
      %v1372 = vadd.f32 %v1118, %v1330
      %v1373 = vadd.f32 %v1121, %v1333
      %v1374 = vadd.f32 %v1126, %v1338
      %v1375 = vadd.f32 %v1129, %v1341
      %v1376 = vsel %vm205, %v411, 0
      %v1379 = vsel %vm771, %v319, 0
      %1381 = vmatprep.subr.bf16.mxu0 0
      %1382 = vmatpush1.bf16.msra.mxu0 0
      %1383 = vmatprep.subr.bf16.mxu0 0
      %1384 = vmatpush1.bf16.msra.mxu0 0
      %1385 = vmatprep.subr.bf16.mxu0 0
      %1386 = vmatpush1.bf16.msra.mxu0 0
      %1387 = vmatprep.subr.bf16.mxu0 0
      %1388 = vmatpush1.bf16.msra.mxu0 0
      %1389 = vmatprep.subr.bf16.mxu0 0
      %1390 = vmatpush1.bf16.msra.mxu0 0
      %1391 = vmatprep.subr.bf16.mxu0 0
      %1392 = vmatpush1.bf16.msra.mxu0 0
      %1393 = vmatprep.subr.bf16.mxu0 0
      %1394 = vmatpush1.bf16.msra.mxu0 0
      %1395 = vmatprep.subr.bf16.mxu0 0
      %1396 = vmatpush1.bf16.msra.mxu0 %v1379
      %1397 = vmatprep.subr.bf16.mxu0 0
      %1398 = vmatpush2.bf16.msra.mxu0 0
      %1399 = vmatprep.subr.bf16.mxu0 0
      %1400 = vmatpush2.bf16.msra.mxu0 0
      %1401 = vmatprep.subr.bf16.mxu0 0
      %1402 = vmatpush2.bf16.msra.mxu0 0
      %1403 = vmatprep.subr.bf16.mxu0 0
      %1404 = vmatpush2.bf16.msra.mxu0 0
      %1405 = vmatprep.subr.bf16.mxu0 0
      %1406 = vmatpush2.bf16.msra.mxu0 0
      %1407 = vmatprep.subr.bf16.mxu0 0
      %1408 = vmatpush2.bf16.msra.mxu0 0
      %1409 = vmatprep.subr.bf16.mxu0 0
      %1410 = vmatpush2.bf16.msra.mxu0 0
      %1411 = vmatprep.subr.bf16.mxu0 0
      %1412 = vmatpush2.bf16.msra.mxu0 0
      %1413 = vmatprep.mubr.bf16.mxu0 0
      %1414 = vmatmul.mubr.bf16.gmra.mxu0 %v938
      %v1415 = vpop.f32.mrf.mxu0
      %v1416 = vadd.f32 0.0, %v1415
      %v1417 = vpop.f32.mrf.mxu0
      %v1418 = vpop.f32.mrf.mxu0
      %v1419 = vadd.f32 0.0, %v1418
      %v1420 = vpop.f32.mrf.mxu0
      %1421 = vmatprep.mubr.bf16.mxu0 0
      %1422 = vmatmul.mubr.bf16.gmra.mxu0 %v940
      %v1423 = vpop.f32.mrf.mxu0
      %v1424 = vadd.f32 0.0, %v1423
      %v1425 = vpop.f32.mrf.mxu0
      %v1426 = vpop.f32.mrf.mxu0
      %v1427 = vadd.f32 0.0, %v1426
      %v1428 = vpop.f32.mrf.mxu0
      %1429 = vmatprep.mubr.bf16.mxu0 0
      %1430 = vmatmul.mubr.bf16.gmra.mxu0 %v942
      %v1431 = vpop.f32.mrf.mxu0
      %v1432 = vadd.f32 0.0, %v1431
      %v1433 = vpop.f32.mrf.mxu0
      %v1434 = vpop.f32.mrf.mxu0
      %v1435 = vadd.f32 0.0, %v1434
      %v1436 = vpop.f32.mrf.mxu0
      %1437 = vmatprep.mubr.bf16.mxu0 0
      %1438 = vmatmul.mubr.bf16.gmra.mxu0 %v944
      %v1439 = vpop.f32.mrf.mxu0
      %v1440 = vadd.f32 0.0, %v1439
      %v1441 = vpop.f32.mrf.mxu0
      %v1442 = vpop.f32.mrf.mxu0
      %v1443 = vadd.f32 0.0, %v1442
      %v1444 = vpop.f32.mrf.mxu0
      %1445 = vmatprep.mubr.bf16.mxu0 0
      %1446 = vmatmul.mubr.bf16.gmra.mxu0 %v946
      %v1447 = vpop.f32.mrf.mxu0
      %v1448 = vadd.f32 0.0, %v1447
      %v1449 = vpop.f32.mrf.mxu0
      %v1450 = vpop.f32.mrf.mxu0
      %v1451 = vadd.f32 0.0, %v1450
      %v1452 = vpop.f32.mrf.mxu0
      %1453 = vmatprep.mubr.bf16.mxu0 0
      %1454 = vmatmul.mubr.bf16.gmra.mxu0 %v948
      %v1455 = vpop.f32.mrf.mxu0
      %v1456 = vadd.f32 0.0, %v1455
      %v1457 = vpop.f32.mrf.mxu0
      %v1458 = vpop.f32.mrf.mxu0
      %v1459 = vadd.f32 0.0, %v1458
      %v1460 = vpop.f32.mrf.mxu0
      %1461 = vmatprep.mubr.bf16.mxu0 0
      %1462 = vmatmul.mubr.bf16.gmra.mxu0 %v950
      %v1463 = vpop.f32.mrf.mxu0
      %v1464 = vadd.f32 0.0, %v1463
      %v1465 = vpop.f32.mrf.mxu0
      %v1466 = vpop.f32.mrf.mxu0
      %v1467 = vadd.f32 0.0, %v1466
      %v1468 = vpop.f32.mrf.mxu0
      %1469 = vmatprep.mubr.bf16.mxu0 0
      %1470 = vmatmul.mubr.bf16.gmra.mxu0 %v952
      %v1471 = vpop.f32.mrf.mxu0
      %v1472 = vadd.f32 0.0, %v1471
      %v1473 = vpop.f32.mrf.mxu0
      %v1474 = vpop.f32.mrf.mxu0
      %v1475 = vadd.f32 0.0, %v1474
      %v1476 = vpop.f32.mrf.mxu0
      %1477 = vmatprep.mubr.bf16.mxu0 0
      %1478 = vmatmul.mubr.bf16.gmra.mxu0 %v954
      %v1479 = vpop.f32.mrf.mxu0
      %v1480 = vadd.f32 0.0, %v1479
      %v1481 = vpop.f32.mrf.mxu0
      %v1482 = vpop.f32.mrf.mxu0
      %v1483 = vadd.f32 0.0, %v1482
      %v1484 = vpop.f32.mrf.mxu0
      %1485 = vmatprep.mubr.bf16.mxu0 0
      %1486 = vmatmul.mubr.bf16.gmra.mxu0 %v956
      %v1487 = vpop.f32.mrf.mxu0
      %v1488 = vadd.f32 0.0, %v1487
      %v1489 = vpop.f32.mrf.mxu0
      %v1490 = vpop.f32.mrf.mxu0
      %v1491 = vadd.f32 0.0, %v1490
      %v1492 = vpop.f32.mrf.mxu0
      %1493 = vmatprep.mubr.bf16.mxu0 0
      %1494 = vmatmul.mubr.bf16.gmra.mxu0 %v958
      %v1495 = vpop.f32.mrf.mxu0
      %v1496 = vadd.f32 0.0, %v1495
      %v1497 = vpop.f32.mrf.mxu0
      %v1498 = vpop.f32.mrf.mxu0
      %v1499 = vadd.f32 0.0, %v1498
      %v1500 = vpop.f32.mrf.mxu0
      %1501 = vmatprep.mubr.bf16.mxu0 0
      %1502 = vmatmul.mubr.bf16.gmra.mxu0 %v960
      %v1503 = vpop.f32.mrf.mxu0
      %v1504 = vadd.f32 0.0, %v1503
      %v1505 = vpop.f32.mrf.mxu0
      %v1506 = vpop.f32.mrf.mxu0
      %v1507 = vadd.f32 0.0, %v1506
      %v1508 = vpop.f32.mrf.mxu0
      %1509 = vmatprep.mubr.bf16.mxu0 0
      %1510 = vmatmul.mubr.bf16.gmra.mxu0 %v962
      %v1511 = vpop.f32.mrf.mxu0
      %v1512 = vadd.f32 0.0, %v1511
      %v1513 = vpop.f32.mrf.mxu0
      %v1514 = vpop.f32.mrf.mxu0
      %v1515 = vadd.f32 0.0, %v1514
      %v1516 = vpop.f32.mrf.mxu0
      %1517 = vmatprep.mubr.bf16.mxu0 0
      %1518 = vmatmul.mubr.bf16.gmra.mxu0 %v964
      %v1519 = vpop.f32.mrf.mxu0
      %v1520 = vadd.f32 0.0, %v1519
      %v1521 = vpop.f32.mrf.mxu0
      %v1522 = vpop.f32.mrf.mxu0
      %v1523 = vadd.f32 0.0, %v1522
      %v1524 = vpop.f32.mrf.mxu0
      %1525 = vmatprep.mubr.bf16.mxu0 0
      %1526 = vmatmul.mubr.bf16.gmra.mxu0 %v966
      %v1527 = vpop.f32.mrf.mxu0
      %v1528 = vadd.f32 0.0, %v1527
      %v1529 = vpop.f32.mrf.mxu0
      %v1530 = vpop.f32.mrf.mxu0
      %v1531 = vadd.f32 0.0, %v1530
      %v1532 = vpop.f32.mrf.mxu0
      %1533 = vmatprep.mubr.bf16.mxu0 0
      %1534 = vmatmul.mubr.bf16.gmra.mxu0 %v1376
      %v1535 = vpop.f32.mrf.mxu0
      %v1536 = vadd.f32 0.0, %v1535
      %v1537 = vpop.f32.mrf.mxu0
      %v1538 = vpop.f32.mrf.mxu0
      %v1539 = vadd.f32 0.0, %v1538
      %v1540 = vpop.f32.mrf.mxu0
      %1541 = vdwg.mxu0
      %v1542 = vadd.f32 %v1344, %v1416
      %v1543 = vadd.f32 %v1345, %v1419
      %v1544 = vadd.f32 %v1346, %v1424
      %v1545 = vadd.f32 %v1347, %v1427
      %v1546 = vadd.f32 %v1348, %v1432
      %v1547 = vadd.f32 %v1349, %v1435
      %v1548 = vadd.f32 %v1350, %v1440
      %v1549 = vadd.f32 %v1351, %v1443
      %v1550 = vadd.f32 %v1352, %v1448
      %v1551 = vadd.f32 %v1353, %v1451
      %v1552 = vadd.f32 %v1354, %v1456
      %v1553 = vadd.f32 %v1355, %v1459
      %v1554 = vadd.f32 %v1356, %v1464
      %v1555 = vadd.f32 %v1357, %v1467
      %v1556 = vadd.f32 %v1358, %v1472
      %v1557 = vadd.f32 %v1359, %v1475
      %v1558 = vadd.f32 %v1360, %v1480
      %v1559 = vadd.f32 %v1361, %v1483
      %v1560 = vadd.f32 %v1362, %v1488
      %v1561 = vadd.f32 %v1363, %v1491
      %v1562 = vadd.f32 %v1364, %v1496
      %v1563 = vadd.f32 %v1365, %v1499
      %v1564 = vadd.f32 %v1366, %v1504
      %v1565 = vadd.f32 %v1367, %v1507
      %v1566 = vadd.f32 %v1368, %v1512
      %v1567 = vadd.f32 %v1369, %v1515
      %v1568 = vadd.f32 %v1370, %v1520
      %v1569 = vadd.f32 %v1371, %v1523
      %v1570 = vadd.f32 %v1372, %v1528
      %v1571 = vadd.f32 %v1373, %v1531
      %v1572 = vadd.f32 %v1374, %v1536
      %v1573 = vadd.f32 %v1375, %v1539
      %v1575 = vsel %vm205, %v619, 0
      %v1578 = vsel %vm771, %v320, 0
      %1580 = vmatprep.subr.bf16.mxu0 0
      %1581 = vmatpush1.bf16.msra.mxu0 0
      %1582 = vmatprep.subr.bf16.mxu0 0
      %1583 = vmatpush1.bf16.msra.mxu0 0
      %1584 = vmatprep.subr.bf16.mxu0 0
      %1585 = vmatpush1.bf16.msra.mxu0 0
      %1586 = vmatprep.subr.bf16.mxu0 0
      %1587 = vmatpush1.bf16.msra.mxu0 0
      %1588 = vmatprep.subr.bf16.mxu0 0
      %1589 = vmatpush1.bf16.msra.mxu0 0
      %1590 = vmatprep.subr.bf16.mxu0 0
      %1591 = vmatpush1.bf16.msra.mxu0 0
      %1592 = vmatprep.subr.bf16.mxu0 0
      %1593 = vmatpush1.bf16.msra.mxu0 0
      %1594 = vmatprep.subr.bf16.mxu0 0
      %1595 = vmatpush1.bf16.msra.mxu0 %v1578
      %1596 = vmatprep.subr.bf16.mxu0 0
      %1597 = vmatpush2.bf16.msra.mxu0 0
      %1598 = vmatprep.subr.bf16.mxu0 0
      %1599 = vmatpush2.bf16.msra.mxu0 0
      %1600 = vmatprep.subr.bf16.mxu0 0
      %1601 = vmatpush2.bf16.msra.mxu0 0
      %1602 = vmatprep.subr.bf16.mxu0 0
      %1603 = vmatpush2.bf16.msra.mxu0 0
      %1604 = vmatprep.subr.bf16.mxu0 0
      %1605 = vmatpush2.bf16.msra.mxu0 0
      %1606 = vmatprep.subr.bf16.mxu0 0
      %1607 = vmatpush2.bf16.msra.mxu0 0
      %1608 = vmatprep.subr.bf16.mxu0 0
      %1609 = vmatpush2.bf16.msra.mxu0 0
      %1610 = vmatprep.subr.bf16.mxu0 0
      %1611 = vmatpush2.bf16.msra.mxu0 0
      %1612 = vmatprep.mubr.bf16.mxu0 0
      %1613 = vmatmul.mubr.bf16.gmra.mxu0 %v727
      %v1614 = vpop.f32.mrf.mxu0
      %v1615 = vadd.f32 0.0, %v1614
      %v1616 = vpop.f32.mrf.mxu0
      %v1617 = vpop.f32.mrf.mxu0
      %v1618 = vadd.f32 0.0, %v1617
      %v1619 = vpop.f32.mrf.mxu0
      %1620 = vmatprep.mubr.bf16.mxu0 0
      %1621 = vmatmul.mubr.bf16.gmra.mxu0 %v730
      %v1622 = vpop.f32.mrf.mxu0
      %v1623 = vadd.f32 0.0, %v1622
      %v1624 = vpop.f32.mrf.mxu0
      %v1625 = vpop.f32.mrf.mxu0
      %v1626 = vadd.f32 0.0, %v1625
      %v1627 = vpop.f32.mrf.mxu0
      %1628 = vmatprep.mubr.bf16.mxu0 0
      %1629 = vmatmul.mubr.bf16.gmra.mxu0 %v733
      %v1630 = vpop.f32.mrf.mxu0
      %v1631 = vadd.f32 0.0, %v1630
      %v1632 = vpop.f32.mrf.mxu0
      %v1633 = vpop.f32.mrf.mxu0
      %v1634 = vadd.f32 0.0, %v1633
      %v1635 = vpop.f32.mrf.mxu0
      %1636 = vmatprep.mubr.bf16.mxu0 0
      %1637 = vmatmul.mubr.bf16.gmra.mxu0 %v736
      %v1638 = vpop.f32.mrf.mxu0
      %v1639 = vadd.f32 0.0, %v1638
      %v1640 = vpop.f32.mrf.mxu0
      %v1641 = vpop.f32.mrf.mxu0
      %v1642 = vadd.f32 0.0, %v1641
      %v1643 = vpop.f32.mrf.mxu0
      %1644 = vmatprep.mubr.bf16.mxu0 0
      %1645 = vmatmul.mubr.bf16.gmra.mxu0 %v739
      %v1646 = vpop.f32.mrf.mxu0
      %v1647 = vadd.f32 0.0, %v1646
      %v1648 = vpop.f32.mrf.mxu0
      %v1649 = vpop.f32.mrf.mxu0
      %v1650 = vadd.f32 0.0, %v1649
      %v1651 = vpop.f32.mrf.mxu0
      %1652 = vmatprep.mubr.bf16.mxu0 0
      %1653 = vmatmul.mubr.bf16.gmra.mxu0 %v742
      %v1654 = vpop.f32.mrf.mxu0
      %v1655 = vadd.f32 0.0, %v1654
      %v1656 = vpop.f32.mrf.mxu0
      %v1657 = vpop.f32.mrf.mxu0
      %v1658 = vadd.f32 0.0, %v1657
      %v1659 = vpop.f32.mrf.mxu0
      %1660 = vmatprep.mubr.bf16.mxu0 0
      %1661 = vmatmul.mubr.bf16.gmra.mxu0 %v745
      %v1662 = vpop.f32.mrf.mxu0
      %v1663 = vadd.f32 0.0, %v1662
      %v1664 = vpop.f32.mrf.mxu0
      %v1665 = vpop.f32.mrf.mxu0
      %v1666 = vadd.f32 0.0, %v1665
      %v1667 = vpop.f32.mrf.mxu0
      %1668 = vmatprep.mubr.bf16.mxu0 0
      %1669 = vmatmul.mubr.bf16.gmra.mxu0 %v748
      %v1670 = vpop.f32.mrf.mxu0
      %v1671 = vadd.f32 0.0, %v1670
      %v1672 = vpop.f32.mrf.mxu0
      %v1673 = vpop.f32.mrf.mxu0
      %v1674 = vadd.f32 0.0, %v1673
      %v1675 = vpop.f32.mrf.mxu0
      %1676 = vmatprep.mubr.bf16.mxu0 0
      %1677 = vmatmul.mubr.bf16.gmra.mxu0 %v751
      %v1678 = vpop.f32.mrf.mxu0
      %v1679 = vadd.f32 0.0, %v1678
      %v1680 = vpop.f32.mrf.mxu0
      %v1681 = vpop.f32.mrf.mxu0
      %v1682 = vadd.f32 0.0, %v1681
      %v1683 = vpop.f32.mrf.mxu0
      %1684 = vmatprep.mubr.bf16.mxu0 0
      %1685 = vmatmul.mubr.bf16.gmra.mxu0 %v754
      %v1686 = vpop.f32.mrf.mxu0
      %v1687 = vadd.f32 0.0, %v1686
      %v1688 = vpop.f32.mrf.mxu0
      %v1689 = vpop.f32.mrf.mxu0
      %v1690 = vadd.f32 0.0, %v1689
      %v1691 = vpop.f32.mrf.mxu0
      %1692 = vmatprep.mubr.bf16.mxu0 0
      %1693 = vmatmul.mubr.bf16.gmra.mxu0 %v757
      %v1694 = vpop.f32.mrf.mxu0
      %v1695 = vadd.f32 0.0, %v1694
      %v1696 = vpop.f32.mrf.mxu0
      %v1697 = vpop.f32.mrf.mxu0
      %v1698 = vadd.f32 0.0, %v1697
      %v1699 = vpop.f32.mrf.mxu0
      %1700 = vmatprep.mubr.bf16.mxu0 0
      %1701 = vmatmul.mubr.bf16.gmra.mxu0 %v760
      %v1702 = vpop.f32.mrf.mxu0
      %v1703 = vadd.f32 0.0, %v1702
      %v1704 = vpop.f32.mrf.mxu0
      %v1705 = vpop.f32.mrf.mxu0
      %v1706 = vadd.f32 0.0, %v1705
      %v1707 = vpop.f32.mrf.mxu0
      %1708 = vmatprep.mubr.bf16.mxu0 0
      %1709 = vmatmul.mubr.bf16.gmra.mxu0 %v763
      %v1710 = vpop.f32.mrf.mxu0
      %v1711 = vadd.f32 0.0, %v1710
      %v1712 = vpop.f32.mrf.mxu0
      %v1713 = vpop.f32.mrf.mxu0
      %v1714 = vadd.f32 0.0, %v1713
      %v1715 = vpop.f32.mrf.mxu0
      %1716 = vmatprep.mubr.bf16.mxu0 0
      %1717 = vmatmul.mubr.bf16.gmra.mxu0 %v766
      %v1718 = vpop.f32.mrf.mxu0
      %v1719 = vadd.f32 0.0, %v1718
      %v1720 = vpop.f32.mrf.mxu0
      %v1721 = vpop.f32.mrf.mxu0
      %v1722 = vadd.f32 0.0, %v1721
      %v1723 = vpop.f32.mrf.mxu0
      %1724 = vmatprep.mubr.bf16.mxu0 0
      %1725 = vmatmul.mubr.bf16.gmra.mxu0 %v769
      %v1726 = vpop.f32.mrf.mxu0
      %v1727 = vadd.f32 0.0, %v1726
      %v1728 = vpop.f32.mrf.mxu0
      %v1729 = vpop.f32.mrf.mxu0
      %v1730 = vadd.f32 0.0, %v1729
      %v1731 = vpop.f32.mrf.mxu0
      %1732 = vmatprep.mubr.bf16.mxu0 0
      %1733 = vmatmul.mubr.bf16.gmra.mxu0 %v1575
      %v1734 = vpop.f32.mrf.mxu0
      %v1735 = vadd.f32 0.0, %v1734
      %v1736 = vpop.f32.mrf.mxu0
      %v1737 = vpop.f32.mrf.mxu0
      %v1738 = vadd.f32 0.0, %v1737
      %v1739 = vpop.f32.mrf.mxu0
      %1740 = vdwg.mxu0
      %v1741 = vadd.f32 %v1542, %v1615
      %v1742 = vadd.f32 %v1543, %v1618
      %v1743 = vadd.f32 %v1544, %v1623
      %v1744 = vadd.f32 %v1545, %v1626
      %v1745 = vadd.f32 %v1546, %v1631
      %v1746 = vadd.f32 %v1547, %v1634
      %v1747 = vadd.f32 %v1548, %v1639
      %v1748 = vadd.f32 %v1549, %v1642
      %v1749 = vadd.f32 %v1550, %v1647
      %v1750 = vadd.f32 %v1551, %v1650
      %v1751 = vadd.f32 %v1552, %v1655
      %v1752 = vadd.f32 %v1553, %v1658
      %v1753 = vadd.f32 %v1554, %v1663
      %v1754 = vadd.f32 %v1555, %v1666
      %v1755 = vadd.f32 %v1556, %v1671
      %v1756 = vadd.f32 %v1557, %v1674
      %v1757 = vadd.f32 %v1558, %v1679
      %v1758 = vadd.f32 %v1559, %v1682
      %v1759 = vadd.f32 %v1560, %v1687
      %v1760 = vadd.f32 %v1561, %v1690
      %v1761 = vadd.f32 %v1562, %v1695
      %v1762 = vadd.f32 %v1563, %v1698
      %v1763 = vadd.f32 %v1564, %v1703
      %v1764 = vadd.f32 %v1565, %v1706
      %v1765 = vadd.f32 %v1566, %v1711
      %v1766 = vadd.f32 %v1567, %v1714
      %v1767 = vadd.f32 %v1568, %v1719
      %v1768 = vadd.f32 %v1569, %v1722
      %v1769 = vadd.f32 %v1570, %v1727
      %v1770 = vadd.f32 %v1571, %v1730
      %v1771 = vadd.f32 %v1572, %v1735
      %v1772 = vadd.f32 %v1573, %v1738
      %v1774 = vsel %vm205, %v719, 0
      %v1777 = vsel %vm771, %v321, 0
      %1779 = vmatprep.subr.bf16.mxu0 0
      %1780 = vmatpush1.bf16.msra.mxu0 0
      %1781 = vmatprep.subr.bf16.mxu0 0
      %1782 = vmatpush1.bf16.msra.mxu0 0
      %1783 = vmatprep.subr.bf16.mxu0 0
      %1784 = vmatpush1.bf16.msra.mxu0 0
      %1785 = vmatprep.subr.bf16.mxu0 0
      %1786 = vmatpush1.bf16.msra.mxu0 0
      %1787 = vmatprep.subr.bf16.mxu0 0
      %1788 = vmatpush1.bf16.msra.mxu0 0
      %1789 = vmatprep.subr.bf16.mxu0 0
      %1790 = vmatpush1.bf16.msra.mxu0 0
      %1791 = vmatprep.subr.bf16.mxu0 0
      %1792 = vmatpush1.bf16.msra.mxu0 0
      %1793 = vmatprep.subr.bf16.mxu0 0
      %1794 = vmatpush1.bf16.msra.mxu0 %v1777
      %1795 = vmatprep.subr.bf16.mxu0 0
      %1796 = vmatpush2.bf16.msra.mxu0 0
      %1797 = vmatprep.subr.bf16.mxu0 0
      %1798 = vmatpush2.bf16.msra.mxu0 0
      %1799 = vmatprep.subr.bf16.mxu0 0
      %1800 = vmatpush2.bf16.msra.mxu0 0
      %1801 = vmatprep.subr.bf16.mxu0 0
      %1802 = vmatpush2.bf16.msra.mxu0 0
      %1803 = vmatprep.subr.bf16.mxu0 0
      %1804 = vmatpush2.bf16.msra.mxu0 0
      %1805 = vmatprep.subr.bf16.mxu0 0
      %1806 = vmatpush2.bf16.msra.mxu0 0
      %1807 = vmatprep.subr.bf16.mxu0 0
      %1808 = vmatpush2.bf16.msra.mxu0 0
      %1809 = vmatprep.subr.bf16.mxu0 0
      %1810 = vmatpush2.bf16.msra.mxu0 0
      %1811 = vmatprep.mubr.bf16.mxu0 0
      %1812 = vmatmul.mubr.bf16.gmra.mxu0 %v1136
      %v1813 = vpop.f32.mrf.mxu0
      %v1814 = vadd.f32 0.0, %v1813
      %v1815 = vpop.f32.mrf.mxu0
      %v1816 = vpop.f32.mrf.mxu0
      %v1817 = vadd.f32 0.0, %v1816
      %v1818 = vpop.f32.mrf.mxu0
      %1819 = vmatprep.mubr.bf16.mxu0 0
      %1820 = vmatmul.mubr.bf16.gmra.mxu0 %v1139
      %v1821 = vpop.f32.mrf.mxu0
      %v1822 = vadd.f32 0.0, %v1821
      %v1823 = vpop.f32.mrf.mxu0
      %v1824 = vpop.f32.mrf.mxu0
      %v1825 = vadd.f32 0.0, %v1824
      %v1826 = vpop.f32.mrf.mxu0
      %1827 = vmatprep.mubr.bf16.mxu0 0
      %1828 = vmatmul.mubr.bf16.gmra.mxu0 %v1142
      %v1829 = vpop.f32.mrf.mxu0
      %v1830 = vadd.f32 0.0, %v1829
      %v1831 = vpop.f32.mrf.mxu0
      %v1832 = vpop.f32.mrf.mxu0
      %v1833 = vadd.f32 0.0, %v1832
      %v1834 = vpop.f32.mrf.mxu0
      %1835 = vmatprep.mubr.bf16.mxu0 0
      %1836 = vmatmul.mubr.bf16.gmra.mxu0 %v1145
      %v1837 = vpop.f32.mrf.mxu0
      %v1838 = vadd.f32 0.0, %v1837
      %v1839 = vpop.f32.mrf.mxu0
      %v1840 = vpop.f32.mrf.mxu0
      %v1841 = vadd.f32 0.0, %v1840
      %v1842 = vpop.f32.mrf.mxu0
      %1843 = vmatprep.mubr.bf16.mxu0 0
      %1844 = vmatmul.mubr.bf16.gmra.mxu0 %v1148
      %v1845 = vpop.f32.mrf.mxu0
      %v1846 = vadd.f32 0.0, %v1845
      %v1847 = vpop.f32.mrf.mxu0
      %v1848 = vpop.f32.mrf.mxu0
      %v1849 = vadd.f32 0.0, %v1848
      %v1850 = vpop.f32.mrf.mxu0
      %1851 = vmatprep.mubr.bf16.mxu0 0
      %1852 = vmatmul.mubr.bf16.gmra.mxu0 %v1151
      %v1853 = vpop.f32.mrf.mxu0
      %v1854 = vadd.f32 0.0, %v1853
      %v1855 = vpop.f32.mrf.mxu0
      %v1856 = vpop.f32.mrf.mxu0
      %v1857 = vadd.f32 0.0, %v1856
      %v1858 = vpop.f32.mrf.mxu0
      %1859 = vmatprep.mubr.bf16.mxu0 0
      %1860 = vmatmul.mubr.bf16.gmra.mxu0 %v1154
      %v1861 = vpop.f32.mrf.mxu0
      %v1862 = vadd.f32 0.0, %v1861
      %v1863 = vpop.f32.mrf.mxu0
      %v1864 = vpop.f32.mrf.mxu0
      %v1865 = vadd.f32 0.0, %v1864
      %v1866 = vpop.f32.mrf.mxu0
      %1867 = vmatprep.mubr.bf16.mxu0 0
      %1868 = vmatmul.mubr.bf16.gmra.mxu0 %v1157
      %v1869 = vpop.f32.mrf.mxu0
      %v1870 = vadd.f32 0.0, %v1869
      %v1871 = vpop.f32.mrf.mxu0
      %v1872 = vpop.f32.mrf.mxu0
      %v1873 = vadd.f32 0.0, %v1872
      %v1874 = vpop.f32.mrf.mxu0
      %1875 = vmatprep.mubr.bf16.mxu0 0
      %1876 = vmatmul.mubr.bf16.gmra.mxu0 %v1160
      %v1877 = vpop.f32.mrf.mxu0
      %v1878 = vadd.f32 0.0, %v1877
      %v1879 = vpop.f32.mrf.mxu0
      %v1880 = vpop.f32.mrf.mxu0
      %v1881 = vadd.f32 0.0, %v1880
      %v1882 = vpop.f32.mrf.mxu0
      %1883 = vmatprep.mubr.bf16.mxu0 0
      %1884 = vmatmul.mubr.bf16.gmra.mxu0 %v1163
      %v1885 = vpop.f32.mrf.mxu0
      %v1886 = vadd.f32 0.0, %v1885
      %v1887 = vpop.f32.mrf.mxu0
      %v1888 = vpop.f32.mrf.mxu0
      %v1889 = vadd.f32 0.0, %v1888
      %v1890 = vpop.f32.mrf.mxu0
      %1891 = vmatprep.mubr.bf16.mxu0 0
      %1892 = vmatmul.mubr.bf16.gmra.mxu0 %v1166
      %v1893 = vpop.f32.mrf.mxu0
      %v1894 = vadd.f32 0.0, %v1893
      %v1895 = vpop.f32.mrf.mxu0
      %v1896 = vpop.f32.mrf.mxu0
      %v1897 = vadd.f32 0.0, %v1896
      %v1898 = vpop.f32.mrf.mxu0
      %1899 = vmatprep.mubr.bf16.mxu0 0
      %1900 = vmatmul.mubr.bf16.gmra.mxu0 %v1169
      %v1901 = vpop.f32.mrf.mxu0
      %v1902 = vadd.f32 0.0, %v1901
      %v1903 = vpop.f32.mrf.mxu0
      %v1904 = vpop.f32.mrf.mxu0
      %v1905 = vadd.f32 0.0, %v1904
      %v1906 = vpop.f32.mrf.mxu0
      %1907 = vmatprep.mubr.bf16.mxu0 0
      %1908 = vmatmul.mubr.bf16.gmra.mxu0 %v1172
      %v1909 = vpop.f32.mrf.mxu0
      %v1910 = vadd.f32 0.0, %v1909
      %v1911 = vpop.f32.mrf.mxu0
      %v1912 = vpop.f32.mrf.mxu0
      %v1913 = vadd.f32 0.0, %v1912
      %v1914 = vpop.f32.mrf.mxu0
      %1915 = vmatprep.mubr.bf16.mxu0 0
      %1916 = vmatmul.mubr.bf16.gmra.mxu0 %v1175
      %v1917 = vpop.f32.mrf.mxu0
      %v1918 = vadd.f32 0.0, %v1917
      %v1919 = vpop.f32.mrf.mxu0
      %v1920 = vpop.f32.mrf.mxu0
      %v1921 = vadd.f32 0.0, %v1920
      %v1922 = vpop.f32.mrf.mxu0
      %1923 = vmatprep.mubr.bf16.mxu0 0
      %1924 = vmatmul.mubr.bf16.gmra.mxu0 %v1178
      %v1925 = vpop.f32.mrf.mxu0
      %v1926 = vadd.f32 0.0, %v1925
      %v1927 = vpop.f32.mrf.mxu0
      %v1928 = vpop.f32.mrf.mxu0
      %v1929 = vadd.f32 0.0, %v1928
      %v1930 = vpop.f32.mrf.mxu0
      %1931 = vmatprep.mubr.bf16.mxu0 0
      %1932 = vmatmul.mubr.bf16.gmra.mxu0 %v1774
      %v1933 = vpop.f32.mrf.mxu0
      %v1934 = vadd.f32 0.0, %v1933
      %v1935 = vpop.f32.mrf.mxu0
      %v1936 = vpop.f32.mrf.mxu0
      %v1937 = vadd.f32 0.0, %v1936
      %v1938 = vpop.f32.mrf.mxu0
      %1939 = vdwg.mxu0
      %v1940 = vadd.f32 %v1741, %v1814
      %v1941 = vadd.f32 %v1742, %v1817
      %v1942 = vadd.f32 %v1743, %v1822
      %v1943 = vadd.f32 %v1744, %v1825
      %v1944 = vadd.f32 %v1745, %v1830
      %v1945 = vadd.f32 %v1746, %v1833
      %v1946 = vadd.f32 %v1747, %v1838
      %v1947 = vadd.f32 %v1748, %v1841
      %v1948 = vadd.f32 %v1749, %v1846
      %v1949 = vadd.f32 %v1750, %v1849
      %v1950 = vadd.f32 %v1751, %v1854
      %v1951 = vadd.f32 %v1752, %v1857
      %v1952 = vadd.f32 %v1753, %v1862
      %v1953 = vadd.f32 %v1754, %v1865
      %v1954 = vadd.f32 %v1755, %v1870
      %v1955 = vadd.f32 %v1756, %v1873
      %v1956 = vadd.f32 %v1757, %v1878
      %v1957 = vadd.f32 %v1758, %v1881
      %v1958 = vadd.f32 %v1759, %v1886
      %v1959 = vadd.f32 %v1760, %v1889
      %v1960 = vadd.f32 %v1761, %v1894
      %v1961 = vadd.f32 %v1762, %v1897
      %v1962 = vadd.f32 %v1763, %v1902
      %v1963 = vadd.f32 %v1764, %v1905
      %v1964 = vadd.f32 %v1765, %v1910
      %v1965 = vadd.f32 %v1766, %v1913
      %v1966 = vadd.f32 %v1767, %v1918
      %v1967 = vadd.f32 %v1768, %v1921
      %v1968 = vadd.f32 %v1769, %v1926
      %v1969 = vadd.f32 %v1770, %v1929
      %v1970 = vadd.f32 %v1771, %v1934
      %v1971 = vadd.f32 %v1772, %v1937
      %v1972 = vsel %vm205, %v413, 0
      %v1975 = vsel %vm771, %v322, 0
      %1977 = vmatprep.subr.bf16.mxu0 0
      %1978 = vmatpush1.bf16.msra.mxu0 0
      %1979 = vmatprep.subr.bf16.mxu0 0
      %1980 = vmatpush1.bf16.msra.mxu0 0
      %1981 = vmatprep.subr.bf16.mxu0 0
      %1982 = vmatpush1.bf16.msra.mxu0 0
      %1983 = vmatprep.subr.bf16.mxu0 0
      %1984 = vmatpush1.bf16.msra.mxu0 0
      %1985 = vmatprep.subr.bf16.mxu0 0
      %1986 = vmatpush1.bf16.msra.mxu0 0
      %1987 = vmatprep.subr.bf16.mxu0 0
      %1988 = vmatpush1.bf16.msra.mxu0 0
      %1989 = vmatprep.subr.bf16.mxu0 0
      %1990 = vmatpush1.bf16.msra.mxu0 0
      %1991 = vmatprep.subr.bf16.mxu0 0
      %1992 = vmatpush1.bf16.msra.mxu0 %v1975
      %1993 = vmatprep.subr.bf16.mxu0 0
      %1994 = vmatpush2.bf16.msra.mxu0 0
      %1995 = vmatprep.subr.bf16.mxu0 0
      %1996 = vmatpush2.bf16.msra.mxu0 0
      %1997 = vmatprep.subr.bf16.mxu0 0
      %1998 = vmatpush2.bf16.msra.mxu0 0
      %1999 = vmatprep.subr.bf16.mxu0 0
      %2000 = vmatpush2.bf16.msra.mxu0 0
      %2001 = vmatprep.subr.bf16.mxu0 0
      %2002 = vmatpush2.bf16.msra.mxu0 0
      %2003 = vmatprep.subr.bf16.mxu0 0
      %2004 = vmatpush2.bf16.msra.mxu0 0
      %2005 = vmatprep.subr.bf16.mxu0 0
      %2006 = vmatpush2.bf16.msra.mxu0 0
      %2007 = vmatprep.subr.bf16.mxu0 0
      %2008 = vmatpush2.bf16.msra.mxu0 0
      %2009 = vmatprep.mubr.bf16.mxu0 0
      %2010 = vmatmul.mubr.bf16.gmra.mxu0 %v940
      %v2011 = vpop.f32.mrf.mxu0
      %v2012 = vadd.f32 0.0, %v2011
      %v2013 = vpop.f32.mrf.mxu0
      %v2014 = vpop.f32.mrf.mxu0
      %v2015 = vadd.f32 0.0, %v2014
      %v2016 = vpop.f32.mrf.mxu0
      %2017 = vmatprep.mubr.bf16.mxu0 0
      %2018 = vmatmul.mubr.bf16.gmra.mxu0 %v942
      %v2019 = vpop.f32.mrf.mxu0
      %v2020 = vadd.f32 0.0, %v2019
      %v2021 = vpop.f32.mrf.mxu0
      %v2022 = vpop.f32.mrf.mxu0
      %v2023 = vadd.f32 0.0, %v2022
      %v2024 = vpop.f32.mrf.mxu0
      %2025 = vmatprep.mubr.bf16.mxu0 0
      %2026 = vmatmul.mubr.bf16.gmra.mxu0 %v944
      %v2027 = vpop.f32.mrf.mxu0
      %v2028 = vadd.f32 0.0, %v2027
      %v2029 = vpop.f32.mrf.mxu0
      %v2030 = vpop.f32.mrf.mxu0
      %v2031 = vadd.f32 0.0, %v2030
      %v2032 = vpop.f32.mrf.mxu0
      %2033 = vmatprep.mubr.bf16.mxu0 0
      %2034 = vmatmul.mubr.bf16.gmra.mxu0 %v946
      %v2035 = vpop.f32.mrf.mxu0
      %v2036 = vadd.f32 0.0, %v2035
      %v2037 = vpop.f32.mrf.mxu0
      %v2038 = vpop.f32.mrf.mxu0
      %v2039 = vadd.f32 0.0, %v2038
      %v2040 = vpop.f32.mrf.mxu0
      %2041 = vmatprep.mubr.bf16.mxu0 0
      %2042 = vmatmul.mubr.bf16.gmra.mxu0 %v948
      %v2043 = vpop.f32.mrf.mxu0
      %v2044 = vadd.f32 0.0, %v2043
      %v2045 = vpop.f32.mrf.mxu0
      %v2046 = vpop.f32.mrf.mxu0
      %v2047 = vadd.f32 0.0, %v2046
      %v2048 = vpop.f32.mrf.mxu0
      %2049 = vmatprep.mubr.bf16.mxu0 0
      %2050 = vmatmul.mubr.bf16.gmra.mxu0 %v950
      %v2051 = vpop.f32.mrf.mxu0
      %v2052 = vadd.f32 0.0, %v2051
      %v2053 = vpop.f32.mrf.mxu0
      %v2054 = vpop.f32.mrf.mxu0
      %v2055 = vadd.f32 0.0, %v2054
      %v2056 = vpop.f32.mrf.mxu0
      %2057 = vmatprep.mubr.bf16.mxu0 0
      %2058 = vmatmul.mubr.bf16.gmra.mxu0 %v952
      %v2059 = vpop.f32.mrf.mxu0
      %v2060 = vadd.f32 0.0, %v2059
      %v2061 = vpop.f32.mrf.mxu0
      %v2062 = vpop.f32.mrf.mxu0
      %v2063 = vadd.f32 0.0, %v2062
      %v2064 = vpop.f32.mrf.mxu0
      %2065 = vmatprep.mubr.bf16.mxu0 0
      %2066 = vmatmul.mubr.bf16.gmra.mxu0 %v954
      %v2067 = vpop.f32.mrf.mxu0
      %v2068 = vadd.f32 0.0, %v2067
      %v2069 = vpop.f32.mrf.mxu0
      %v2070 = vpop.f32.mrf.mxu0
      %v2071 = vadd.f32 0.0, %v2070
      %v2072 = vpop.f32.mrf.mxu0
      %2073 = vmatprep.mubr.bf16.mxu0 0
      %2074 = vmatmul.mubr.bf16.gmra.mxu0 %v956
      %v2075 = vpop.f32.mrf.mxu0
      %v2076 = vadd.f32 0.0, %v2075
      %v2077 = vpop.f32.mrf.mxu0
      %v2078 = vpop.f32.mrf.mxu0
      %v2079 = vadd.f32 0.0, %v2078
      %v2080 = vpop.f32.mrf.mxu0
      %2081 = vmatprep.mubr.bf16.mxu0 0
      %2082 = vmatmul.mubr.bf16.gmra.mxu0 %v958
      %v2083 = vpop.f32.mrf.mxu0
      %v2084 = vadd.f32 0.0, %v2083
      %v2085 = vpop.f32.mrf.mxu0
      %v2086 = vpop.f32.mrf.mxu0
      %v2087 = vadd.f32 0.0, %v2086
      %v2088 = vpop.f32.mrf.mxu0
      %2089 = vmatprep.mubr.bf16.mxu0 0
      %2090 = vmatmul.mubr.bf16.gmra.mxu0 %v960
      %v2091 = vpop.f32.mrf.mxu0
      %v2092 = vadd.f32 0.0, %v2091
      %v2093 = vpop.f32.mrf.mxu0
      %v2094 = vpop.f32.mrf.mxu0
      %v2095 = vadd.f32 0.0, %v2094
      %v2096 = vpop.f32.mrf.mxu0
      %2097 = vmatprep.mubr.bf16.mxu0 0
      %2098 = vmatmul.mubr.bf16.gmra.mxu0 %v962
      %v2099 = vpop.f32.mrf.mxu0
      %v2100 = vadd.f32 0.0, %v2099
      %v2101 = vpop.f32.mrf.mxu0
      %v2102 = vpop.f32.mrf.mxu0
      %v2103 = vadd.f32 0.0, %v2102
      %v2104 = vpop.f32.mrf.mxu0
      %2105 = vmatprep.mubr.bf16.mxu0 0
      %2106 = vmatmul.mubr.bf16.gmra.mxu0 %v964
      %v2107 = vpop.f32.mrf.mxu0
      %v2108 = vadd.f32 0.0, %v2107
      %v2109 = vpop.f32.mrf.mxu0
      %v2110 = vpop.f32.mrf.mxu0
      %v2111 = vadd.f32 0.0, %v2110
      %v2112 = vpop.f32.mrf.mxu0
      %2113 = vmatprep.mubr.bf16.mxu0 0
      %2114 = vmatmul.mubr.bf16.gmra.mxu0 %v966
      %v2115 = vpop.f32.mrf.mxu0
      %v2116 = vadd.f32 0.0, %v2115
      %v2117 = vpop.f32.mrf.mxu0
      %v2118 = vpop.f32.mrf.mxu0
      %v2119 = vadd.f32 0.0, %v2118
      %v2120 = vpop.f32.mrf.mxu0
      %2121 = vmatprep.mubr.bf16.mxu0 0
      %2122 = vmatmul.mubr.bf16.gmra.mxu0 %v1376
      %v2123 = vpop.f32.mrf.mxu0
      %v2124 = vadd.f32 0.0, %v2123
      %v2125 = vpop.f32.mrf.mxu0
      %v2126 = vpop.f32.mrf.mxu0
      %v2127 = vadd.f32 0.0, %v2126
      %v2128 = vpop.f32.mrf.mxu0
      %2129 = vmatprep.mubr.bf16.mxu0 0
      %2130 = vmatmul.mubr.bf16.gmra.mxu0 %v1972
      %v2131 = vpop.f32.mrf.mxu0
      %v2132 = vadd.f32 0.0, %v2131
      %v2133 = vpop.f32.mrf.mxu0
      %v2134 = vpop.f32.mrf.mxu0
      %v2135 = vadd.f32 0.0, %v2134
      %v2136 = vpop.f32.mrf.mxu0
      %2137 = vdwg.mxu0
      %v2138 = vadd.f32 %v1940, %v2012
      %v2139 = vadd.f32 %v1941, %v2015
      %v2140 = vadd.f32 %v1942, %v2020
      %v2141 = vadd.f32 %v1943, %v2023
      %v2142 = vadd.f32 %v1944, %v2028
      %v2143 = vadd.f32 %v1945, %v2031
      %v2144 = vadd.f32 %v1946, %v2036
      %v2145 = vadd.f32 %v1947, %v2039
      %v2146 = vadd.f32 %v1948, %v2044
      %v2147 = vadd.f32 %v1949, %v2047
      %v2148 = vadd.f32 %v1950, %v2052
      %v2149 = vadd.f32 %v1951, %v2055
      %v2150 = vadd.f32 %v1952, %v2060
      %v2151 = vadd.f32 %v1953, %v2063
      %v2152 = vadd.f32 %v1954, %v2068
      %v2153 = vadd.f32 %v1955, %v2071
      %v2154 = vadd.f32 %v1956, %v2076
      %v2155 = vadd.f32 %v1957, %v2079
      %v2156 = vadd.f32 %v1958, %v2084
      %v2157 = vadd.f32 %v1959, %v2087
      %v2158 = vadd.f32 %v1960, %v2092
      %v2159 = vadd.f32 %v1961, %v2095
      %v2160 = vadd.f32 %v1962, %v2100
      %v2161 = vadd.f32 %v1963, %v2103
      %v2162 = vadd.f32 %v1964, %v2108
      %v2163 = vadd.f32 %v1965, %v2111
      %v2164 = vadd.f32 %v1966, %v2116
      %v2165 = vadd.f32 %v1967, %v2119
      %v2166 = vadd.f32 %v1968, %v2124
      %v2167 = vadd.f32 %v1969, %v2127
      %v2168 = vadd.f32 %v1970, %v2132
      %v2169 = vadd.f32 %v1971, %v2135
      %v2171 = vsel %vm205, %v631, 0
      %v2174 = vsel %vm771, %v323, 0
      %2176 = vmatprep.subr.bf16.mxu0 0
      %2177 = vmatpush1.bf16.msra.mxu0 0
      %2178 = vmatprep.subr.bf16.mxu0 0
      %2179 = vmatpush1.bf16.msra.mxu0 0
      %2180 = vmatprep.subr.bf16.mxu0 0
      %2181 = vmatpush1.bf16.msra.mxu0 0
      %2182 = vmatprep.subr.bf16.mxu0 0
      %2183 = vmatpush1.bf16.msra.mxu0 0
      %2184 = vmatprep.subr.bf16.mxu0 0
      %2185 = vmatpush1.bf16.msra.mxu0 0
      %2186 = vmatprep.subr.bf16.mxu0 0
      %2187 = vmatpush1.bf16.msra.mxu0 0
      %2188 = vmatprep.subr.bf16.mxu0 0
      %2189 = vmatpush1.bf16.msra.mxu0 0
      %2190 = vmatprep.subr.bf16.mxu0 0
      %2191 = vmatpush1.bf16.msra.mxu0 %v2174
      %2192 = vmatprep.subr.bf16.mxu0 0
      %2193 = vmatpush2.bf16.msra.mxu0 0
      %2194 = vmatprep.subr.bf16.mxu0 0
      %2195 = vmatpush2.bf16.msra.mxu0 0
      %2196 = vmatprep.subr.bf16.mxu0 0
      %2197 = vmatpush2.bf16.msra.mxu0 0
      %2198 = vmatprep.subr.bf16.mxu0 0
      %2199 = vmatpush2.bf16.msra.mxu0 0
      %2200 = vmatprep.subr.bf16.mxu0 0
      %2201 = vmatpush2.bf16.msra.mxu0 0
      %2202 = vmatprep.subr.bf16.mxu0 0
      %2203 = vmatpush2.bf16.msra.mxu0 0
      %2204 = vmatprep.subr.bf16.mxu0 0
      %2205 = vmatpush2.bf16.msra.mxu0 0
      %2206 = vmatprep.subr.bf16.mxu0 0
      %2207 = vmatpush2.bf16.msra.mxu0 0
      %2208 = vmatprep.mubr.bf16.mxu0 0
      %2209 = vmatmul.mubr.bf16.gmra.mxu0 %v730
      %v2210 = vpop.f32.mrf.mxu0
      %v2211 = vadd.f32 0.0, %v2210
      %v2212 = vpop.f32.mrf.mxu0
      %v2213 = vpop.f32.mrf.mxu0
      %v2214 = vadd.f32 0.0, %v2213
      %v2215 = vpop.f32.mrf.mxu0
      %2216 = vmatprep.mubr.bf16.mxu0 0
      %2217 = vmatmul.mubr.bf16.gmra.mxu0 %v733
      %v2218 = vpop.f32.mrf.mxu0
      %v2219 = vadd.f32 0.0, %v2218
      %v2220 = vpop.f32.mrf.mxu0
      %v2221 = vpop.f32.mrf.mxu0
      %v2222 = vadd.f32 0.0, %v2221
      %v2223 = vpop.f32.mrf.mxu0
      %2224 = vmatprep.mubr.bf16.mxu0 0
      %2225 = vmatmul.mubr.bf16.gmra.mxu0 %v736
      %v2226 = vpop.f32.mrf.mxu0
      %v2227 = vadd.f32 0.0, %v2226
      %v2228 = vpop.f32.mrf.mxu0
      %v2229 = vpop.f32.mrf.mxu0
      %v2230 = vadd.f32 0.0, %v2229
      %v2231 = vpop.f32.mrf.mxu0
      %2232 = vmatprep.mubr.bf16.mxu0 0
      %2233 = vmatmul.mubr.bf16.gmra.mxu0 %v739
      %v2234 = vpop.f32.mrf.mxu0
      %v2235 = vadd.f32 0.0, %v2234
      %v2236 = vpop.f32.mrf.mxu0
      %v2237 = vpop.f32.mrf.mxu0
      %v2238 = vadd.f32 0.0, %v2237
      %v2239 = vpop.f32.mrf.mxu0
      %2240 = vmatprep.mubr.bf16.mxu0 0
      %2241 = vmatmul.mubr.bf16.gmra.mxu0 %v742
      %v2242 = vpop.f32.mrf.mxu0
      %v2243 = vadd.f32 0.0, %v2242
      %v2244 = vpop.f32.mrf.mxu0
      %v2245 = vpop.f32.mrf.mxu0
      %v2246 = vadd.f32 0.0, %v2245
      %v2247 = vpop.f32.mrf.mxu0
      %2248 = vmatprep.mubr.bf16.mxu0 0
      %2249 = vmatmul.mubr.bf16.gmra.mxu0 %v745
      %v2250 = vpop.f32.mrf.mxu0
      %v2251 = vadd.f32 0.0, %v2250
      %v2252 = vpop.f32.mrf.mxu0
      %v2253 = vpop.f32.mrf.mxu0
      %v2254 = vadd.f32 0.0, %v2253
      %v2255 = vpop.f32.mrf.mxu0
      %2256 = vmatprep.mubr.bf16.mxu0 0
      %2257 = vmatmul.mubr.bf16.gmra.mxu0 %v748
      %v2258 = vpop.f32.mrf.mxu0
      %v2259 = vadd.f32 0.0, %v2258
      %v2260 = vpop.f32.mrf.mxu0
      %v2261 = vpop.f32.mrf.mxu0
      %v2262 = vadd.f32 0.0, %v2261
      %v2263 = vpop.f32.mrf.mxu0
      %2264 = vmatprep.mubr.bf16.mxu0 0
      %2265 = vmatmul.mubr.bf16.gmra.mxu0 %v751
      %v2266 = vpop.f32.mrf.mxu0
      %v2267 = vadd.f32 0.0, %v2266
      %v2268 = vpop.f32.mrf.mxu0
      %v2269 = vpop.f32.mrf.mxu0
      %v2270 = vadd.f32 0.0, %v2269
      %v2271 = vpop.f32.mrf.mxu0
      %2272 = vmatprep.mubr.bf16.mxu0 0
      %2273 = vmatmul.mubr.bf16.gmra.mxu0 %v754
      %v2274 = vpop.f32.mrf.mxu0
      %v2275 = vadd.f32 0.0, %v2274
      %v2276 = vpop.f32.mrf.mxu0
      %v2277 = vpop.f32.mrf.mxu0
      %v2278 = vadd.f32 0.0, %v2277
      %v2279 = vpop.f32.mrf.mxu0
      %2280 = vmatprep.mubr.bf16.mxu0 0
      %2281 = vmatmul.mubr.bf16.gmra.mxu0 %v757
      %v2282 = vpop.f32.mrf.mxu0
      %v2283 = vadd.f32 0.0, %v2282
      %v2284 = vpop.f32.mrf.mxu0
      %v2285 = vpop.f32.mrf.mxu0
      %v2286 = vadd.f32 0.0, %v2285
      %v2287 = vpop.f32.mrf.mxu0
      %2288 = vmatprep.mubr.bf16.mxu0 0
      %2289 = vmatmul.mubr.bf16.gmra.mxu0 %v760
      %v2290 = vpop.f32.mrf.mxu0
      %v2291 = vadd.f32 0.0, %v2290
      %v2292 = vpop.f32.mrf.mxu0
      %v2293 = vpop.f32.mrf.mxu0
      %v2294 = vadd.f32 0.0, %v2293
      %v2295 = vpop.f32.mrf.mxu0
      %2296 = vmatprep.mubr.bf16.mxu0 0
      %2297 = vmatmul.mubr.bf16.gmra.mxu0 %v763
      %v2298 = vpop.f32.mrf.mxu0
      %v2299 = vadd.f32 0.0, %v2298
      %v2300 = vpop.f32.mrf.mxu0
      %v2301 = vpop.f32.mrf.mxu0
      %v2302 = vadd.f32 0.0, %v2301
      %v2303 = vpop.f32.mrf.mxu0
      %2304 = vmatprep.mubr.bf16.mxu0 0
      %2305 = vmatmul.mubr.bf16.gmra.mxu0 %v766
      %v2306 = vpop.f32.mrf.mxu0
      %v2307 = vadd.f32 0.0, %v2306
      %v2308 = vpop.f32.mrf.mxu0
      %v2309 = vpop.f32.mrf.mxu0
      %v2310 = vadd.f32 0.0, %v2309
      %v2311 = vpop.f32.mrf.mxu0
      %2312 = vmatprep.mubr.bf16.mxu0 0
      %2313 = vmatmul.mubr.bf16.gmra.mxu0 %v769
      %v2314 = vpop.f32.mrf.mxu0
      %v2315 = vadd.f32 0.0, %v2314
      %v2316 = vpop.f32.mrf.mxu0
      %v2317 = vpop.f32.mrf.mxu0
      %v2318 = vadd.f32 0.0, %v2317
      %v2319 = vpop.f32.mrf.mxu0
      %2320 = vmatprep.mubr.bf16.mxu0 0
      %2321 = vmatmul.mubr.bf16.gmra.mxu0 %v1575
      %v2322 = vpop.f32.mrf.mxu0
      %v2323 = vadd.f32 0.0, %v2322
      %v2324 = vpop.f32.mrf.mxu0
      %v2325 = vpop.f32.mrf.mxu0
      %v2326 = vadd.f32 0.0, %v2325
      %v2327 = vpop.f32.mrf.mxu0
      %2328 = vmatprep.mubr.bf16.mxu0 0
      %2329 = vmatmul.mubr.bf16.gmra.mxu0 %v2171
      %v2330 = vpop.f32.mrf.mxu0
      %v2331 = vadd.f32 0.0, %v2330
      %v2332 = vpop.f32.mrf.mxu0
      %v2333 = vpop.f32.mrf.mxu0
      %v2334 = vadd.f32 0.0, %v2333
      %v2335 = vpop.f32.mrf.mxu0
      %2336 = vdwg.mxu0
      %v2337 = vadd.f32 %v2138, %v2211
      %v2338 = vadd.f32 %v2139, %v2214
      %v2339 = vadd.f32 %v2140, %v2219
      %v2340 = vadd.f32 %v2141, %v2222
      %v2341 = vadd.f32 %v2142, %v2227
      %v2342 = vadd.f32 %v2143, %v2230
      %v2343 = vadd.f32 %v2144, %v2235
      %v2344 = vadd.f32 %v2145, %v2238
      %v2345 = vadd.f32 %v2146, %v2243
      %v2346 = vadd.f32 %v2147, %v2246
      %v2347 = vadd.f32 %v2148, %v2251
      %v2348 = vadd.f32 %v2149, %v2254
      %v2349 = vadd.f32 %v2150, %v2259
      %v2350 = vadd.f32 %v2151, %v2262
      %v2351 = vadd.f32 %v2152, %v2267
      %v2352 = vadd.f32 %v2153, %v2270
      %v2353 = vadd.f32 %v2154, %v2275
      %v2354 = vadd.f32 %v2155, %v2278
      %v2355 = vadd.f32 %v2156, %v2283
      %v2356 = vadd.f32 %v2157, %v2286
      %v2357 = vadd.f32 %v2158, %v2291
      %v2358 = vadd.f32 %v2159, %v2294
      %v2359 = vadd.f32 %v2160, %v2299
      %v2360 = vadd.f32 %v2161, %v2302
      %v2361 = vadd.f32 %v2162, %v2307
      %v2362 = vadd.f32 %v2163, %v2310
      %v2363 = vadd.f32 %v2164, %v2315
      %v2364 = vadd.f32 %v2165, %v2318
      %v2365 = vadd.f32 %v2166, %v2323
      %v2366 = vadd.f32 %v2167, %v2326
      %v2367 = vadd.f32 %v2168, %v2331
      %v2368 = vadd.f32 %v2169, %v2334
      %v2370 = vsel %vm205, %v722, 0
      %v2373 = vsel %vm771, %v324, 0
      %2375 = vmatprep.subr.bf16.mxu0 0
      %2376 = vmatpush1.bf16.msra.mxu0 0
      %2377 = vmatprep.subr.bf16.mxu0 0
      %2378 = vmatpush1.bf16.msra.mxu0 0
      %2379 = vmatprep.subr.bf16.mxu0 0
      %2380 = vmatpush1.bf16.msra.mxu0 0
      %2381 = vmatprep.subr.bf16.mxu0 0
      %2382 = vmatpush1.bf16.msra.mxu0 0
      %2383 = vmatprep.subr.bf16.mxu0 0
      %2384 = vmatpush1.bf16.msra.mxu0 0
      %2385 = vmatprep.subr.bf16.mxu0 0
      %2386 = vmatpush1.bf16.msra.mxu0 0
      %2387 = vmatprep.subr.bf16.mxu0 0
      %2388 = vmatpush1.bf16.msra.mxu0 0
      %2389 = vmatprep.subr.bf16.mxu0 0
      %2390 = vmatpush1.bf16.msra.mxu0 %v2373
      %2391 = vmatprep.subr.bf16.mxu0 0
      %2392 = vmatpush2.bf16.msra.mxu0 0
      %2393 = vmatprep.subr.bf16.mxu0 0
      %2394 = vmatpush2.bf16.msra.mxu0 0
      %2395 = vmatprep.subr.bf16.mxu0 0
      %2396 = vmatpush2.bf16.msra.mxu0 0
      %2397 = vmatprep.subr.bf16.mxu0 0
      %2398 = vmatpush2.bf16.msra.mxu0 0
      %2399 = vmatprep.subr.bf16.mxu0 0
      %2400 = vmatpush2.bf16.msra.mxu0 0
      %2401 = vmatprep.subr.bf16.mxu0 0
      %2402 = vmatpush2.bf16.msra.mxu0 0
      %2403 = vmatprep.subr.bf16.mxu0 0
      %2404 = vmatpush2.bf16.msra.mxu0 0
      %2405 = vmatprep.subr.bf16.mxu0 0
      %2406 = vmatpush2.bf16.msra.mxu0 0
      %2407 = vmatprep.mubr.bf16.mxu0 0
      %2408 = vmatmul.mubr.bf16.gmra.mxu0 %v1139
      %v2409 = vpop.f32.mrf.mxu0
      %v2410 = vadd.f32 0.0, %v2409
      %v2411 = vpop.f32.mrf.mxu0
      %v2412 = vpop.f32.mrf.mxu0
      %v2413 = vadd.f32 0.0, %v2412
      %v2414 = vpop.f32.mrf.mxu0
      %2415 = vmatprep.mubr.bf16.mxu0 0
      %2416 = vmatmul.mubr.bf16.gmra.mxu0 %v1142
      %v2417 = vpop.f32.mrf.mxu0
      %v2418 = vadd.f32 0.0, %v2417
      %v2419 = vpop.f32.mrf.mxu0
      %v2420 = vpop.f32.mrf.mxu0
      %v2421 = vadd.f32 0.0, %v2420
      %v2422 = vpop.f32.mrf.mxu0
      %2423 = vmatprep.mubr.bf16.mxu0 0
      %2424 = vmatmul.mubr.bf16.gmra.mxu0 %v1145
      %v2425 = vpop.f32.mrf.mxu0
      %v2426 = vadd.f32 0.0, %v2425
      %v2427 = vpop.f32.mrf.mxu0
      %v2428 = vpop.f32.mrf.mxu0
      %v2429 = vadd.f32 0.0, %v2428
      %v2430 = vpop.f32.mrf.mxu0
      %2431 = vmatprep.mubr.bf16.mxu0 0
      %2432 = vmatmul.mubr.bf16.gmra.mxu0 %v1148
      %v2433 = vpop.f32.mrf.mxu0
      %v2434 = vadd.f32 0.0, %v2433
      %v2435 = vpop.f32.mrf.mxu0
      %v2436 = vpop.f32.mrf.mxu0
      %v2437 = vadd.f32 0.0, %v2436
      %v2438 = vpop.f32.mrf.mxu0
      %2439 = vmatprep.mubr.bf16.mxu0 0
      %2440 = vmatmul.mubr.bf16.gmra.mxu0 %v1151
      %v2441 = vpop.f32.mrf.mxu0
      %v2442 = vadd.f32 0.0, %v2441
      %v2443 = vpop.f32.mrf.mxu0
      %v2444 = vpop.f32.mrf.mxu0
      %v2445 = vadd.f32 0.0, %v2444
      %v2446 = vpop.f32.mrf.mxu0
      %2447 = vmatprep.mubr.bf16.mxu0 0
      %2448 = vmatmul.mubr.bf16.gmra.mxu0 %v1154
      %v2449 = vpop.f32.mrf.mxu0
      %v2450 = vadd.f32 0.0, %v2449
      %v2451 = vpop.f32.mrf.mxu0
      %v2452 = vpop.f32.mrf.mxu0
      %v2453 = vadd.f32 0.0, %v2452
      %v2454 = vpop.f32.mrf.mxu0
      %2455 = vmatprep.mubr.bf16.mxu0 0
      %2456 = vmatmul.mubr.bf16.gmra.mxu0 %v1157
      %v2457 = vpop.f32.mrf.mxu0
      %v2458 = vadd.f32 0.0, %v2457
      %v2459 = vpop.f32.mrf.mxu0
      %v2460 = vpop.f32.mrf.mxu0
      %v2461 = vadd.f32 0.0, %v2460
      %v2462 = vpop.f32.mrf.mxu0
      %2463 = vmatprep.mubr.bf16.mxu0 0
      %2464 = vmatmul.mubr.bf16.gmra.mxu0 %v1160
      %v2465 = vpop.f32.mrf.mxu0
      %v2466 = vadd.f32 0.0, %v2465
      %v2467 = vpop.f32.mrf.mxu0
      %v2468 = vpop.f32.mrf.mxu0
      %v2469 = vadd.f32 0.0, %v2468
      %v2470 = vpop.f32.mrf.mxu0
      %2471 = vmatprep.mubr.bf16.mxu0 0
      %2472 = vmatmul.mubr.bf16.gmra.mxu0 %v1163
      %v2473 = vpop.f32.mrf.mxu0
      %v2474 = vadd.f32 0.0, %v2473
      %v2475 = vpop.f32.mrf.mxu0
      %v2476 = vpop.f32.mrf.mxu0
      %v2477 = vadd.f32 0.0, %v2476
      %v2478 = vpop.f32.mrf.mxu0
      %2479 = vmatprep.mubr.bf16.mxu0 0
      %2480 = vmatmul.mubr.bf16.gmra.mxu0 %v1166
      %v2481 = vpop.f32.mrf.mxu0
      %v2482 = vadd.f32 0.0, %v2481
      %v2483 = vpop.f32.mrf.mxu0
      %v2484 = vpop.f32.mrf.mxu0
      %v2485 = vadd.f32 0.0, %v2484
      %v2486 = vpop.f32.mrf.mxu0
      %2487 = vmatprep.mubr.bf16.mxu0 0
      %2488 = vmatmul.mubr.bf16.gmra.mxu0 %v1169
      %v2489 = vpop.f32.mrf.mxu0
      %v2490 = vadd.f32 0.0, %v2489
      %v2491 = vpop.f32.mrf.mxu0
      %v2492 = vpop.f32.mrf.mxu0
      %v2493 = vadd.f32 0.0, %v2492
      %v2494 = vpop.f32.mrf.mxu0
      %2495 = vmatprep.mubr.bf16.mxu0 0
      %2496 = vmatmul.mubr.bf16.gmra.mxu0 %v1172
      %v2497 = vpop.f32.mrf.mxu0
      %v2498 = vadd.f32 0.0, %v2497
      %v2499 = vpop.f32.mrf.mxu0
      %v2500 = vpop.f32.mrf.mxu0
      %v2501 = vadd.f32 0.0, %v2500
      %v2502 = vpop.f32.mrf.mxu0
      %2503 = vmatprep.mubr.bf16.mxu0 0
      %2504 = vmatmul.mubr.bf16.gmra.mxu0 %v1175
      %v2505 = vpop.f32.mrf.mxu0
      %v2506 = vadd.f32 0.0, %v2505
      %v2507 = vpop.f32.mrf.mxu0
      %v2508 = vpop.f32.mrf.mxu0
      %v2509 = vadd.f32 0.0, %v2508
      %v2510 = vpop.f32.mrf.mxu0
      %2511 = vmatprep.mubr.bf16.mxu0 0
      %2512 = vmatmul.mubr.bf16.gmra.mxu0 %v1178
      %v2513 = vpop.f32.mrf.mxu0
      %v2514 = vadd.f32 0.0, %v2513
      %v2515 = vpop.f32.mrf.mxu0
      %v2516 = vpop.f32.mrf.mxu0
      %v2517 = vadd.f32 0.0, %v2516
      %v2518 = vpop.f32.mrf.mxu0
      %2519 = vmatprep.mubr.bf16.mxu0 0
      %2520 = vmatmul.mubr.bf16.gmra.mxu0 %v1774
      %v2521 = vpop.f32.mrf.mxu0
      %v2522 = vadd.f32 0.0, %v2521
      %v2523 = vpop.f32.mrf.mxu0
      %v2524 = vpop.f32.mrf.mxu0
      %v2525 = vadd.f32 0.0, %v2524
      %v2526 = vpop.f32.mrf.mxu0
      %2527 = vmatprep.mubr.bf16.mxu0 0
      %2528 = vmatmul.mubr.bf16.gmra.mxu0 %v2370
      %v2529 = vpop.f32.mrf.mxu0
      %v2530 = vadd.f32 0.0, %v2529
      %v2531 = vpop.f32.mrf.mxu0
      %v2532 = vpop.f32.mrf.mxu0
      %v2533 = vadd.f32 0.0, %v2532
      %v2534 = vpop.f32.mrf.mxu0
      %2535 = vdwg.mxu0
      %v2536 = vadd.f32 %v2337, %v2410
      %v2537 = vadd.f32 %v2338, %v2413
      %v2538 = vadd.f32 %v2339, %v2418
      %v2539 = vadd.f32 %v2340, %v2421
      %v2540 = vadd.f32 %v2341, %v2426
      %v2541 = vadd.f32 %v2342, %v2429
      %v2542 = vadd.f32 %v2343, %v2434
      %v2543 = vadd.f32 %v2344, %v2437
      %v2544 = vadd.f32 %v2345, %v2442
      %v2545 = vadd.f32 %v2346, %v2445
      %v2546 = vadd.f32 %v2347, %v2450
      %v2547 = vadd.f32 %v2348, %v2453
      %v2548 = vadd.f32 %v2349, %v2458
      %v2549 = vadd.f32 %v2350, %v2461
      %v2550 = vadd.f32 %v2351, %v2466
      %v2551 = vadd.f32 %v2352, %v2469
      %v2552 = vadd.f32 %v2353, %v2474
      %v2553 = vadd.f32 %v2354, %v2477
      %v2554 = vadd.f32 %v2355, %v2482
      %v2555 = vadd.f32 %v2356, %v2485
      %v2556 = vadd.f32 %v2357, %v2490
      %v2557 = vadd.f32 %v2358, %v2493
      %v2558 = vadd.f32 %v2359, %v2498
      %v2559 = vadd.f32 %v2360, %v2501
      %v2560 = vadd.f32 %v2361, %v2506
      %v2561 = vadd.f32 %v2362, %v2509
      %v2562 = vadd.f32 %v2363, %v2514
      %v2563 = vadd.f32 %v2364, %v2517
      %v2564 = vadd.f32 %v2365, %v2522
      %v2565 = vadd.f32 %v2366, %v2525
      %v2566 = vadd.f32 %v2367, %v2530
      %v2567 = vadd.f32 %v2368, %v2533
      %v2568 = vsel %vm205, %v2536, 0.0
      %v2569 = vsel %vm205, %v2537, 0.0
      %v2570 = vadd.f32 %v2568, %v2569
      %v2571 = vsel %vm205, %v2538, 0.0
      %v2572 = vadd.f32 %v2570, %v2571
      %v2573 = vsel %vm205, %v2539, 0.0
      %v2574 = vadd.f32 %v2572, %v2573
      %v2575 = vsel %vm205, %v2540, 0.0
      %v2576 = vadd.f32 %v2574, %v2575
      %v2577 = vsel %vm205, %v2541, 0.0
      %v2578 = vadd.f32 %v2576, %v2577
      %v2579 = vsel %vm205, %v2542, 0.0
      %v2580 = vadd.f32 %v2578, %v2579
      %v2581 = vsel %vm205, %v2543, 0.0
      %v2582 = vadd.f32 %v2580, %v2581
      %v2583 = vsel %vm205, %v2544, 0.0
      %v2584 = vadd.f32 %v2582, %v2583
      %v2585 = vsel %vm205, %v2545, 0.0
      %v2586 = vadd.f32 %v2584, %v2585
      %v2587 = vsel %vm205, %v2546, 0.0
      %v2588 = vadd.f32 %v2586, %v2587
      %v2589 = vsel %vm205, %v2547, 0.0
      %v2590 = vadd.f32 %v2588, %v2589
      %v2591 = vsel %vm205, %v2548, 0.0
      %v2592 = vadd.f32 %v2590, %v2591
      %v2593 = vsel %vm205, %v2549, 0.0
      %v2594 = vadd.f32 %v2592, %v2593
      %v2595 = vsel %vm205, %v2550, 0.0
      %v2596 = vadd.f32 %v2594, %v2595
      %v2597 = vsel %vm205, %v2551, 0.0
      %v2598 = vadd.f32 %v2596, %v2597
      %v2599 = vsel %vm205, %v2552, 0.0
      %v2600 = vadd.f32 %v2598, %v2599
      %v2601 = vsel %vm205, %v2553, 0.0
      %v2602 = vadd.f32 %v2600, %v2601
      %v2603 = vsel %vm205, %v2554, 0.0
      %v2604 = vadd.f32 %v2602, %v2603
      %v2605 = vsel %vm205, %v2555, 0.0
      %v2606 = vadd.f32 %v2604, %v2605
      %v2607 = vsel %vm205, %v2556, 0.0
      %v2608 = vadd.f32 %v2606, %v2607
      %v2609 = vsel %vm205, %v2557, 0.0
      %v2610 = vadd.f32 %v2608, %v2609
      %v2611 = vsel %vm205, %v2558, 0.0
      %v2612 = vadd.f32 %v2610, %v2611
      %v2613 = vsel %vm205, %v2559, 0.0
      %v2614 = vadd.f32 %v2612, %v2613
      %v2615 = vsel %vm205, %v2560, 0.0
      %v2616 = vadd.f32 %v2614, %v2615
      %v2617 = vsel %vm205, %v2561, 0.0
      %v2618 = vadd.f32 %v2616, %v2617
      %v2619 = vsel %vm205, %v2562, 0.0
      %v2620 = vadd.f32 %v2618, %v2619
      %v2621 = vsel %vm205, %v2563, 0.0
      %v2622 = vadd.f32 %v2620, %v2621
      %v2623 = vsel %vm205, %v2564, 0.0
      %v2624 = vadd.f32 %v2622, %v2623
      %v2625 = vsel %vm205, %v2565, 0.0
      %v2626 = vadd.f32 %v2624, %v2625
      %v2627 = vsel %vm205, %v2566, 0.0
      %v2628 = vadd.f32 %v2626, %v2627
      %v2629 = vsel %vm205, %v2567, 0.0
      %v2630 = vadd.f32 %v2628, %v2629
      %v2631 = vrot.slane %v2630, 4
      %v2632 = vadd.f32 %v2630, %v2631
      %v2633 = vrot.slane %v2632, 2
      %v2634 = vadd.f32 %v2632, %v2633
      %v2635 = vrot.slane %v2634, 1
      %v2636 = vadd.f32 %v2634, %v2635
      %v2637 = vmul.f32 %v2636, 0.00390625
      %v2638 = vmul.f32 %v2536, %v2536
      %v2639 = vmul.f32 %v2537, %v2537
      %v2640 = vmul.f32 %v2538, %v2538
      %v2641 = vmul.f32 %v2539, %v2539
      %v2642 = vmul.f32 %v2540, %v2540
      %v2643 = vmul.f32 %v2541, %v2541
      %v2644 = vmul.f32 %v2542, %v2542
      %v2645 = vmul.f32 %v2543, %v2543
      %v2646 = vmul.f32 %v2544, %v2544
      %v2647 = vmul.f32 %v2545, %v2545
      %v2648 = vmul.f32 %v2546, %v2546
      %v2649 = vmul.f32 %v2547, %v2547
      %v2650 = vmul.f32 %v2548, %v2548
      %v2651 = vmul.f32 %v2549, %v2549
      %v2652 = vmul.f32 %v2550, %v2550
      %v2653 = vmul.f32 %v2551, %v2551
      %v2654 = vmul.f32 %v2552, %v2552
      %v2655 = vmul.f32 %v2553, %v2553
      %v2656 = vmul.f32 %v2554, %v2554
      %v2657 = vmul.f32 %v2555, %v2555
      %v2658 = vmul.f32 %v2556, %v2556
      %v2659 = vmul.f32 %v2557, %v2557
      %v2660 = vmul.f32 %v2558, %v2558
      %v2661 = vmul.f32 %v2559, %v2559
      %v2662 = vmul.f32 %v2560, %v2560
      %v2663 = vmul.f32 %v2561, %v2561
      %v2664 = vmul.f32 %v2562, %v2562
      %v2665 = vmul.f32 %v2563, %v2563
      %v2666 = vmul.f32 %v2564, %v2564
      %v2667 = vmul.f32 %v2565, %v2565
      %v2668 = vmul.f32 %v2566, %v2566
      %v2669 = vmul.f32 %v2567, %v2567
      %v2670 = vsel %vm205, %v2638, 0.0
      %v2671 = vsel %vm205, %v2639, 0.0
      %v2672 = vadd.f32 %v2670, %v2671
      %v2673 = vsel %vm205, %v2640, 0.0
      %v2674 = vadd.f32 %v2672, %v2673
      %v2675 = vsel %vm205, %v2641, 0.0
      %v2676 = vadd.f32 %v2674, %v2675
      %v2677 = vsel %vm205, %v2642, 0.0
      %v2678 = vadd.f32 %v2676, %v2677
      %v2679 = vsel %vm205, %v2643, 0.0
      %v2680 = vadd.f32 %v2678, %v2679
      %v2681 = vsel %vm205, %v2644, 0.0
      %v2682 = vadd.f32 %v2680, %v2681
      %v2683 = vsel %vm205, %v2645, 0.0
      %v2684 = vadd.f32 %v2682, %v2683
      %v2685 = vsel %vm205, %v2646, 0.0
      %v2686 = vadd.f32 %v2684, %v2685
      %v2687 = vsel %vm205, %v2647, 0.0
      %v2688 = vadd.f32 %v2686, %v2687
      %v2689 = vsel %vm205, %v2648, 0.0
      %v2690 = vadd.f32 %v2688, %v2689
      %v2691 = vsel %vm205, %v2649, 0.0
      %v2692 = vadd.f32 %v2690, %v2691
      %v2693 = vsel %vm205, %v2650, 0.0
      %v2694 = vadd.f32 %v2692, %v2693
      %v2695 = vsel %vm205, %v2651, 0.0
      %v2696 = vadd.f32 %v2694, %v2695
      %v2697 = vsel %vm205, %v2652, 0.0
      %v2698 = vadd.f32 %v2696, %v2697
      %v2699 = vsel %vm205, %v2653, 0.0
      %v2700 = vadd.f32 %v2698, %v2699
      %v2701 = vsel %vm205, %v2654, 0.0
      %v2702 = vadd.f32 %v2700, %v2701
      %v2703 = vsel %vm205, %v2655, 0.0
      %v2704 = vadd.f32 %v2702, %v2703
      %v2705 = vsel %vm205, %v2656, 0.0
      %v2706 = vadd.f32 %v2704, %v2705
      %v2707 = vsel %vm205, %v2657, 0.0
      %v2708 = vadd.f32 %v2706, %v2707
      %v2709 = vsel %vm205, %v2658, 0.0
      %v2710 = vadd.f32 %v2708, %v2709
      %v2711 = vsel %vm205, %v2659, 0.0
      %v2712 = vadd.f32 %v2710, %v2711
      %v2713 = vsel %vm205, %v2660, 0.0
      %v2714 = vadd.f32 %v2712, %v2713
      %v2715 = vsel %vm205, %v2661, 0.0
      %v2716 = vadd.f32 %v2714, %v2715
      %v2717 = vsel %vm205, %v2662, 0.0
      %v2718 = vadd.f32 %v2716, %v2717
      %v2719 = vsel %vm205, %v2663, 0.0
      %v2720 = vadd.f32 %v2718, %v2719
      %v2721 = vsel %vm205, %v2664, 0.0
      %v2722 = vadd.f32 %v2720, %v2721
      %v2723 = vsel %vm205, %v2665, 0.0
      %v2724 = vadd.f32 %v2722, %v2723
      %v2725 = vsel %vm205, %v2666, 0.0
      %v2726 = vadd.f32 %v2724, %v2725
      %v2727 = vsel %vm205, %v2667, 0.0
      %v2728 = vadd.f32 %v2726, %v2727
      %v2729 = vsel %vm205, %v2668, 0.0
      %v2730 = vadd.f32 %v2728, %v2729
      %v2731 = vsel %vm205, %v2669, 0.0
      %v2732 = vadd.f32 %v2730, %v2731
      %v2733 = vrot.slane %v2732, 4
      %v2734 = vadd.f32 %v2732, %v2733
      %v2735 = vrot.slane %v2734, 2
      %v2736 = vadd.f32 %v2734, %v2735
      %v2737 = vrot.slane %v2736, 1
      %v2738 = vadd.f32 %v2736, %v2737
      %v2739 = vmul.f32 %v2738, 0.00390625
      %v2740 = vmul.f32 %v2637, %v2637
      %v2741 = vsub.f32 %v2739, %v2740
      %v2742 = vsub.f32 %v2536, %v2637
      %v2743 = vsub.f32 %v2537, %v2637
      %v2744 = vsub.f32 %v2538, %v2637
      %v2745 = vsub.f32 %v2539, %v2637
      %v2746 = vsub.f32 %v2540, %v2637
      %v2747 = vsub.f32 %v2541, %v2637
      %v2748 = vsub.f32 %v2542, %v2637
      %v2749 = vsub.f32 %v2543, %v2637
      %v2750 = vsub.f32 %v2544, %v2637
      %v2751 = vsub.f32 %v2545, %v2637
      %v2752 = vsub.f32 %v2546, %v2637
      %v2753 = vsub.f32 %v2547, %v2637
      %v2754 = vsub.f32 %v2548, %v2637
      %v2755 = vsub.f32 %v2549, %v2637
      %v2756 = vsub.f32 %v2550, %v2637
      %v2757 = vsub.f32 %v2551, %v2637
      %v2758 = vsub.f32 %v2552, %v2637
      %v2759 = vsub.f32 %v2553, %v2637
      %v2760 = vsub.f32 %v2554, %v2637
      %v2761 = vsub.f32 %v2555, %v2637
      %v2762 = vsub.f32 %v2556, %v2637
      %v2763 = vsub.f32 %v2557, %v2637
      %v2764 = vsub.f32 %v2558, %v2637
      %v2765 = vsub.f32 %v2559, %v2637
      %v2766 = vsub.f32 %v2560, %v2637
      %v2767 = vsub.f32 %v2561, %v2637
      %v2768 = vsub.f32 %v2562, %v2637
      %v2769 = vsub.f32 %v2563, %v2637
      %v2770 = vsub.f32 %v2564, %v2637
      %v2771 = vsub.f32 %v2565, %v2637
      %v2772 = vsub.f32 %v2566, %v2637
      %v2773 = vsub.f32 %v2567, %v2637
      %v2774 = vadd.f32 %v2741, 1e-05
      %v2775 = vrsqrt.pop %v2774
      %v2776 = vmul.f32 %v2742, %v2775
      %v2777 = vmul.f32 %v2743, %v2775
      %v2778 = vmul.f32 %v2744, %v2775
      %v2779 = vmul.f32 %v2745, %v2775
      %v2780 = vmul.f32 %v2746, %v2775
      %v2781 = vmul.f32 %v2747, %v2775
      %v2782 = vmul.f32 %v2748, %v2775
      %v2783 = vmul.f32 %v2749, %v2775
      %v2784 = vmul.f32 %v2750, %v2775
      %v2785 = vmul.f32 %v2751, %v2775
      %v2786 = vmul.f32 %v2752, %v2775
      %v2787 = vmul.f32 %v2753, %v2775
      %v2788 = vmul.f32 %v2754, %v2775
      %v2789 = vmul.f32 %v2755, %v2775
      %v2790 = vmul.f32 %v2756, %v2775
      %v2791 = vmul.f32 %v2757, %v2775
      %v2792 = vmul.f32 %v2758, %v2775
      %v2793 = vmul.f32 %v2759, %v2775
      %v2794 = vmul.f32 %v2760, %v2775
      %v2795 = vmul.f32 %v2761, %v2775
      %v2796 = vmul.f32 %v2762, %v2775
      %v2797 = vmul.f32 %v2763, %v2775
      %v2798 = vmul.f32 %v2764, %v2775
      %v2799 = vmul.f32 %v2765, %v2775
      %v2800 = vmul.f32 %v2766, %v2775
      %v2801 = vmul.f32 %v2767, %v2775
      %v2802 = vmul.f32 %v2768, %v2775
      %v2803 = vmul.f32 %v2769, %v2775
      %v2804 = vmul.f32 %v2770, %v2775
      %v2805 = vmul.f32 %v2771, %v2775
      %v2806 = vmul.f32 %v2772, %v2775
      %v2807 = vmul.f32 %v2773, %v2775
      %v2808 = vmax.f32 %v2776, 0.0
      %v2809 = vmax.f32 %v2777, 0.0
      %v2810 = vmax.f32 %v2778, 0.0
      %v2811 = vmax.f32 %v2779, 0.0
      %v2812 = vmax.f32 %v2780, 0.0
      %v2813 = vmax.f32 %v2781, 0.0
      %v2814 = vmax.f32 %v2782, 0.0
      %v2815 = vmax.f32 %v2783, 0.0
      %v2816 = vmax.f32 %v2784, 0.0
      %v2817 = vmax.f32 %v2785, 0.0
      %v2818 = vmax.f32 %v2786, 0.0
      %v2819 = vmax.f32 %v2787, 0.0
      %v2820 = vmax.f32 %v2788, 0.0
      %v2821 = vmax.f32 %v2789, 0.0
      %v2822 = vmax.f32 %v2790, 0.0
      %v2823 = vmax.f32 %v2791, 0.0
      %v2824 = vmax.f32 %v2792, 0.0
      %v2825 = vmax.f32 %v2793, 0.0
      %v2826 = vmax.f32 %v2794, 0.0
      %v2827 = vmax.f32 %v2795, 0.0
      %v2828 = vmax.f32 %v2796, 0.0
      %v2829 = vmax.f32 %v2797, 0.0
      %v2830 = vmax.f32 %v2798, 0.0
      %v2831 = vmax.f32 %v2799, 0.0
      %v2832 = vmax.f32 %v2800, 0.0
      %v2833 = vmax.f32 %v2801, 0.0
      %v2834 = vmax.f32 %v2802, 0.0
      %v2835 = vmax.f32 %v2803, 0.0
      %v2836 = vmax.f32 %v2804, 0.0
      %v2837 = vmax.f32 %v2805, 0.0
      %v2838 = vmax.f32 %v2806, 0.0
      %v2839 = vmax.f32 %v2807, 0.0
      %2840 = vst.msk [vmem:[%s204 + $0x1] sm:$0xff] %vm205, %v2808
      %2841 = vst.msk [vmem:[%s204 + $0x9] sm:$0xff] %vm205, %v2809
      %2842 = vst.msk [vmem:[%s204 + $0x19] sm:$0xff] %vm205, %v2810
      %2843 = vst.msk [vmem:[%s204 + $0x21] sm:$0xff] %vm205, %v2811
      %2844 = vst.msk [vmem:[%s204 + $0x31] sm:$0xff] %vm205, %v2812
      %2845 = vst.msk [vmem:[%s204 + $0x39] sm:$0xff] %vm205, %v2813
      %2846 = vst.msk [vmem:[%s204 + $0x49] sm:$0xff] %vm205, %v2814
      %2847 = vst.msk [vmem:[%s204 + $0x51] sm:$0xff] %vm205, %v2815
      %2848 = vst.msk [vmem:[%s204 + $0x61] sm:$0xff] %vm205, %v2816
      %2849 = vst.msk [vmem:[%s204 + $0x69] sm:$0xff] %vm205, %v2817
      %2850 = vst.msk [vmem:[%s204 + $0x79] sm:$0xff] %vm205, %v2818
      %2851 = vst.msk [vmem:[%s204 + $0x81] sm:$0xff] %vm205, %v2819
      %2852 = vst.msk [vmem:[%s204 + $0x91] sm:$0xff] %vm205, %v2820
      %2853 = vst.msk [vmem:[%s204 + $0x99] sm:$0xff] %vm205, %v2821
      %2854 = vst.msk [vmem:[%s204 + $0xa9] sm:$0xff] %vm205, %v2822
      %2855 = vst.msk [vmem:[%s204 + $0xb1] sm:$0xff] %vm205, %v2823
      %2856 = vst.msk [vmem:[%s204 + $0xc1] sm:$0xff] %vm205, %v2824
      %2857 = vst.msk [vmem:[%s204 + $0xc9] sm:$0xff] %vm205, %v2825
      %2858 = vst.msk [vmem:[%s204 + $0xd9] sm:$0xff] %vm205, %v2826
      %2859 = vst.msk [vmem:[%s204 + $0xe1] sm:$0xff] %vm205, %v2827
      %2860 = vst.msk [vmem:[%s204 + $0xf1] sm:$0xff] %vm205, %v2828
      %2861 = vst.msk [vmem:[%s204 + $0xf9] sm:$0xff] %vm205, %v2829
      %2862 = vst.msk [vmem:[%s204 + $0x109] sm:$0xff] %vm205, %v2830
      %2863 = vst.msk [vmem:[%s204 + $0x111] sm:$0xff] %vm205, %v2831
      %2864 = vst.msk [vmem:[%s204 + $0x121] sm:$0xff] %vm205, %v2832
      %2865 = vst.msk [vmem:[%s204 + $0x129] sm:$0xff] %vm205, %v2833
      %2866 = vst.msk [vmem:[%s204 + $0x139] sm:$0xff] %vm205, %v2834
      %2867 = vst.msk [vmem:[%s204 + $0x141] sm:$0xff] %vm205, %v2835
      %2868 = vst.msk [vmem:[%s204 + $0x151] sm:$0xff] %vm205, %v2836
      %2869 = vst.msk [vmem:[%s204 + $0x159] sm:$0xff] %vm205, %v2837
      %2870 = vst.msk [vmem:[%s204 + $0x169] sm:$0xff] %vm205, %v2838
      %2871 = vst.msk [vmem:[%s204 + $0x171] sm:$0xff] %vm205, %v2839
      %2872 = vst.msk [vmem:[#allocation2 + $0x1] sm:$0xff] %vm205, %v2810
      %2873 = vst.msk [vmem:[#allocation2 + $0x9] sm:$0xff] %vm205, %v2811
      %2874 = vst.msk [vmem:[%s240 + $0x1] sm:$0xff] %vm205, %v2836
      %2875 = vst.msk [vmem:[%s240 + $0x9] sm:$0xff] %vm205, %v2837
      %v2876 = vld [vmem:[#allocation2 + $0x2] sm:$0x1]
      %v2877 = vld [vmem:[#allocation2 + $0x1a] sm:$0x1]
      %v2878 = vld [vmem:[#allocation2 + $0x32] sm:$0x1]
      %v2879 = vld [vmem:[#allocation2 + $0x4a] sm:$0x1]
      %v2880 = vld [vmem:[#allocation2 + $0x62] sm:$0x1]
      %v2881 = vld [vmem:[#allocation2 + $0x7a] sm:$0x1]
      %v2882 = vld [vmem:[#allocation2 + $0x92] sm:$0x1]
      %v2883 = vld [vmem:[#allocation2 + $0xaa] sm:$0x1]
      %v2884 = vld [vmem:[#allocation2 + $0xc2] sm:$0x1]
      %v2885 = vld [vmem:[#allocation2 + $0xda] sm:$0x1]
      %v2886 = vld [vmem:[#allocation2 + $0xf2] sm:$0x1]
      %v2887 = vld [vmem:[#allocation2 + $0x10a] sm:$0x1]
      %v2888 = vld [vmem:[#allocation2 + $0x122] sm:$0x1]
      %v2889 = vld [vmem:[#allocation2 + $0x13a] sm:$0x1]
      %v2890 = vld [vmem:[#allocation2 + $0x152] sm:$0x1]
      %v2891 = vld [vmem:[#allocation2 + $0x16a] sm:$0x1]
      %v2892 = vld [vmem:[#allocation2 + $0x182] sm:$0x1]
      %v2893 = vld [vmem:[#allocation2 + $0x19a] sm:$0x1]
      %2894 = vst.msk [vmem:[#allocation2] sm:$0x1] %vm261, %v2876
      %2895 = vst.msk [vmem:[#allocation2 + $0x18] sm:$0x1] %vm261, %v2877
      %2896 = vst.msk [vmem:[#allocation2 + $0x30] sm:$0x1] %vm261, %v2878
      %2897 = vst.msk [vmem:[#allocation2 + $0x48] sm:$0x1] %vm261, %v2879
      %2898 = vst.msk [vmem:[#allocation2 + $0x60] sm:$0x1] %vm261, %v2880
      %2899 = vst.msk [vmem:[#allocation2 + $0x78] sm:$0x1] %vm261, %v2881
      %2900 = vst.msk [vmem:[#allocation2 + $0x90] sm:$0x1] %vm261, %v2882
      %2901 = vst.msk [vmem:[#allocation2 + $0xa8] sm:$0x1] %vm261, %v2883
      %2902 = vst.msk [vmem:[#allocation2 + $0xc0] sm:$0x1] %vm261, %v2884
      %2903 = vst.msk [vmem:[#allocation2 + $0xd8] sm:$0x1] %vm261, %v2885
      %2904 = vst.msk [vmem:[#allocation2 + $0xf0] sm:$0x1] %vm261, %v2886
      %2905 = vst.msk [vmem:[#allocation2 + $0x108] sm:$0x1] %vm261, %v2887
      %2906 = vst.msk [vmem:[#allocation2 + $0x120] sm:$0x1] %vm261, %v2888
      %2907 = vst.msk [vmem:[#allocation2 + $0x138] sm:$0x1] %vm261, %v2889
      %2908 = vst.msk [vmem:[#allocation2 + $0x150] sm:$0x1] %vm261, %v2890
      %2909 = vst.msk [vmem:[#allocation2 + $0x168] sm:$0x1] %vm261, %v2891
      %2910 = vst.msk [vmem:[#allocation2 + $0x180] sm:$0x1] %vm261, %v2892
      %2911 = vst.msk [vmem:[#allocation2 + $0x198] sm:$0x1] %vm261, %v2893
      %v2912 = vld [vmem:[#allocation2 + $0xf] sm:$0x1]
      %v2913 = vld [vmem:[#allocation2 + $0x27] sm:$0x1]
      %v2914 = vld [vmem:[#allocation2 + $0x3f] sm:$0x1]
      %v2915 = vld [vmem:[#allocation2 + $0x57] sm:$0x1]
      %v2916 = vld [vmem:[#allocation2 + $0x6f] sm:$0x1]
      %v2917 = vld [vmem:[#allocation2 + $0x87] sm:$0x1]
      %v2918 = vld [vmem:[#allocation2 + $0x9f] sm:$0x1]
      %v2919 = vld [vmem:[#allocation2 + $0xb7] sm:$0x1]
      %v2920 = vld [vmem:[#allocation2 + $0xcf] sm:$0x1]
      %v2921 = vld [vmem:[#allocation2 + $0xe7] sm:$0x1]
      %v2922 = vld [vmem:[#allocation2 + $0xff] sm:$0x1]
      %v2923 = vld [vmem:[#allocation2 + $0x117] sm:$0x1]
      %v2924 = vld [vmem:[#allocation2 + $0x12f] sm:$0x1]
      %v2925 = vld [vmem:[#allocation2 + $0x147] sm:$0x1]
      %v2926 = vld [vmem:[#allocation2 + $0x15f] sm:$0x1]
      %v2927 = vld [vmem:[#allocation2 + $0x177] sm:$0x1]
      %v2928 = vld [vmem:[#allocation2 + $0x18f] sm:$0x1]
      %v2929 = vld [vmem:[#allocation2 + $0x1a7] sm:$0x1]
      %2930 = vst.msk [vmem:[#allocation2 + $0x11] sm:$0x1] %vm261, %v2912
      %2931 = vst.msk [vmem:[#allocation2 + $0x29] sm:$0x1] %vm261, %v2913
      %2932 = vst.msk [vmem:[#allocation2 + $0x41] sm:$0x1] %vm261, %v2914
      %2933 = vst.msk [vmem:[#allocation2 + $0x59] sm:$0x1] %vm261, %v2915
      %2934 = vst.msk [vmem:[#allocation2 + $0x71] sm:$0x1] %vm261, %v2916
      %2935 = vst.msk [vmem:[#allocation2 + $0x89] sm:$0x1] %vm261, %v2917
      %2936 = vst.msk [vmem:[#allocation2 + $0xa1] sm:$0x1] %vm261, %v2918
      %2937 = vst.msk [vmem:[#allocation2 + $0xb9] sm:$0x1] %vm261, %v2919
      %2938 = vst.msk [vmem:[#allocation2 + $0xd1] sm:$0x1] %vm261, %v2920
      %2939 = vst.msk [vmem:[#allocation2 + $0xe9] sm:$0x1] %vm261, %v2921
      %2940 = vst.msk [vmem:[#allocation2 + $0x101] sm:$0x1] %vm261, %v2922
      %2941 = vst.msk [vmem:[#allocation2 + $0x119] sm:$0x1] %vm261, %v2923
      %2942 = vst.msk [vmem:[#allocation2 + $0x131] sm:$0x1] %vm261, %v2924
      %2943 = vst.msk [vmem:[#allocation2 + $0x149] sm:$0x1] %vm261, %v2925
      %2944 = vst.msk [vmem:[#allocation2 + $0x161] sm:$0x1] %vm261, %v2926
      %2945 = vst.msk [vmem:[#allocation2 + $0x179] sm:$0x1] %vm261, %v2927
      %2946 = vst.msk [vmem:[#allocation2 + $0x191] sm:$0x1] %vm261, %v2928
      %2947 = vst.msk [vmem:[#allocation2 + $0x1a9] sm:$0x1] %vm261, %v2929
      %v2948 = vld [vmem:[%s2] sm:$0x3]
      %v2949 = vld [vmem:[%s2 + $0x2] sm:$0x3]
      %v2950 = vld [vmem:[%s2 + $0x4] sm:$0x3]
      %v2951 = vld [vmem:[%s2 + $0x6] sm:$0x3]
      %v2952 = vld [vmem:[%s2 + $0x8] sm:$0x3]
      %v2953 = vld [vmem:[%s2 + $0xa] sm:$0x3]
      %v2954 = vld [vmem:[%s2 + $0xc] sm:$0x3]
      %v2955 = vld [vmem:[%s2 + $0xe] sm:$0x3]
      %v2956 = vld [vmem:[%s2 + $0x10] sm:$0x3]
      %v2957 = vld [vmem:[#allocation2] sm:$0xff]
      %v2958 = vld [vmem:[#allocation2 + $0x8] sm:$0xff]
      %v2959 = vld [vmem:[#allocation2 + $0x10] sm:$0x3]
      %v2960 = vld [vmem:[#allocation2 + $0x18] sm:$0xff]
      %v2961 = vld [vmem:[#allocation2 + $0x20] sm:$0xff]
      %v2962 = vld [vmem:[#allocation2 + $0x28] sm:$0x3]
      %v2963 = vld [vmem:[#allocation2 + $0x30] sm:$0xff]
      %v2964 = vld [vmem:[#allocation2 + $0x38] sm:$0xff]
      %v2965 = vld [vmem:[#allocation2 + $0x40] sm:$0x3]
      %v2966 = vld [vmem:[#allocation2 + $0x48] sm:$0xff]
      %v2967 = vld [vmem:[#allocation2 + $0x50] sm:$0xff]
      %v2968 = vld [vmem:[#allocation2 + $0x58] sm:$0x3]
      %v2969 = vld [vmem:[#allocation2 + $0x60] sm:$0xff]
      %v2970 = vld [vmem:[#allocation2 + $0x68] sm:$0xff]
      %v2971 = vld [vmem:[#allocation2 + $0x70] sm:$0x3]
      %v2972 = vld [vmem:[#allocation2 + $0x78] sm:$0xff]
      %v2973 = vld [vmem:[#allocation2 + $0x80] sm:$0xff]
      %v2974 = vld [vmem:[#allocation2 + $0x88] sm:$0x3]
      %v2975 = vld [vmem:[#allocation2 + $0x90] sm:$0xff]
      %v2976 = vld [vmem:[#allocation2 + $0x98] sm:$0xff]
      %v2977 = vld [vmem:[#allocation2 + $0xa0] sm:$0x3]
      %v2978 = vld [vmem:[#allocation2 + $0xa8] sm:$0xff]
      %v2979 = vld [vmem:[#allocation2 + $0xb0] sm:$0xff]
      %v2980 = vld [vmem:[#allocation2 + $0xb8] sm:$0x3]
      %v2981 = vld [vmem:[#allocation2 + $0xc0] sm:$0xff]
      %v2982 = vld [vmem:[#allocation2 + $0xc8] sm:$0xff]
      %v2983 = vld [vmem:[#allocation2 + $0xd0] sm:$0x3]
      %v2984 = vld [vmem:[#allocation2 + $0xd8] sm:$0xff]
      %v2985 = vld [vmem:[#allocation2 + $0xe0] sm:$0xff]
      %v2986 = vld [vmem:[#allocation2 + $0xe8] sm:$0x3]
      %v2987 = vld [vmem:[#allocation2 + $0xf0] sm:$0xff]
      %v2988 = vld [vmem:[#allocation2 + $0xf8] sm:$0xff]
      %v2989 = vld [vmem:[#allocation2 + $0x100] sm:$0x3]
      %v2990 = vld [vmem:[#allocation2 + $0x108] sm:$0xff]
      %v2991 = vld [vmem:[#allocation2 + $0x110] sm:$0xff]
      %v2992 = vld [vmem:[#allocation2 + $0x118] sm:$0x3]
      %v2993 = vld [vmem:[#allocation2 + $0x120] sm:$0xff]
      %v2994 = vld [vmem:[#allocation2 + $0x128] sm:$0xff]
      %v2995 = vld [vmem:[#allocation2 + $0x130] sm:$0x3]
      %v2996 = vld [vmem:[#allocation2 + $0x138] sm:$0xff]
      %v2997 = vld [vmem:[#allocation2 + $0x140] sm:$0xff]
      %v2998 = vld [vmem:[#allocation2 + $0x148] sm:$0x3]
      %v2999 = vld [vmem:[#allocation2 + $0x150] sm:$0xff]
      %v3000 = vld [vmem:[#allocation2 + $0x158] sm:$0xff]
      %v3001 = vld [vmem:[#allocation2 + $0x160] sm:$0x3]
      %v3002 = vld [vmem:[#allocation2 + $0x168] sm:$0xff]
      %v3003 = vld [vmem:[#allocation2 + $0x170] sm:$0xff]
      %v3004 = vld [vmem:[#allocation2 + $0x178] sm:$0x3]
      %v3005 = vld [vmem:[#allocation2 + $0x180] sm:$0xff]
      %v3006 = vld [vmem:[#allocation2 + $0x188] sm:$0xff]
      %v3007 = vld [vmem:[#allocation2 + $0x190] sm:$0x3]
      %v3008 = vld [vmem:[#allocation2 + $0x198] sm:$0xff]
      %v3009 = vld [vmem:[#allocation2 + $0x1a0] sm:$0xff]
      %v3010 = vld [vmem:[#allocation2 + $0x1a8] sm:$0x3]
      %v3011 = vpack.c.bf16 %v2958, %v2957
      %v3012 = vpack.c.bf16 %v2959, %v2959
      %v3013 = vpack.c.bf16 %v2961, %v2960
      %v3014 = vpack.c.bf16 %v2962, %v2962
      %v3015 = vpack.c.bf16 %v2964, %v2963
      %v3016 = vpack.c.bf16 %v2965, %v2965
      %v3017 = vpack.c.bf16 %v2967, %v2966
      %v3018 = vpack.c.bf16 %v2968, %v2968
      %v3019 = vpack.c.bf16 %v2970, %v2969
      %v3020 = vpack.c.bf16 %v2971, %v2971
      %v3021 = vpack.c.bf16 %v2973, %v2972
      %v3022 = vpack.c.bf16 %v2974, %v2974
      %v3023 = vpack.c.bf16 %v2976, %v2975
      %v3024 = vpack.c.bf16 %v2977, %v2977
      %v3025 = vpack.c.bf16 %v2979, %v2978
      %v3026 = vpack.c.bf16 %v2980, %v2980
      %v3027 = vpack.c.bf16 %v2982, %v2981
      %v3028 = vpack.c.bf16 %v2983, %v2983
      %v3029 = vpack.c.bf16 %v2985, %v2984
      %v3030 = vpack.c.bf16 %v2986, %v2986
      %v3031 = vpack.c.bf16 %v2988, %v2987
      %v3032 = vpack.c.bf16 %v2989, %v2989
      %v3033 = vpack.c.bf16 %v2991, %v2990
      %v3034 = vpack.c.bf16 %v2992, %v2992
      %v3035 = vpack.c.bf16 %v2994, %v2993
      %v3036 = vpack.c.bf16 %v2995, %v2995
      %v3037 = vpack.c.bf16 %v2997, %v2996
      %v3038 = vpack.c.bf16 %v2998, %v2998
      %v3039 = vpack.c.bf16 %v3000, %v2999
      %v3040 = vpack.c.bf16 %v3001, %v3001
      %v3041 = vpack.c.bf16 %v3003, %v3002
      %v3042 = vpack.c.bf16 %v3004, %v3004
      %v3043 = vpack.c.bf16 %v3006, %v3005
      %v3044 = vpack.c.bf16 %v3007, %v3007
      %v3045 = vpack.c.bf16 %v3009, %v3008
      %v3046 = vpack.c.bf16 %v3010, %v3010
      %v3048 = vshrl.u32 %v3011, 16
      %v3050 = vshll.u32 %v3011, 16
      %v3052 = vrot.slane %v3050, 1
      %v3053 = vor.u32 %v3048, %v3052
      %v3055 = vshll.u32 %v3012, 16
      %v3057 = vrot.slane %v3055, 1
      %v3058 = vsel %vm415, %v3053, %v3057
      %v3060 = vshrl.u32 %v3013, 16
      %v3062 = vshll.u32 %v3013, 16
      %v3064 = vrot.slane %v3062, 1
      %v3065 = vor.u32 %v3060, %v3064
      %v3067 = vshll.u32 %v3014, 16
      %v3069 = vrot.slane %v3067, 1
      %v3070 = vsel %vm415, %v3065, %v3069
      %v3072 = vshrl.u32 %v3015, 16
      %v3074 = vshll.u32 %v3015, 16
      %v3076 = vrot.slane %v3074, 1
      %v3077 = vor.u32 %v3072, %v3076
      %v3079 = vshll.u32 %v3016, 16
      %v3081 = vrot.slane %v3079, 1
      %v3082 = vsel %vm415, %v3077, %v3081
      %v3084 = vshrl.u32 %v3017, 16
      %v3086 = vshll.u32 %v3017, 16
      %v3088 = vrot.slane %v3086, 1
      %v3089 = vor.u32 %v3084, %v3088
      %v3091 = vshll.u32 %v3018, 16
      %v3093 = vrot.slane %v3091, 1
      %v3094 = vsel %vm415, %v3089, %v3093
      %v3096 = vshrl.u32 %v3019, 16
      %v3098 = vshll.u32 %v3019, 16
      %v3100 = vrot.slane %v3098, 1
      %v3101 = vor.u32 %v3096, %v3100
      %v3103 = vshll.u32 %v3020, 16
      %v3105 = vrot.slane %v3103, 1
      %v3106 = vsel %vm415, %v3101, %v3105
      %v3108 = vshrl.u32 %v3021, 16
      %v3110 = vshll.u32 %v3021, 16
      %v3112 = vrot.slane %v3110, 1
      %v3113 = vor.u32 %v3108, %v3112
      %v3115 = vshll.u32 %v3022, 16
      %v3117 = vrot.slane %v3115, 1
      %v3118 = vsel %vm415, %v3113, %v3117
      %v3120 = vshrl.u32 %v3023, 16
      %v3122 = vshll.u32 %v3023, 16
      %v3124 = vrot.slane %v3122, 1
      %v3125 = vor.u32 %v3120, %v3124
      %v3127 = vshll.u32 %v3024, 16
      %v3129 = vrot.slane %v3127, 1
      %v3130 = vsel %vm415, %v3125, %v3129
      %v3132 = vshrl.u32 %v3025, 16
      %v3134 = vshll.u32 %v3025, 16
      %v3136 = vrot.slane %v3134, 1
      %v3137 = vor.u32 %v3132, %v3136
      %v3139 = vshll.u32 %v3026, 16
      %v3141 = vrot.slane %v3139, 1
      %v3142 = vsel %vm415, %v3137, %v3141
      %v3144 = vshrl.u32 %v3027, 16
      %v3146 = vshll.u32 %v3027, 16
      %v3148 = vrot.slane %v3146, 1
      %v3149 = vor.u32 %v3144, %v3148
      %v3151 = vshll.u32 %v3028, 16
      %v3153 = vrot.slane %v3151, 1
      %v3154 = vsel %vm415, %v3149, %v3153
      %v3156 = vshrl.u32 %v3029, 16
      %v3158 = vshll.u32 %v3029, 16
      %v3160 = vrot.slane %v3158, 1
      %v3161 = vor.u32 %v3156, %v3160
      %v3163 = vshll.u32 %v3030, 16
      %v3165 = vrot.slane %v3163, 1
      %v3166 = vsel %vm415, %v3161, %v3165
      %v3168 = vshrl.u32 %v3031, 16
      %v3170 = vshll.u32 %v3031, 16
      %v3172 = vrot.slane %v3170, 1
      %v3173 = vor.u32 %v3168, %v3172
      %v3175 = vshll.u32 %v3032, 16
      %v3177 = vrot.slane %v3175, 1
      %v3178 = vsel %vm415, %v3173, %v3177
      %v3180 = vshrl.u32 %v3033, 16
      %v3182 = vshll.u32 %v3033, 16
      %v3184 = vrot.slane %v3182, 1
      %v3185 = vor.u32 %v3180, %v3184
      %v3187 = vshll.u32 %v3034, 16
      %v3189 = vrot.slane %v3187, 1
      %v3190 = vsel %vm415, %v3185, %v3189
      %v3192 = vshrl.u32 %v3035, 16
      %v3194 = vshll.u32 %v3035, 16
      %v3196 = vrot.slane %v3194, 1
      %v3197 = vor.u32 %v3192, %v3196
      %v3199 = vshll.u32 %v3036, 16
      %v3201 = vrot.slane %v3199, 1
      %v3202 = vsel %vm415, %v3197, %v3201
      %v3204 = vshrl.u32 %v3037, 16
      %v3206 = vshll.u32 %v3037, 16
      %v3208 = vrot.slane %v3206, 1
      %v3209 = vor.u32 %v3204, %v3208
      %v3211 = vshll.u32 %v3038, 16
      %v3213 = vrot.slane %v3211, 1
      %v3214 = vsel %vm415, %v3209, %v3213
      %v3216 = vshrl.u32 %v3039, 16
      %v3218 = vshll.u32 %v3039, 16
      %v3220 = vrot.slane %v3218, 1
      %v3221 = vor.u32 %v3216, %v3220
      %v3223 = vshll.u32 %v3040, 16
      %v3225 = vrot.slane %v3223, 1
      %v3226 = vsel %vm415, %v3221, %v3225
      %v3228 = vshrl.u32 %v3041, 16
      %v3230 = vshll.u32 %v3041, 16
      %v3232 = vrot.slane %v3230, 1
      %v3233 = vor.u32 %v3228, %v3232
      %v3235 = vshll.u32 %v3042, 16
      %v3237 = vrot.slane %v3235, 1
      %v3238 = vsel %vm415, %v3233, %v3237
      %v3240 = vshrl.u32 %v3043, 16
      %v3242 = vshll.u32 %v3043, 16
      %v3244 = vrot.slane %v3242, 1
      %v3245 = vor.u32 %v3240, %v3244
      %v3247 = vshll.u32 %v3044, 16
      %v3249 = vrot.slane %v3247, 1
      %v3250 = vsel %vm415, %v3245, %v3249
      %v3252 = vshrl.u32 %v3045, 16
      %v3254 = vshll.u32 %v3045, 16
      %v3256 = vrot.slane %v3254, 1
      %v3257 = vor.u32 %v3252, %v3256
      %v3259 = vshll.u32 %v3046, 16
      %v3261 = vrot.slane %v3259, 1
      %v3262 = vsel %vm415, %v3257, %v3261
      %v3299 = vrot.slane %v3011, 1
      %v3300 = vrot.slane %v3012, 1
      %v3301 = vsel %vm668, %v3299, %v3300
      %v3302 = vrot.slane %v3013, 1
      %v3303 = vrot.slane %v3014, 1
      %v3304 = vsel %vm668, %v3302, %v3303
      %v3305 = vrot.slane %v3015, 1
      %v3306 = vrot.slane %v3016, 1
      %v3307 = vsel %vm668, %v3305, %v3306
      %v3308 = vrot.slane %v3017, 1
      %v3309 = vrot.slane %v3018, 1
      %v3310 = vsel %vm668, %v3308, %v3309
      %v3311 = vrot.slane %v3019, 1
      %v3312 = vrot.slane %v3020, 1
      %v3313 = vsel %vm668, %v3311, %v3312
      %v3314 = vrot.slane %v3021, 1
      %v3315 = vrot.slane %v3022, 1
      %v3316 = vsel %vm668, %v3314, %v3315
      %v3317 = vrot.slane %v3023, 1
      %v3318 = vrot.slane %v3024, 1
      %v3319 = vsel %vm668, %v3317, %v3318
      %v3320 = vrot.slane %v3025, 1
      %v3321 = vrot.slane %v3026, 1
      %v3322 = vsel %vm668, %v3320, %v3321
      %v3323 = vrot.slane %v3027, 1
      %v3324 = vrot.slane %v3028, 1
      %v3325 = vsel %vm668, %v3323, %v3324
      %v3326 = vrot.slane %v3029, 1
      %v3327 = vrot.slane %v3030, 1
      %v3328 = vsel %vm668, %v3326, %v3327
      %v3329 = vrot.slane %v3031, 1
      %v3330 = vrot.slane %v3032, 1
      %v3331 = vsel %vm668, %v3329, %v3330
      %v3332 = vrot.slane %v3033, 1
      %v3333 = vrot.slane %v3034, 1
      %v3334 = vsel %vm668, %v3332, %v3333
      %v3335 = vrot.slane %v3035, 1
      %v3336 = vrot.slane %v3036, 1
      %v3337 = vsel %vm668, %v3335, %v3336
      %v3338 = vrot.slane %v3037, 1
      %v3339 = vrot.slane %v3038, 1
      %v3340 = vsel %vm668, %v3338, %v3339
      %v3341 = vrot.slane %v3039, 1
      %v3342 = vrot.slane %v3040, 1
      %v3343 = vsel %vm668, %v3341, %v3342
      %v3344 = vrot.slane %v3041, 1
      %v3345 = vrot.slane %v3042, 1
      %v3346 = vsel %vm668, %v3344, %v3345
      %v3347 = vrot.slane %v3043, 1
      %v3348 = vrot.slane %v3044, 1
      %v3349 = vsel %vm668, %v3347, %v3348
      %v3350 = vrot.slane %v3045, 1
      %v3351 = vrot.slane %v3046, 1
      %v3352 = vsel %vm668, %v3350, %v3351
      %v3354 = vsel %vm205, %v3058, 0
      %v3357 = vsel %vm205, %v3070, 0
      %v3360 = vsel %vm205, %v3082, 0
      %v3363 = vsel %vm205, %v3094, 0
      %v3366 = vsel %vm205, %v3106, 0
      %v3369 = vsel %vm205, %v3118, 0
      %v3372 = vsel %vm205, %v3130, 0
      %v3375 = vsel %vm205, %v3142, 0
      %v3378 = vsel %vm205, %v3154, 0
      %v3381 = vsel %vm205, %v3166, 0
      %v3384 = vsel %vm205, %v3178, 0
      %v3387 = vsel %vm205, %v3190, 0
      %v3390 = vsel %vm205, %v3202, 0
      %v3393 = vsel %vm205, %v3214, 0
      %v3396 = vsel %vm205, %v3226, 0
      %v3399 = vsel %vm205, %v3238, 0
      %v3402 = vsel %vm771, %v2949, 0
      %3404 = vmatprep.subr.bf16.mxu0 0
      %3405 = vmatpush1.bf16.msra.mxu0 0
      %3406 = vmatprep.subr.bf16.mxu0 0
      %3407 = vmatpush1.bf16.msra.mxu0 0
      %3408 = vmatprep.subr.bf16.mxu0 0
      %3409 = vmatpush1.bf16.msra.mxu0 0
      %3410 = vmatprep.subr.bf16.mxu0 0
      %3411 = vmatpush1.bf16.msra.mxu0 0
      %3412 = vmatprep.subr.bf16.mxu0 0
      %3413 = vmatpush1.bf16.msra.mxu0 0
      %3414 = vmatprep.subr.bf16.mxu0 0
      %3415 = vmatpush1.bf16.msra.mxu0 0
      %3416 = vmatprep.subr.bf16.mxu0 0
      %3417 = vmatpush1.bf16.msra.mxu0 0
      %3418 = vmatprep.subr.bf16.mxu0 0
      %3419 = vmatpush1.bf16.msra.mxu0 %v3402
      %3420 = vmatprep.subr.bf16.mxu0 0
      %3421 = vmatpush2.bf16.msra.mxu0 0
      %3422 = vmatprep.subr.bf16.mxu0 0
      %3423 = vmatpush2.bf16.msra.mxu0 0
      %3424 = vmatprep.subr.bf16.mxu0 0
      %3425 = vmatpush2.bf16.msra.mxu0 0
      %3426 = vmatprep.subr.bf16.mxu0 0
      %3427 = vmatpush2.bf16.msra.mxu0 0
      %3428 = vmatprep.subr.bf16.mxu0 0
      %3429 = vmatpush2.bf16.msra.mxu0 0
      %3430 = vmatprep.subr.bf16.mxu0 0
      %3431 = vmatpush2.bf16.msra.mxu0 0
      %3432 = vmatprep.subr.bf16.mxu0 0
      %3433 = vmatpush2.bf16.msra.mxu0 0
      %3434 = vmatprep.subr.bf16.mxu0 0
      %3435 = vmatpush2.bf16.msra.mxu0 0
      %3436 = vmatprep.mubr.bf16.mxu0 0
      %3437 = vmatmul.mubr.bf16.gmra.mxu0 %v3354
      %v3438 = vpop.f32.mrf.mxu0
      %v3439 = vadd.f32 0.0, %v3438
      %v3440 = vpop.f32.mrf.mxu0
      %v3441 = vpop.f32.mrf.mxu0
      %v3442 = vadd.f32 0.0, %v3441
      %v3443 = vpop.f32.mrf.mxu0
      %3444 = vmatprep.mubr.bf16.mxu0 0
      %3445 = vmatmul.mubr.bf16.gmra.mxu0 %v3357
      %v3446 = vpop.f32.mrf.mxu0
      %v3447 = vadd.f32 0.0, %v3446
      %v3448 = vpop.f32.mrf.mxu0
      %v3449 = vpop.f32.mrf.mxu0
      %v3450 = vadd.f32 0.0, %v3449
      %v3451 = vpop.f32.mrf.mxu0
      %3452 = vmatprep.mubr.bf16.mxu0 0
      %3453 = vmatmul.mubr.bf16.gmra.mxu0 %v3360
      %v3454 = vpop.f32.mrf.mxu0
      %v3455 = vadd.f32 0.0, %v3454
      %v3456 = vpop.f32.mrf.mxu0
      %v3457 = vpop.f32.mrf.mxu0
      %v3458 = vadd.f32 0.0, %v3457
      %v3459 = vpop.f32.mrf.mxu0
      %3460 = vmatprep.mubr.bf16.mxu0 0
      %3461 = vmatmul.mubr.bf16.gmra.mxu0 %v3363
      %v3462 = vpop.f32.mrf.mxu0
      %v3463 = vadd.f32 0.0, %v3462
      %v3464 = vpop.f32.mrf.mxu0
      %v3465 = vpop.f32.mrf.mxu0
      %v3466 = vadd.f32 0.0, %v3465
      %v3467 = vpop.f32.mrf.mxu0
      %3468 = vmatprep.mubr.bf16.mxu0 0
      %3469 = vmatmul.mubr.bf16.gmra.mxu0 %v3366
      %v3470 = vpop.f32.mrf.mxu0
      %v3471 = vadd.f32 0.0, %v3470
      %v3472 = vpop.f32.mrf.mxu0
      %v3473 = vpop.f32.mrf.mxu0
      %v3474 = vadd.f32 0.0, %v3473
      %v3475 = vpop.f32.mrf.mxu0
      %3476 = vmatprep.mubr.bf16.mxu0 0
      %3477 = vmatmul.mubr.bf16.gmra.mxu0 %v3369
      %v3478 = vpop.f32.mrf.mxu0
      %v3479 = vadd.f32 0.0, %v3478
      %v3480 = vpop.f32.mrf.mxu0
      %v3481 = vpop.f32.mrf.mxu0
      %v3482 = vadd.f32 0.0, %v3481
      %v3483 = vpop.f32.mrf.mxu0
      %3484 = vmatprep.mubr.bf16.mxu0 0
      %3485 = vmatmul.mubr.bf16.gmra.mxu0 %v3372
      %v3486 = vpop.f32.mrf.mxu0
      %v3487 = vadd.f32 0.0, %v3486
      %v3488 = vpop.f32.mrf.mxu0
      %v3489 = vpop.f32.mrf.mxu0
      %v3490 = vadd.f32 0.0, %v3489
      %v3491 = vpop.f32.mrf.mxu0
      %3492 = vmatprep.mubr.bf16.mxu0 0
      %3493 = vmatmul.mubr.bf16.gmra.mxu0 %v3375
      %v3494 = vpop.f32.mrf.mxu0
      %v3495 = vadd.f32 0.0, %v3494
      %v3496 = vpop.f32.mrf.mxu0
      %v3497 = vpop.f32.mrf.mxu0
      %v3498 = vadd.f32 0.0, %v3497
      %v3499 = vpop.f32.mrf.mxu0
      %3500 = vmatprep.mubr.bf16.mxu0 0
      %3501 = vmatmul.mubr.bf16.gmra.mxu0 %v3378
      %v3502 = vpop.f32.mrf.mxu0
      %v3503 = vadd.f32 0.0, %v3502
      %v3504 = vpop.f32.mrf.mxu0
      %v3505 = vpop.f32.mrf.mxu0
      %v3506 = vadd.f32 0.0, %v3505
      %v3507 = vpop.f32.mrf.mxu0
      %3508 = vmatprep.mubr.bf16.mxu0 0
      %3509 = vmatmul.mubr.bf16.gmra.mxu0 %v3381
      %v3510 = vpop.f32.mrf.mxu0
      %v3511 = vadd.f32 0.0, %v3510
      %v3512 = vpop.f32.mrf.mxu0
      %v3513 = vpop.f32.mrf.mxu0
      %v3514 = vadd.f32 0.0, %v3513
      %v3515 = vpop.f32.mrf.mxu0
      %3516 = vmatprep.mubr.bf16.mxu0 0
      %3517 = vmatmul.mubr.bf16.gmra.mxu0 %v3384
      %v3518 = vpop.f32.mrf.mxu0
      %v3519 = vadd.f32 0.0, %v3518
      %v3520 = vpop.f32.mrf.mxu0
      %v3521 = vpop.f32.mrf.mxu0
      %v3522 = vadd.f32 0.0, %v3521
      %v3523 = vpop.f32.mrf.mxu0
      %3524 = vmatprep.mubr.bf16.mxu0 0
      %3525 = vmatmul.mubr.bf16.gmra.mxu0 %v3387
      %v3526 = vpop.f32.mrf.mxu0
      %v3527 = vadd.f32 0.0, %v3526
      %v3528 = vpop.f32.mrf.mxu0
      %v3529 = vpop.f32.mrf.mxu0
      %v3530 = vadd.f32 0.0, %v3529
      %v3531 = vpop.f32.mrf.mxu0
      %3532 = vmatprep.mubr.bf16.mxu0 0
      %3533 = vmatmul.mubr.bf16.gmra.mxu0 %v3390
      %v3534 = vpop.f32.mrf.mxu0
      %v3535 = vadd.f32 0.0, %v3534
      %v3536 = vpop.f32.mrf.mxu0
      %v3537 = vpop.f32.mrf.mxu0
      %v3538 = vadd.f32 0.0, %v3537
      %v3539 = vpop.f32.mrf.mxu0
      %3540 = vmatprep.mubr.bf16.mxu0 0
      %3541 = vmatmul.mubr.bf16.gmra.mxu0 %v3393
      %v3542 = vpop.f32.mrf.mxu0
      %v3543 = vadd.f32 0.0, %v3542
      %v3544 = vpop.f32.mrf.mxu0
      %v3545 = vpop.f32.mrf.mxu0
      %v3546 = vadd.f32 0.0, %v3545
      %v3547 = vpop.f32.mrf.mxu0
      %3548 = vmatprep.mubr.bf16.mxu0 0
      %3549 = vmatmul.mubr.bf16.gmra.mxu0 %v3396
      %v3550 = vpop.f32.mrf.mxu0
      %v3551 = vadd.f32 0.0, %v3550
      %v3552 = vpop.f32.mrf.mxu0
      %v3553 = vpop.f32.mrf.mxu0
      %v3554 = vadd.f32 0.0, %v3553
      %v3555 = vpop.f32.mrf.mxu0
      %3556 = vmatprep.mubr.bf16.mxu0 0
      %3557 = vmatmul.mubr.bf16.gmra.mxu0 %v3399
      %v3558 = vpop.f32.mrf.mxu0
      %v3559 = vadd.f32 0.0, %v3558
      %v3560 = vpop.f32.mrf.mxu0
      %v3561 = vpop.f32.mrf.mxu0
      %v3562 = vadd.f32 0.0, %v3561
      %v3563 = vpop.f32.mrf.mxu0
      %3564 = vdwg.mxu0
      %v3565 = vsel %vm205, %v3011, 0
      %v3567 = vsel %vm205, %v3013, 0
      %v3569 = vsel %vm205, %v3015, 0
      %v3571 = vsel %vm205, %v3017, 0
      %v3573 = vsel %vm205, %v3019, 0
      %v3575 = vsel %vm205, %v3021, 0
      %v3577 = vsel %vm205, %v3023, 0
      %v3579 = vsel %vm205, %v3025, 0
      %v3581 = vsel %vm205, %v3027, 0
      %v3583 = vsel %vm205, %v3029, 0
      %v3585 = vsel %vm205, %v3031, 0
      %v3587 = vsel %vm205, %v3033, 0
      %v3589 = vsel %vm205, %v3035, 0
      %v3591 = vsel %vm205, %v3037, 0
      %v3593 = vsel %vm205, %v3039, 0
      %v3595 = vsel %vm205, %v3041, 0
      %v3598 = vsel %vm771, %v2948, 0
      %3600 = vmatprep.subr.bf16.mxu0 0
      %3601 = vmatpush1.bf16.msra.mxu0 0
      %3602 = vmatprep.subr.bf16.mxu0 0
      %3603 = vmatpush1.bf16.msra.mxu0 0
      %3604 = vmatprep.subr.bf16.mxu0 0
      %3605 = vmatpush1.bf16.msra.mxu0 0
      %3606 = vmatprep.subr.bf16.mxu0 0
      %3607 = vmatpush1.bf16.msra.mxu0 0
      %3608 = vmatprep.subr.bf16.mxu0 0
      %3609 = vmatpush1.bf16.msra.mxu0 0
      %3610 = vmatprep.subr.bf16.mxu0 0
      %3611 = vmatpush1.bf16.msra.mxu0 0
      %3612 = vmatprep.subr.bf16.mxu0 0
      %3613 = vmatpush1.bf16.msra.mxu0 0
      %3614 = vmatprep.subr.bf16.mxu0 0
      %3615 = vmatpush1.bf16.msra.mxu0 %v3598
      %3616 = vmatprep.subr.bf16.mxu0 0
      %3617 = vmatpush2.bf16.msra.mxu0 0
      %3618 = vmatprep.subr.bf16.mxu0 0
      %3619 = vmatpush2.bf16.msra.mxu0 0
      %3620 = vmatprep.subr.bf16.mxu0 0
      %3621 = vmatpush2.bf16.msra.mxu0 0
      %3622 = vmatprep.subr.bf16.mxu0 0
      %3623 = vmatpush2.bf16.msra.mxu0 0
      %3624 = vmatprep.subr.bf16.mxu0 0
      %3625 = vmatpush2.bf16.msra.mxu0 0
      %3626 = vmatprep.subr.bf16.mxu0 0
      %3627 = vmatpush2.bf16.msra.mxu0 0
      %3628 = vmatprep.subr.bf16.mxu0 0
      %3629 = vmatpush2.bf16.msra.mxu0 0
      %3630 = vmatprep.subr.bf16.mxu0 0
      %3631 = vmatpush2.bf16.msra.mxu0 0
      %3632 = vmatprep.mubr.bf16.mxu0 0
      %3633 = vmatmul.mubr.bf16.gmra.mxu0 %v3565
      %v3634 = vpop.f32.mrf.mxu0
      %v3635 = vadd.f32 %v3439, %v3634
      %v3636 = vpop.f32.mrf.mxu0
      %v3637 = vpop.f32.mrf.mxu0
      %v3638 = vadd.f32 %v3442, %v3637
      %v3639 = vpop.f32.mrf.mxu0
      %3640 = vmatprep.mubr.bf16.mxu0 0
      %3641 = vmatmul.mubr.bf16.gmra.mxu0 %v3567
      %v3642 = vpop.f32.mrf.mxu0
      %v3643 = vadd.f32 %v3447, %v3642
      %v3644 = vpop.f32.mrf.mxu0
      %v3645 = vpop.f32.mrf.mxu0
      %v3646 = vadd.f32 %v3450, %v3645
      %v3647 = vpop.f32.mrf.mxu0
      %3648 = vmatprep.mubr.bf16.mxu0 0
      %3649 = vmatmul.mubr.bf16.gmra.mxu0 %v3569
      %v3650 = vpop.f32.mrf.mxu0
      %v3651 = vadd.f32 %v3455, %v3650
      %v3652 = vpop.f32.mrf.mxu0
      %v3653 = vpop.f32.mrf.mxu0
      %v3654 = vadd.f32 %v3458, %v3653
      %v3655 = vpop.f32.mrf.mxu0
      %3656 = vmatprep.mubr.bf16.mxu0 0
      %3657 = vmatmul.mubr.bf16.gmra.mxu0 %v3571
      %v3658 = vpop.f32.mrf.mxu0
      %v3659 = vadd.f32 %v3463, %v3658
      %v3660 = vpop.f32.mrf.mxu0
      %v3661 = vpop.f32.mrf.mxu0
      %v3662 = vadd.f32 %v3466, %v3661
      %v3663 = vpop.f32.mrf.mxu0
      %3664 = vmatprep.mubr.bf16.mxu0 0
      %3665 = vmatmul.mubr.bf16.gmra.mxu0 %v3573
      %v3666 = vpop.f32.mrf.mxu0
      %v3667 = vadd.f32 %v3471, %v3666
      %v3668 = vpop.f32.mrf.mxu0
      %v3669 = vpop.f32.mrf.mxu0
      %v3670 = vadd.f32 %v3474, %v3669
      %v3671 = vpop.f32.mrf.mxu0
      %3672 = vmatprep.mubr.bf16.mxu0 0
      %3673 = vmatmul.mubr.bf16.gmra.mxu0 %v3575
      %v3674 = vpop.f32.mrf.mxu0
      %v3675 = vadd.f32 %v3479, %v3674
      %v3676 = vpop.f32.mrf.mxu0
      %v3677 = vpop.f32.mrf.mxu0
      %v3678 = vadd.f32 %v3482, %v3677
      %v3679 = vpop.f32.mrf.mxu0
      %3680 = vmatprep.mubr.bf16.mxu0 0
      %3681 = vmatmul.mubr.bf16.gmra.mxu0 %v3577
      %v3682 = vpop.f32.mrf.mxu0
      %v3683 = vadd.f32 %v3487, %v3682
      %v3684 = vpop.f32.mrf.mxu0
      %v3685 = vpop.f32.mrf.mxu0
      %v3686 = vadd.f32 %v3490, %v3685
      %v3687 = vpop.f32.mrf.mxu0
      %3688 = vmatprep.mubr.bf16.mxu0 0
      %3689 = vmatmul.mubr.bf16.gmra.mxu0 %v3579
      %v3690 = vpop.f32.mrf.mxu0
      %v3691 = vadd.f32 %v3495, %v3690
      %v3692 = vpop.f32.mrf.mxu0
      %v3693 = vpop.f32.mrf.mxu0
      %v3694 = vadd.f32 %v3498, %v3693
      %v3695 = vpop.f32.mrf.mxu0
      %3696 = vmatprep.mubr.bf16.mxu0 0
      %3697 = vmatmul.mubr.bf16.gmra.mxu0 %v3581
      %v3698 = vpop.f32.mrf.mxu0
      %v3699 = vadd.f32 %v3503, %v3698
      %v3700 = vpop.f32.mrf.mxu0
      %v3701 = vpop.f32.mrf.mxu0
      %v3702 = vadd.f32 %v3506, %v3701
      %v3703 = vpop.f32.mrf.mxu0
      %3704 = vmatprep.mubr.bf16.mxu0 0
      %3705 = vmatmul.mubr.bf16.gmra.mxu0 %v3583
      %v3706 = vpop.f32.mrf.mxu0
      %v3707 = vadd.f32 %v3511, %v3706
      %v3708 = vpop.f32.mrf.mxu0
      %v3709 = vpop.f32.mrf.mxu0
      %v3710 = vadd.f32 %v3514, %v3709
      %v3711 = vpop.f32.mrf.mxu0
      %3712 = vmatprep.mubr.bf16.mxu0 0
      %3713 = vmatmul.mubr.bf16.gmra.mxu0 %v3585
      %v3714 = vpop.f32.mrf.mxu0
      %v3715 = vadd.f32 %v3519, %v3714
      %v3716 = vpop.f32.mrf.mxu0
      %v3717 = vpop.f32.mrf.mxu0
      %v3718 = vadd.f32 %v3522, %v3717
      %v3719 = vpop.f32.mrf.mxu0
      %3720 = vmatprep.mubr.bf16.mxu0 0
      %3721 = vmatmul.mubr.bf16.gmra.mxu0 %v3587
      %v3722 = vpop.f32.mrf.mxu0
      %v3723 = vadd.f32 %v3527, %v3722
      %v3724 = vpop.f32.mrf.mxu0
      %v3725 = vpop.f32.mrf.mxu0
      %v3726 = vadd.f32 %v3530, %v3725
      %v3727 = vpop.f32.mrf.mxu0
      %3728 = vmatprep.mubr.bf16.mxu0 0
      %3729 = vmatmul.mubr.bf16.gmra.mxu0 %v3589
      %v3730 = vpop.f32.mrf.mxu0
      %v3731 = vadd.f32 %v3535, %v3730
      %v3732 = vpop.f32.mrf.mxu0
      %v3733 = vpop.f32.mrf.mxu0
      %v3734 = vadd.f32 %v3538, %v3733
      %v3735 = vpop.f32.mrf.mxu0
      %3736 = vmatprep.mubr.bf16.mxu0 0
      %3737 = vmatmul.mubr.bf16.gmra.mxu0 %v3591
      %v3738 = vpop.f32.mrf.mxu0
      %v3739 = vadd.f32 %v3543, %v3738
      %v3740 = vpop.f32.mrf.mxu0
      %v3741 = vpop.f32.mrf.mxu0
      %v3742 = vadd.f32 %v3546, %v3741
      %v3743 = vpop.f32.mrf.mxu0
      %3744 = vmatprep.mubr.bf16.mxu0 0
      %3745 = vmatmul.mubr.bf16.gmra.mxu0 %v3593
      %v3746 = vpop.f32.mrf.mxu0
      %v3747 = vadd.f32 %v3551, %v3746
      %v3748 = vpop.f32.mrf.mxu0
      %v3749 = vpop.f32.mrf.mxu0
      %v3750 = vadd.f32 %v3554, %v3749
      %v3751 = vpop.f32.mrf.mxu0
      %3752 = vmatprep.mubr.bf16.mxu0 0
      %3753 = vmatmul.mubr.bf16.gmra.mxu0 %v3595
      %v3754 = vpop.f32.mrf.mxu0
      %v3755 = vadd.f32 %v3559, %v3754
      %v3756 = vpop.f32.mrf.mxu0
      %v3757 = vpop.f32.mrf.mxu0
      %v3758 = vadd.f32 %v3562, %v3757
      %v3759 = vpop.f32.mrf.mxu0
      %3760 = vdwg.mxu0
      %v3762 = vsel %vm205, %v3301, 0
      %v3765 = vsel %vm205, %v3304, 0
      %v3768 = vsel %vm205, %v3307, 0
      %v3771 = vsel %vm205, %v3310, 0
      %v3774 = vsel %vm205, %v3313, 0
      %v3777 = vsel %vm205, %v3316, 0
      %v3780 = vsel %vm205, %v3319, 0
      %v3783 = vsel %vm205, %v3322, 0
      %v3786 = vsel %vm205, %v3325, 0
      %v3789 = vsel %vm205, %v3328, 0
      %v3792 = vsel %vm205, %v3331, 0
      %v3795 = vsel %vm205, %v3334, 0
      %v3798 = vsel %vm205, %v3337, 0
      %v3801 = vsel %vm205, %v3340, 0
      %v3804 = vsel %vm205, %v3343, 0
      %v3807 = vsel %vm205, %v3346, 0
      %v3810 = vsel %vm771, %v2950, 0
      %3812 = vmatprep.subr.bf16.mxu0 0
      %3813 = vmatpush1.bf16.msra.mxu0 0
      %3814 = vmatprep.subr.bf16.mxu0 0
      %3815 = vmatpush1.bf16.msra.mxu0 0
      %3816 = vmatprep.subr.bf16.mxu0 0
      %3817 = vmatpush1.bf16.msra.mxu0 0
      %3818 = vmatprep.subr.bf16.mxu0 0
      %3819 = vmatpush1.bf16.msra.mxu0 0
      %3820 = vmatprep.subr.bf16.mxu0 0
      %3821 = vmatpush1.bf16.msra.mxu0 0
      %3822 = vmatprep.subr.bf16.mxu0 0
      %3823 = vmatpush1.bf16.msra.mxu0 0
      %3824 = vmatprep.subr.bf16.mxu0 0
      %3825 = vmatpush1.bf16.msra.mxu0 0
      %3826 = vmatprep.subr.bf16.mxu0 0
      %3827 = vmatpush1.bf16.msra.mxu0 %v3810
      %3828 = vmatprep.subr.bf16.mxu0 0
      %3829 = vmatpush2.bf16.msra.mxu0 0
      %3830 = vmatprep.subr.bf16.mxu0 0
      %3831 = vmatpush2.bf16.msra.mxu0 0
      %3832 = vmatprep.subr.bf16.mxu0 0
      %3833 = vmatpush2.bf16.msra.mxu0 0
      %3834 = vmatprep.subr.bf16.mxu0 0
      %3835 = vmatpush2.bf16.msra.mxu0 0
      %3836 = vmatprep.subr.bf16.mxu0 0
      %3837 = vmatpush2.bf16.msra.mxu0 0
      %3838 = vmatprep.subr.bf16.mxu0 0
      %3839 = vmatpush2.bf16.msra.mxu0 0
      %3840 = vmatprep.subr.bf16.mxu0 0
      %3841 = vmatpush2.bf16.msra.mxu0 0
      %3842 = vmatprep.subr.bf16.mxu0 0
      %3843 = vmatpush2.bf16.msra.mxu0 0
      %3844 = vmatprep.mubr.bf16.mxu0 0
      %3845 = vmatmul.mubr.bf16.gmra.mxu0 %v3762
      %v3846 = vpop.f32.mrf.mxu0
      %v3847 = vadd.f32 0.0, %v3846
      %v3848 = vpop.f32.mrf.mxu0
      %v3849 = vpop.f32.mrf.mxu0
      %v3850 = vadd.f32 0.0, %v3849
      %v3851 = vpop.f32.mrf.mxu0
      %3852 = vmatprep.mubr.bf16.mxu0 0
      %3853 = vmatmul.mubr.bf16.gmra.mxu0 %v3765
      %v3854 = vpop.f32.mrf.mxu0
      %v3855 = vadd.f32 0.0, %v3854
      %v3856 = vpop.f32.mrf.mxu0
      %v3857 = vpop.f32.mrf.mxu0
      %v3858 = vadd.f32 0.0, %v3857
      %v3859 = vpop.f32.mrf.mxu0
      %3860 = vmatprep.mubr.bf16.mxu0 0
      %3861 = vmatmul.mubr.bf16.gmra.mxu0 %v3768
      %v3862 = vpop.f32.mrf.mxu0
      %v3863 = vadd.f32 0.0, %v3862
      %v3864 = vpop.f32.mrf.mxu0
      %v3865 = vpop.f32.mrf.mxu0
      %v3866 = vadd.f32 0.0, %v3865
      %v3867 = vpop.f32.mrf.mxu0
      %3868 = vmatprep.mubr.bf16.mxu0 0
      %3869 = vmatmul.mubr.bf16.gmra.mxu0 %v3771
      %v3870 = vpop.f32.mrf.mxu0
      %v3871 = vadd.f32 0.0, %v3870
      %v3872 = vpop.f32.mrf.mxu0
      %v3873 = vpop.f32.mrf.mxu0
      %v3874 = vadd.f32 0.0, %v3873
      %v3875 = vpop.f32.mrf.mxu0
      %3876 = vmatprep.mubr.bf16.mxu0 0
      %3877 = vmatmul.mubr.bf16.gmra.mxu0 %v3774
      %v3878 = vpop.f32.mrf.mxu0
      %v3879 = vadd.f32 0.0, %v3878
      %v3880 = vpop.f32.mrf.mxu0
      %v3881 = vpop.f32.mrf.mxu0
      %v3882 = vadd.f32 0.0, %v3881
      %v3883 = vpop.f32.mrf.mxu0
      %3884 = vmatprep.mubr.bf16.mxu0 0
      %3885 = vmatmul.mubr.bf16.gmra.mxu0 %v3777
      %v3886 = vpop.f32.mrf.mxu0
      %v3887 = vadd.f32 0.0, %v3886
      %v3888 = vpop.f32.mrf.mxu0
      %v3889 = vpop.f32.mrf.mxu0
      %v3890 = vadd.f32 0.0, %v3889
      %v3891 = vpop.f32.mrf.mxu0
      %3892 = vmatprep.mubr.bf16.mxu0 0
      %3893 = vmatmul.mubr.bf16.gmra.mxu0 %v3780
      %v3894 = vpop.f32.mrf.mxu0
      %v3895 = vadd.f32 0.0, %v3894
      %v3896 = vpop.f32.mrf.mxu0
      %v3897 = vpop.f32.mrf.mxu0
      %v3898 = vadd.f32 0.0, %v3897
      %v3899 = vpop.f32.mrf.mxu0
      %3900 = vmatprep.mubr.bf16.mxu0 0
      %3901 = vmatmul.mubr.bf16.gmra.mxu0 %v3783
      %v3902 = vpop.f32.mrf.mxu0
      %v3903 = vadd.f32 0.0, %v3902
      %v3904 = vpop.f32.mrf.mxu0
      %v3905 = vpop.f32.mrf.mxu0
      %v3906 = vadd.f32 0.0, %v3905
      %v3907 = vpop.f32.mrf.mxu0
      %3908 = vmatprep.mubr.bf16.mxu0 0
      %3909 = vmatmul.mubr.bf16.gmra.mxu0 %v3786
      %v3910 = vpop.f32.mrf.mxu0
      %v3911 = vadd.f32 0.0, %v3910
      %v3912 = vpop.f32.mrf.mxu0
      %v3913 = vpop.f32.mrf.mxu0
      %v3914 = vadd.f32 0.0, %v3913
      %v3915 = vpop.f32.mrf.mxu0
      %3916 = vmatprep.mubr.bf16.mxu0 0
      %3917 = vmatmul.mubr.bf16.gmra.mxu0 %v3789
      %v3918 = vpop.f32.mrf.mxu0
      %v3919 = vadd.f32 0.0, %v3918
      %v3920 = vpop.f32.mrf.mxu0
      %v3921 = vpop.f32.mrf.mxu0
      %v3922 = vadd.f32 0.0, %v3921
      %v3923 = vpop.f32.mrf.mxu0
      %3924 = vmatprep.mubr.bf16.mxu0 0
      %3925 = vmatmul.mubr.bf16.gmra.mxu0 %v3792
      %v3926 = vpop.f32.mrf.mxu0
      %v3927 = vadd.f32 0.0, %v3926
      %v3928 = vpop.f32.mrf.mxu0
      %v3929 = vpop.f32.mrf.mxu0
      %v3930 = vadd.f32 0.0, %v3929
      %v3931 = vpop.f32.mrf.mxu0
      %3932 = vmatprep.mubr.bf16.mxu0 0
      %3933 = vmatmul.mubr.bf16.gmra.mxu0 %v3795
      %v3934 = vpop.f32.mrf.mxu0
      %v3935 = vadd.f32 0.0, %v3934
      %v3936 = vpop.f32.mrf.mxu0
      %v3937 = vpop.f32.mrf.mxu0
      %v3938 = vadd.f32 0.0, %v3937
      %v3939 = vpop.f32.mrf.mxu0
      %3940 = vmatprep.mubr.bf16.mxu0 0
      %3941 = vmatmul.mubr.bf16.gmra.mxu0 %v3798
      %v3942 = vpop.f32.mrf.mxu0
      %v3943 = vadd.f32 0.0, %v3942
      %v3944 = vpop.f32.mrf.mxu0
      %v3945 = vpop.f32.mrf.mxu0
      %v3946 = vadd.f32 0.0, %v3945
      %v3947 = vpop.f32.mrf.mxu0
      %3948 = vmatprep.mubr.bf16.mxu0 0
      %3949 = vmatmul.mubr.bf16.gmra.mxu0 %v3801
      %v3950 = vpop.f32.mrf.mxu0
      %v3951 = vadd.f32 0.0, %v3950
      %v3952 = vpop.f32.mrf.mxu0
      %v3953 = vpop.f32.mrf.mxu0
      %v3954 = vadd.f32 0.0, %v3953
      %v3955 = vpop.f32.mrf.mxu0
      %3956 = vmatprep.mubr.bf16.mxu0 0
      %3957 = vmatmul.mubr.bf16.gmra.mxu0 %v3804
      %v3958 = vpop.f32.mrf.mxu0
      %v3959 = vadd.f32 0.0, %v3958
      %v3960 = vpop.f32.mrf.mxu0
      %v3961 = vpop.f32.mrf.mxu0
      %v3962 = vadd.f32 0.0, %v3961
      %v3963 = vpop.f32.mrf.mxu0
      %3964 = vmatprep.mubr.bf16.mxu0 0
      %3965 = vmatmul.mubr.bf16.gmra.mxu0 %v3807
      %v3966 = vpop.f32.mrf.mxu0
      %v3967 = vadd.f32 0.0, %v3966
      %v3968 = vpop.f32.mrf.mxu0
      %v3969 = vpop.f32.mrf.mxu0
      %v3970 = vadd.f32 0.0, %v3969
      %v3971 = vpop.f32.mrf.mxu0
      %3972 = vdwg.mxu0
      %v3973 = vadd.f32 %v3635, %v3847
      %v3974 = vadd.f32 %v3638, %v3850
      %v3975 = vadd.f32 %v3643, %v3855
      %v3976 = vadd.f32 %v3646, %v3858
      %v3977 = vadd.f32 %v3651, %v3863
      %v3978 = vadd.f32 %v3654, %v3866
      %v3979 = vadd.f32 %v3659, %v3871
      %v3980 = vadd.f32 %v3662, %v3874
      %v3981 = vadd.f32 %v3667, %v3879
      %v3982 = vadd.f32 %v3670, %v3882
      %v3983 = vadd.f32 %v3675, %v3887
      %v3984 = vadd.f32 %v3678, %v3890
      %v3985 = vadd.f32 %v3683, %v3895
      %v3986 = vadd.f32 %v3686, %v3898
      %v3987 = vadd.f32 %v3691, %v3903
      %v3988 = vadd.f32 %v3694, %v3906
      %v3989 = vadd.f32 %v3699, %v3911
      %v3990 = vadd.f32 %v3702, %v3914
      %v3991 = vadd.f32 %v3707, %v3919
      %v3992 = vadd.f32 %v3710, %v3922
      %v3993 = vadd.f32 %v3715, %v3927
      %v3994 = vadd.f32 %v3718, %v3930
      %v3995 = vadd.f32 %v3723, %v3935
      %v3996 = vadd.f32 %v3726, %v3938
      %v3997 = vadd.f32 %v3731, %v3943
      %v3998 = vadd.f32 %v3734, %v3946
      %v3999 = vadd.f32 %v3739, %v3951
      %v4000 = vadd.f32 %v3742, %v3954
      %v4001 = vadd.f32 %v3747, %v3959
      %v4002 = vadd.f32 %v3750, %v3962
      %v4003 = vadd.f32 %v3755, %v3967
      %v4004 = vadd.f32 %v3758, %v3970
      %v4005 = vsel %vm205, %v3043, 0
      %v4008 = vsel %vm771, %v2951, 0
      %4010 = vmatprep.subr.bf16.mxu0 0
      %4011 = vmatpush1.bf16.msra.mxu0 0
      %4012 = vmatprep.subr.bf16.mxu0 0
      %4013 = vmatpush1.bf16.msra.mxu0 0
      %4014 = vmatprep.subr.bf16.mxu0 0
      %4015 = vmatpush1.bf16.msra.mxu0 0
      %4016 = vmatprep.subr.bf16.mxu0 0
      %4017 = vmatpush1.bf16.msra.mxu0 0
      %4018 = vmatprep.subr.bf16.mxu0 0
      %4019 = vmatpush1.bf16.msra.mxu0 0
      %4020 = vmatprep.subr.bf16.mxu0 0
      %4021 = vmatpush1.bf16.msra.mxu0 0
      %4022 = vmatprep.subr.bf16.mxu0 0
      %4023 = vmatpush1.bf16.msra.mxu0 0
      %4024 = vmatprep.subr.bf16.mxu0 0
      %4025 = vmatpush1.bf16.msra.mxu0 %v4008
      %4026 = vmatprep.subr.bf16.mxu0 0
      %4027 = vmatpush2.bf16.msra.mxu0 0
      %4028 = vmatprep.subr.bf16.mxu0 0
      %4029 = vmatpush2.bf16.msra.mxu0 0
      %4030 = vmatprep.subr.bf16.mxu0 0
      %4031 = vmatpush2.bf16.msra.mxu0 0
      %4032 = vmatprep.subr.bf16.mxu0 0
      %4033 = vmatpush2.bf16.msra.mxu0 0
      %4034 = vmatprep.subr.bf16.mxu0 0
      %4035 = vmatpush2.bf16.msra.mxu0 0
      %4036 = vmatprep.subr.bf16.mxu0 0
      %4037 = vmatpush2.bf16.msra.mxu0 0
      %4038 = vmatprep.subr.bf16.mxu0 0
      %4039 = vmatpush2.bf16.msra.mxu0 0
      %4040 = vmatprep.subr.bf16.mxu0 0
      %4041 = vmatpush2.bf16.msra.mxu0 0
      %4042 = vmatprep.mubr.bf16.mxu0 0
      %4043 = vmatmul.mubr.bf16.gmra.mxu0 %v3567
      %v4044 = vpop.f32.mrf.mxu0
      %v4045 = vadd.f32 0.0, %v4044
      %v4046 = vpop.f32.mrf.mxu0
      %v4047 = vpop.f32.mrf.mxu0
      %v4048 = vadd.f32 0.0, %v4047
      %v4049 = vpop.f32.mrf.mxu0
      %4050 = vmatprep.mubr.bf16.mxu0 0
      %4051 = vmatmul.mubr.bf16.gmra.mxu0 %v3569
      %v4052 = vpop.f32.mrf.mxu0
      %v4053 = vadd.f32 0.0, %v4052
      %v4054 = vpop.f32.mrf.mxu0
      %v4055 = vpop.f32.mrf.mxu0
      %v4056 = vadd.f32 0.0, %v4055
      %v4057 = vpop.f32.mrf.mxu0
      %4058 = vmatprep.mubr.bf16.mxu0 0
      %4059 = vmatmul.mubr.bf16.gmra.mxu0 %v3571
      %v4060 = vpop.f32.mrf.mxu0
      %v4061 = vadd.f32 0.0, %v4060
      %v4062 = vpop.f32.mrf.mxu0
      %v4063 = vpop.f32.mrf.mxu0
      %v4064 = vadd.f32 0.0, %v4063
      %v4065 = vpop.f32.mrf.mxu0
      %4066 = vmatprep.mubr.bf16.mxu0 0
      %4067 = vmatmul.mubr.bf16.gmra.mxu0 %v3573
      %v4068 = vpop.f32.mrf.mxu0
      %v4069 = vadd.f32 0.0, %v4068
      %v4070 = vpop.f32.mrf.mxu0
      %v4071 = vpop.f32.mrf.mxu0
      %v4072 = vadd.f32 0.0, %v4071
      %v4073 = vpop.f32.mrf.mxu0
      %4074 = vmatprep.mubr.bf16.mxu0 0
      %4075 = vmatmul.mubr.bf16.gmra.mxu0 %v3575
      %v4076 = vpop.f32.mrf.mxu0
      %v4077 = vadd.f32 0.0, %v4076
      %v4078 = vpop.f32.mrf.mxu0
      %v4079 = vpop.f32.mrf.mxu0
      %v4080 = vadd.f32 0.0, %v4079
      %v4081 = vpop.f32.mrf.mxu0
      %4082 = vmatprep.mubr.bf16.mxu0 0
      %4083 = vmatmul.mubr.bf16.gmra.mxu0 %v3577
      %v4084 = vpop.f32.mrf.mxu0
      %v4085 = vadd.f32 0.0, %v4084
      %v4086 = vpop.f32.mrf.mxu0
      %v4087 = vpop.f32.mrf.mxu0
      %v4088 = vadd.f32 0.0, %v4087
      %v4089 = vpop.f32.mrf.mxu0
      %4090 = vmatprep.mubr.bf16.mxu0 0
      %4091 = vmatmul.mubr.bf16.gmra.mxu0 %v3579
      %v4092 = vpop.f32.mrf.mxu0
      %v4093 = vadd.f32 0.0, %v4092
      %v4094 = vpop.f32.mrf.mxu0
      %v4095 = vpop.f32.mrf.mxu0
      %v4096 = vadd.f32 0.0, %v4095
      %v4097 = vpop.f32.mrf.mxu0
      %4098 = vmatprep.mubr.bf16.mxu0 0
      %4099 = vmatmul.mubr.bf16.gmra.mxu0 %v3581
      %v4100 = vpop.f32.mrf.mxu0
      %v4101 = vadd.f32 0.0, %v4100
      %v4102 = vpop.f32.mrf.mxu0
      %v4103 = vpop.f32.mrf.mxu0
      %v4104 = vadd.f32 0.0, %v4103
      %v4105 = vpop.f32.mrf.mxu0
      %4106 = vmatprep.mubr.bf16.mxu0 0
      %4107 = vmatmul.mubr.bf16.gmra.mxu0 %v3583
      %v4108 = vpop.f32.mrf.mxu0
      %v4109 = vadd.f32 0.0, %v4108
      %v4110 = vpop.f32.mrf.mxu0
      %v4111 = vpop.f32.mrf.mxu0
      %v4112 = vadd.f32 0.0, %v4111
      %v4113 = vpop.f32.mrf.mxu0
      %4114 = vmatprep.mubr.bf16.mxu0 0
      %4115 = vmatmul.mubr.bf16.gmra.mxu0 %v3585
      %v4116 = vpop.f32.mrf.mxu0
      %v4117 = vadd.f32 0.0, %v4116
      %v4118 = vpop.f32.mrf.mxu0
      %v4119 = vpop.f32.mrf.mxu0
      %v4120 = vadd.f32 0.0, %v4119
      %v4121 = vpop.f32.mrf.mxu0
      %4122 = vmatprep.mubr.bf16.mxu0 0
      %4123 = vmatmul.mubr.bf16.gmra.mxu0 %v3587
      %v4124 = vpop.f32.mrf.mxu0
      %v4125 = vadd.f32 0.0, %v4124
      %v4126 = vpop.f32.mrf.mxu0
      %v4127 = vpop.f32.mrf.mxu0
      %v4128 = vadd.f32 0.0, %v4127
      %v4129 = vpop.f32.mrf.mxu0
      %4130 = vmatprep.mubr.bf16.mxu0 0
      %4131 = vmatmul.mubr.bf16.gmra.mxu0 %v3589
      %v4132 = vpop.f32.mrf.mxu0
      %v4133 = vadd.f32 0.0, %v4132
      %v4134 = vpop.f32.mrf.mxu0
      %v4135 = vpop.f32.mrf.mxu0
      %v4136 = vadd.f32 0.0, %v4135
      %v4137 = vpop.f32.mrf.mxu0
      %4138 = vmatprep.mubr.bf16.mxu0 0
      %4139 = vmatmul.mubr.bf16.gmra.mxu0 %v3591
      %v4140 = vpop.f32.mrf.mxu0
      %v4141 = vadd.f32 0.0, %v4140
      %v4142 = vpop.f32.mrf.mxu0
      %v4143 = vpop.f32.mrf.mxu0
      %v4144 = vadd.f32 0.0, %v4143
      %v4145 = vpop.f32.mrf.mxu0
      %4146 = vmatprep.mubr.bf16.mxu0 0
      %4147 = vmatmul.mubr.bf16.gmra.mxu0 %v3593
      %v4148 = vpop.f32.mrf.mxu0
      %v4149 = vadd.f32 0.0, %v4148
      %v4150 = vpop.f32.mrf.mxu0
      %v4151 = vpop.f32.mrf.mxu0
      %v4152 = vadd.f32 0.0, %v4151
      %v4153 = vpop.f32.mrf.mxu0
      %4154 = vmatprep.mubr.bf16.mxu0 0
      %4155 = vmatmul.mubr.bf16.gmra.mxu0 %v3595
      %v4156 = vpop.f32.mrf.mxu0
      %v4157 = vadd.f32 0.0, %v4156
      %v4158 = vpop.f32.mrf.mxu0
      %v4159 = vpop.f32.mrf.mxu0
      %v4160 = vadd.f32 0.0, %v4159
      %v4161 = vpop.f32.mrf.mxu0
      %4162 = vmatprep.mubr.bf16.mxu0 0
      %4163 = vmatmul.mubr.bf16.gmra.mxu0 %v4005
      %v4164 = vpop.f32.mrf.mxu0
      %v4165 = vadd.f32 0.0, %v4164
      %v4166 = vpop.f32.mrf.mxu0
      %v4167 = vpop.f32.mrf.mxu0
      %v4168 = vadd.f32 0.0, %v4167
      %v4169 = vpop.f32.mrf.mxu0
      %4170 = vdwg.mxu0
      %v4171 = vadd.f32 %v3973, %v4045
      %v4172 = vadd.f32 %v3974, %v4048
      %v4173 = vadd.f32 %v3975, %v4053
      %v4174 = vadd.f32 %v3976, %v4056
      %v4175 = vadd.f32 %v3977, %v4061
      %v4176 = vadd.f32 %v3978, %v4064
      %v4177 = vadd.f32 %v3979, %v4069
      %v4178 = vadd.f32 %v3980, %v4072
      %v4179 = vadd.f32 %v3981, %v4077
      %v4180 = vadd.f32 %v3982, %v4080
      %v4181 = vadd.f32 %v3983, %v4085
      %v4182 = vadd.f32 %v3984, %v4088
      %v4183 = vadd.f32 %v3985, %v4093
      %v4184 = vadd.f32 %v3986, %v4096
      %v4185 = vadd.f32 %v3987, %v4101
      %v4186 = vadd.f32 %v3988, %v4104
      %v4187 = vadd.f32 %v3989, %v4109
      %v4188 = vadd.f32 %v3990, %v4112
      %v4189 = vadd.f32 %v3991, %v4117
      %v4190 = vadd.f32 %v3992, %v4120
      %v4191 = vadd.f32 %v3993, %v4125
      %v4192 = vadd.f32 %v3994, %v4128
      %v4193 = vadd.f32 %v3995, %v4133
      %v4194 = vadd.f32 %v3996, %v4136
      %v4195 = vadd.f32 %v3997, %v4141
      %v4196 = vadd.f32 %v3998, %v4144
      %v4197 = vadd.f32 %v3999, %v4149
      %v4198 = vadd.f32 %v4000, %v4152
      %v4199 = vadd.f32 %v4001, %v4157
      %v4200 = vadd.f32 %v4002, %v4160
      %v4201 = vadd.f32 %v4003, %v4165
      %v4202 = vadd.f32 %v4004, %v4168
      %v4204 = vsel %vm205, %v3250, 0
      %v4207 = vsel %vm771, %v2952, 0
      %4209 = vmatprep.subr.bf16.mxu0 0
      %4210 = vmatpush1.bf16.msra.mxu0 0
      %4211 = vmatprep.subr.bf16.mxu0 0
      %4212 = vmatpush1.bf16.msra.mxu0 0
      %4213 = vmatprep.subr.bf16.mxu0 0
      %4214 = vmatpush1.bf16.msra.mxu0 0
      %4215 = vmatprep.subr.bf16.mxu0 0
      %4216 = vmatpush1.bf16.msra.mxu0 0
      %4217 = vmatprep.subr.bf16.mxu0 0
      %4218 = vmatpush1.bf16.msra.mxu0 0
      %4219 = vmatprep.subr.bf16.mxu0 0
      %4220 = vmatpush1.bf16.msra.mxu0 0
      %4221 = vmatprep.subr.bf16.mxu0 0
      %4222 = vmatpush1.bf16.msra.mxu0 0
      %4223 = vmatprep.subr.bf16.mxu0 0
      %4224 = vmatpush1.bf16.msra.mxu0 %v4207
      %4225 = vmatprep.subr.bf16.mxu0 0
      %4226 = vmatpush2.bf16.msra.mxu0 0
      %4227 = vmatprep.subr.bf16.mxu0 0
      %4228 = vmatpush2.bf16.msra.mxu0 0
      %4229 = vmatprep.subr.bf16.mxu0 0
      %4230 = vmatpush2.bf16.msra.mxu0 0
      %4231 = vmatprep.subr.bf16.mxu0 0
      %4232 = vmatpush2.bf16.msra.mxu0 0
      %4233 = vmatprep.subr.bf16.mxu0 0
      %4234 = vmatpush2.bf16.msra.mxu0 0
      %4235 = vmatprep.subr.bf16.mxu0 0
      %4236 = vmatpush2.bf16.msra.mxu0 0
      %4237 = vmatprep.subr.bf16.mxu0 0
      %4238 = vmatpush2.bf16.msra.mxu0 0
      %4239 = vmatprep.subr.bf16.mxu0 0
      %4240 = vmatpush2.bf16.msra.mxu0 0
      %4241 = vmatprep.mubr.bf16.mxu0 0
      %4242 = vmatmul.mubr.bf16.gmra.mxu0 %v3357
      %v4243 = vpop.f32.mrf.mxu0
      %v4244 = vadd.f32 0.0, %v4243
      %v4245 = vpop.f32.mrf.mxu0
      %v4246 = vpop.f32.mrf.mxu0
      %v4247 = vadd.f32 0.0, %v4246
      %v4248 = vpop.f32.mrf.mxu0
      %4249 = vmatprep.mubr.bf16.mxu0 0
      %4250 = vmatmul.mubr.bf16.gmra.mxu0 %v3360
      %v4251 = vpop.f32.mrf.mxu0
      %v4252 = vadd.f32 0.0, %v4251
      %v4253 = vpop.f32.mrf.mxu0
      %v4254 = vpop.f32.mrf.mxu0
      %v4255 = vadd.f32 0.0, %v4254
      %v4256 = vpop.f32.mrf.mxu0
      %4257 = vmatprep.mubr.bf16.mxu0 0
      %4258 = vmatmul.mubr.bf16.gmra.mxu0 %v3363
      %v4259 = vpop.f32.mrf.mxu0
      %v4260 = vadd.f32 0.0, %v4259
      %v4261 = vpop.f32.mrf.mxu0
      %v4262 = vpop.f32.mrf.mxu0
      %v4263 = vadd.f32 0.0, %v4262
      %v4264 = vpop.f32.mrf.mxu0
      %4265 = vmatprep.mubr.bf16.mxu0 0
      %4266 = vmatmul.mubr.bf16.gmra.mxu0 %v3366
      %v4267 = vpop.f32.mrf.mxu0
      %v4268 = vadd.f32 0.0, %v4267
      %v4269 = vpop.f32.mrf.mxu0
      %v4270 = vpop.f32.mrf.mxu0
      %v4271 = vadd.f32 0.0, %v4270
      %v4272 = vpop.f32.mrf.mxu0
      %4273 = vmatprep.mubr.bf16.mxu0 0
      %4274 = vmatmul.mubr.bf16.gmra.mxu0 %v3369
      %v4275 = vpop.f32.mrf.mxu0
      %v4276 = vadd.f32 0.0, %v4275
      %v4277 = vpop.f32.mrf.mxu0
      %v4278 = vpop.f32.mrf.mxu0
      %v4279 = vadd.f32 0.0, %v4278
      %v4280 = vpop.f32.mrf.mxu0
      %4281 = vmatprep.mubr.bf16.mxu0 0
      %4282 = vmatmul.mubr.bf16.gmra.mxu0 %v3372
      %v4283 = vpop.f32.mrf.mxu0
      %v4284 = vadd.f32 0.0, %v4283
      %v4285 = vpop.f32.mrf.mxu0
      %v4286 = vpop.f32.mrf.mxu0
      %v4287 = vadd.f32 0.0, %v4286
      %v4288 = vpop.f32.mrf.mxu0
      %4289 = vmatprep.mubr.bf16.mxu0 0
      %4290 = vmatmul.mubr.bf16.gmra.mxu0 %v3375
      %v4291 = vpop.f32.mrf.mxu0
      %v4292 = vadd.f32 0.0, %v4291
      %v4293 = vpop.f32.mrf.mxu0
      %v4294 = vpop.f32.mrf.mxu0
      %v4295 = vadd.f32 0.0, %v4294
      %v4296 = vpop.f32.mrf.mxu0
      %4297 = vmatprep.mubr.bf16.mxu0 0
      %4298 = vmatmul.mubr.bf16.gmra.mxu0 %v3378
      %v4299 = vpop.f32.mrf.mxu0
      %v4300 = vadd.f32 0.0, %v4299
      %v4301 = vpop.f32.mrf.mxu0
      %v4302 = vpop.f32.mrf.mxu0
      %v4303 = vadd.f32 0.0, %v4302
      %v4304 = vpop.f32.mrf.mxu0
      %4305 = vmatprep.mubr.bf16.mxu0 0
      %4306 = vmatmul.mubr.bf16.gmra.mxu0 %v3381
      %v4307 = vpop.f32.mrf.mxu0
      %v4308 = vadd.f32 0.0, %v4307
      %v4309 = vpop.f32.mrf.mxu0
      %v4310 = vpop.f32.mrf.mxu0
      %v4311 = vadd.f32 0.0, %v4310
      %v4312 = vpop.f32.mrf.mxu0
      %4313 = vmatprep.mubr.bf16.mxu0 0
      %4314 = vmatmul.mubr.bf16.gmra.mxu0 %v3384
      %v4315 = vpop.f32.mrf.mxu0
      %v4316 = vadd.f32 0.0, %v4315
      %v4317 = vpop.f32.mrf.mxu0
      %v4318 = vpop.f32.mrf.mxu0
      %v4319 = vadd.f32 0.0, %v4318
      %v4320 = vpop.f32.mrf.mxu0
      %4321 = vmatprep.mubr.bf16.mxu0 0
      %4322 = vmatmul.mubr.bf16.gmra.mxu0 %v3387
      %v4323 = vpop.f32.mrf.mxu0
      %v4324 = vadd.f32 0.0, %v4323
      %v4325 = vpop.f32.mrf.mxu0
      %v4326 = vpop.f32.mrf.mxu0
      %v4327 = vadd.f32 0.0, %v4326
      %v4328 = vpop.f32.mrf.mxu0
      %4329 = vmatprep.mubr.bf16.mxu0 0
      %4330 = vmatmul.mubr.bf16.gmra.mxu0 %v3390
      %v4331 = vpop.f32.mrf.mxu0
      %v4332 = vadd.f32 0.0, %v4331
      %v4333 = vpop.f32.mrf.mxu0
      %v4334 = vpop.f32.mrf.mxu0
      %v4335 = vadd.f32 0.0, %v4334
      %v4336 = vpop.f32.mrf.mxu0
      %4337 = vmatprep.mubr.bf16.mxu0 0
      %4338 = vmatmul.mubr.bf16.gmra.mxu0 %v3393
      %v4339 = vpop.f32.mrf.mxu0
      %v4340 = vadd.f32 0.0, %v4339
      %v4341 = vpop.f32.mrf.mxu0
      %v4342 = vpop.f32.mrf.mxu0
      %v4343 = vadd.f32 0.0, %v4342
      %v4344 = vpop.f32.mrf.mxu0
      %4345 = vmatprep.mubr.bf16.mxu0 0
      %4346 = vmatmul.mubr.bf16.gmra.mxu0 %v3396
      %v4347 = vpop.f32.mrf.mxu0
      %v4348 = vadd.f32 0.0, %v4347
      %v4349 = vpop.f32.mrf.mxu0
      %v4350 = vpop.f32.mrf.mxu0
      %v4351 = vadd.f32 0.0, %v4350
      %v4352 = vpop.f32.mrf.mxu0
      %4353 = vmatprep.mubr.bf16.mxu0 0
      %4354 = vmatmul.mubr.bf16.gmra.mxu0 %v3399
      %v4355 = vpop.f32.mrf.mxu0
      %v4356 = vadd.f32 0.0, %v4355
      %v4357 = vpop.f32.mrf.mxu0
      %v4358 = vpop.f32.mrf.mxu0
      %v4359 = vadd.f32 0.0, %v4358
      %v4360 = vpop.f32.mrf.mxu0
      %4361 = vmatprep.mubr.bf16.mxu0 0
      %4362 = vmatmul.mubr.bf16.gmra.mxu0 %v4204
      %v4363 = vpop.f32.mrf.mxu0
      %v4364 = vadd.f32 0.0, %v4363
      %v4365 = vpop.f32.mrf.mxu0
      %v4366 = vpop.f32.mrf.mxu0
      %v4367 = vadd.f32 0.0, %v4366
      %v4368 = vpop.f32.mrf.mxu0
      %4369 = vdwg.mxu0
      %v4370 = vadd.f32 %v4171, %v4244
      %v4371 = vadd.f32 %v4172, %v4247
      %v4372 = vadd.f32 %v4173, %v4252
      %v4373 = vadd.f32 %v4174, %v4255
      %v4374 = vadd.f32 %v4175, %v4260
      %v4375 = vadd.f32 %v4176, %v4263
      %v4376 = vadd.f32 %v4177, %v4268
      %v4377 = vadd.f32 %v4178, %v4271
      %v4378 = vadd.f32 %v4179, %v4276
      %v4379 = vadd.f32 %v4180, %v4279
      %v4380 = vadd.f32 %v4181, %v4284
      %v4381 = vadd.f32 %v4182, %v4287
      %v4382 = vadd.f32 %v4183, %v4292
      %v4383 = vadd.f32 %v4184, %v4295
      %v4384 = vadd.f32 %v4185, %v4300
      %v4385 = vadd.f32 %v4186, %v4303
      %v4386 = vadd.f32 %v4187, %v4308
      %v4387 = vadd.f32 %v4188, %v4311
      %v4388 = vadd.f32 %v4189, %v4316
      %v4389 = vadd.f32 %v4190, %v4319
      %v4390 = vadd.f32 %v4191, %v4324
      %v4391 = vadd.f32 %v4192, %v4327
      %v4392 = vadd.f32 %v4193, %v4332
      %v4393 = vadd.f32 %v4194, %v4335
      %v4394 = vadd.f32 %v4195, %v4340
      %v4395 = vadd.f32 %v4196, %v4343
      %v4396 = vadd.f32 %v4197, %v4348
      %v4397 = vadd.f32 %v4198, %v4351
      %v4398 = vadd.f32 %v4199, %v4356
      %v4399 = vadd.f32 %v4200, %v4359
      %v4400 = vadd.f32 %v4201, %v4364
      %v4401 = vadd.f32 %v4202, %v4367
      %v4403 = vsel %vm205, %v3349, 0
      %v4406 = vsel %vm771, %v2953, 0
      %4408 = vmatprep.subr.bf16.mxu0 0
      %4409 = vmatpush1.bf16.msra.mxu0 0
      %4410 = vmatprep.subr.bf16.mxu0 0
      %4411 = vmatpush1.bf16.msra.mxu0 0
      %4412 = vmatprep.subr.bf16.mxu0 0
      %4413 = vmatpush1.bf16.msra.mxu0 0
      %4414 = vmatprep.subr.bf16.mxu0 0
      %4415 = vmatpush1.bf16.msra.mxu0 0
      %4416 = vmatprep.subr.bf16.mxu0 0
      %4417 = vmatpush1.bf16.msra.mxu0 0
      %4418 = vmatprep.subr.bf16.mxu0 0
      %4419 = vmatpush1.bf16.msra.mxu0 0
      %4420 = vmatprep.subr.bf16.mxu0 0
      %4421 = vmatpush1.bf16.msra.mxu0 0
      %4422 = vmatprep.subr.bf16.mxu0 0
      %4423 = vmatpush1.bf16.msra.mxu0 %v4406
      %4424 = vmatprep.subr.bf16.mxu0 0
      %4425 = vmatpush2.bf16.msra.mxu0 0
      %4426 = vmatprep.subr.bf16.mxu0 0
      %4427 = vmatpush2.bf16.msra.mxu0 0
      %4428 = vmatprep.subr.bf16.mxu0 0
      %4429 = vmatpush2.bf16.msra.mxu0 0
      %4430 = vmatprep.subr.bf16.mxu0 0
      %4431 = vmatpush2.bf16.msra.mxu0 0
      %4432 = vmatprep.subr.bf16.mxu0 0
      %4433 = vmatpush2.bf16.msra.mxu0 0
      %4434 = vmatprep.subr.bf16.mxu0 0
      %4435 = vmatpush2.bf16.msra.mxu0 0
      %4436 = vmatprep.subr.bf16.mxu0 0
      %4437 = vmatpush2.bf16.msra.mxu0 0
      %4438 = vmatprep.subr.bf16.mxu0 0
      %4439 = vmatpush2.bf16.msra.mxu0 0
      %4440 = vmatprep.mubr.bf16.mxu0 0
      %4441 = vmatmul.mubr.bf16.gmra.mxu0 %v3765
      %v4442 = vpop.f32.mrf.mxu0
      %v4443 = vadd.f32 0.0, %v4442
      %v4444 = vpop.f32.mrf.mxu0
      %v4445 = vpop.f32.mrf.mxu0
      %v4446 = vadd.f32 0.0, %v4445
      %v4447 = vpop.f32.mrf.mxu0
      %4448 = vmatprep.mubr.bf16.mxu0 0
      %4449 = vmatmul.mubr.bf16.gmra.mxu0 %v3768
      %v4450 = vpop.f32.mrf.mxu0
      %v4451 = vadd.f32 0.0, %v4450
      %v4452 = vpop.f32.mrf.mxu0
      %v4453 = vpop.f32.mrf.mxu0
      %v4454 = vadd.f32 0.0, %v4453
      %v4455 = vpop.f32.mrf.mxu0
      %4456 = vmatprep.mubr.bf16.mxu0 0
      %4457 = vmatmul.mubr.bf16.gmra.mxu0 %v3771
      %v4458 = vpop.f32.mrf.mxu0
      %v4459 = vadd.f32 0.0, %v4458
      %v4460 = vpop.f32.mrf.mxu0
      %v4461 = vpop.f32.mrf.mxu0
      %v4462 = vadd.f32 0.0, %v4461
      %v4463 = vpop.f32.mrf.mxu0
      %4464 = vmatprep.mubr.bf16.mxu0 0
      %4465 = vmatmul.mubr.bf16.gmra.mxu0 %v3774
      %v4466 = vpop.f32.mrf.mxu0
      %v4467 = vadd.f32 0.0, %v4466
      %v4468 = vpop.f32.mrf.mxu0
      %v4469 = vpop.f32.mrf.mxu0
      %v4470 = vadd.f32 0.0, %v4469
      %v4471 = vpop.f32.mrf.mxu0
      %4472 = vmatprep.mubr.bf16.mxu0 0
      %4473 = vmatmul.mubr.bf16.gmra.mxu0 %v3777
      %v4474 = vpop.f32.mrf.mxu0
      %v4475 = vadd.f32 0.0, %v4474
      %v4476 = vpop.f32.mrf.mxu0
      %v4477 = vpop.f32.mrf.mxu0
      %v4478 = vadd.f32 0.0, %v4477
      %v4479 = vpop.f32.mrf.mxu0
      %4480 = vmatprep.mubr.bf16.mxu0 0
      %4481 = vmatmul.mubr.bf16.gmra.mxu0 %v3780
      %v4482 = vpop.f32.mrf.mxu0
      %v4483 = vadd.f32 0.0, %v4482
      %v4484 = vpop.f32.mrf.mxu0
      %v4485 = vpop.f32.mrf.mxu0
      %v4486 = vadd.f32 0.0, %v4485
      %v4487 = vpop.f32.mrf.mxu0
      %4488 = vmatprep.mubr.bf16.mxu0 0
      %4489 = vmatmul.mubr.bf16.gmra.mxu0 %v3783
      %v4490 = vpop.f32.mrf.mxu0
      %v4491 = vadd.f32 0.0, %v4490
      %v4492 = vpop.f32.mrf.mxu0
      %v4493 = vpop.f32.mrf.mxu0
      %v4494 = vadd.f32 0.0, %v4493
      %v4495 = vpop.f32.mrf.mxu0
      %4496 = vmatprep.mubr.bf16.mxu0 0
      %4497 = vmatmul.mubr.bf16.gmra.mxu0 %v3786
      %v4498 = vpop.f32.mrf.mxu0
      %v4499 = vadd.f32 0.0, %v4498
      %v4500 = vpop.f32.mrf.mxu0
      %v4501 = vpop.f32.mrf.mxu0
      %v4502 = vadd.f32 0.0, %v4501
      %v4503 = vpop.f32.mrf.mxu0
      %4504 = vmatprep.mubr.bf16.mxu0 0
      %4505 = vmatmul.mubr.bf16.gmra.mxu0 %v3789
      %v4506 = vpop.f32.mrf.mxu0
      %v4507 = vadd.f32 0.0, %v4506
      %v4508 = vpop.f32.mrf.mxu0
      %v4509 = vpop.f32.mrf.mxu0
      %v4510 = vadd.f32 0.0, %v4509
      %v4511 = vpop.f32.mrf.mxu0
      %4512 = vmatprep.mubr.bf16.mxu0 0
      %4513 = vmatmul.mubr.bf16.gmra.mxu0 %v3792
      %v4514 = vpop.f32.mrf.mxu0
      %v4515 = vadd.f32 0.0, %v4514
      %v4516 = vpop.f32.mrf.mxu0
      %v4517 = vpop.f32.mrf.mxu0
      %v4518 = vadd.f32 0.0, %v4517
      %v4519 = vpop.f32.mrf.mxu0
      %4520 = vmatprep.mubr.bf16.mxu0 0
      %4521 = vmatmul.mubr.bf16.gmra.mxu0 %v3795
      %v4522 = vpop.f32.mrf.mxu0
      %v4523 = vadd.f32 0.0, %v4522
      %v4524 = vpop.f32.mrf.mxu0
      %v4525 = vpop.f32.mrf.mxu0
      %v4526 = vadd.f32 0.0, %v4525
      %v4527 = vpop.f32.mrf.mxu0
      %4528 = vmatprep.mubr.bf16.mxu0 0
      %4529 = vmatmul.mubr.bf16.gmra.mxu0 %v3798
      %v4530 = vpop.f32.mrf.mxu0
      %v4531 = vadd.f32 0.0, %v4530
      %v4532 = vpop.f32.mrf.mxu0
      %v4533 = vpop.f32.mrf.mxu0
      %v4534 = vadd.f32 0.0, %v4533
      %v4535 = vpop.f32.mrf.mxu0
      %4536 = vmatprep.mubr.bf16.mxu0 0
      %4537 = vmatmul.mubr.bf16.gmra.mxu0 %v3801
      %v4538 = vpop.f32.mrf.mxu0
      %v4539 = vadd.f32 0.0, %v4538
      %v4540 = vpop.f32.mrf.mxu0
      %v4541 = vpop.f32.mrf.mxu0
      %v4542 = vadd.f32 0.0, %v4541
      %v4543 = vpop.f32.mrf.mxu0
      %4544 = vmatprep.mubr.bf16.mxu0 0
      %4545 = vmatmul.mubr.bf16.gmra.mxu0 %v3804
      %v4546 = vpop.f32.mrf.mxu0
      %v4547 = vadd.f32 0.0, %v4546
      %v4548 = vpop.f32.mrf.mxu0
      %v4549 = vpop.f32.mrf.mxu0
      %v4550 = vadd.f32 0.0, %v4549
      %v4551 = vpop.f32.mrf.mxu0
      %4552 = vmatprep.mubr.bf16.mxu0 0
      %4553 = vmatmul.mubr.bf16.gmra.mxu0 %v3807
      %v4554 = vpop.f32.mrf.mxu0
      %v4555 = vadd.f32 0.0, %v4554
      %v4556 = vpop.f32.mrf.mxu0
      %v4557 = vpop.f32.mrf.mxu0
      %v4558 = vadd.f32 0.0, %v4557
      %v4559 = vpop.f32.mrf.mxu0
      %4560 = vmatprep.mubr.bf16.mxu0 0
      %4561 = vmatmul.mubr.bf16.gmra.mxu0 %v4403
      %v4562 = vpop.f32.mrf.mxu0
      %v4563 = vadd.f32 0.0, %v4562
      %v4564 = vpop.f32.mrf.mxu0
      %v4565 = vpop.f32.mrf.mxu0
      %v4566 = vadd.f32 0.0, %v4565
      %v4567 = vpop.f32.mrf.mxu0
      %4568 = vdwg.mxu0
      %v4569 = vadd.f32 %v4370, %v4443
      %v4570 = vadd.f32 %v4371, %v4446
      %v4571 = vadd.f32 %v4372, %v4451
      %v4572 = vadd.f32 %v4373, %v4454
      %v4573 = vadd.f32 %v4374, %v4459
      %v4574 = vadd.f32 %v4375, %v4462
      %v4575 = vadd.f32 %v4376, %v4467
      %v4576 = vadd.f32 %v4377, %v4470
      %v4577 = vadd.f32 %v4378, %v4475
      %v4578 = vadd.f32 %v4379, %v4478
      %v4579 = vadd.f32 %v4380, %v4483
      %v4580 = vadd.f32 %v4381, %v4486
      %v4581 = vadd.f32 %v4382, %v4491
      %v4582 = vadd.f32 %v4383, %v4494
      %v4583 = vadd.f32 %v4384, %v4499
      %v4584 = vadd.f32 %v4385, %v4502
      %v4585 = vadd.f32 %v4386, %v4507
      %v4586 = vadd.f32 %v4387, %v4510
      %v4587 = vadd.f32 %v4388, %v4515
      %v4588 = vadd.f32 %v4389, %v4518
      %v4589 = vadd.f32 %v4390, %v4523
      %v4590 = vadd.f32 %v4391, %v4526
      %v4591 = vadd.f32 %v4392, %v4531
      %v4592 = vadd.f32 %v4393, %v4534
      %v4593 = vadd.f32 %v4394, %v4539
      %v4594 = vadd.f32 %v4395, %v4542
      %v4595 = vadd.f32 %v4396, %v4547
      %v4596 = vadd.f32 %v4397, %v4550
      %v4597 = vadd.f32 %v4398, %v4555
      %v4598 = vadd.f32 %v4399, %v4558
      %v4599 = vadd.f32 %v4400, %v4563
      %v4600 = vadd.f32 %v4401, %v4566
      %v4601 = vsel %vm205, %v3045, 0
      %v4604 = vsel %vm771, %v2954, 0
      %4606 = vmatprep.subr.bf16.mxu0 0
      %4607 = vmatpush1.bf16.msra.mxu0 0
      %4608 = vmatprep.subr.bf16.mxu0 0
      %4609 = vmatpush1.bf16.msra.mxu0 0
      %4610 = vmatprep.subr.bf16.mxu0 0
      %4611 = vmatpush1.bf16.msra.mxu0 0
      %4612 = vmatprep.subr.bf16.mxu0 0
      %4613 = vmatpush1.bf16.msra.mxu0 0
      %4614 = vmatprep.subr.bf16.mxu0 0
      %4615 = vmatpush1.bf16.msra.mxu0 0
      %4616 = vmatprep.subr.bf16.mxu0 0
      %4617 = vmatpush1.bf16.msra.mxu0 0
      %4618 = vmatprep.subr.bf16.mxu0 0
      %4619 = vmatpush1.bf16.msra.mxu0 0
      %4620 = vmatprep.subr.bf16.mxu0 0
      %4621 = vmatpush1.bf16.msra.mxu0 %v4604
      %4622 = vmatprep.subr.bf16.mxu0 0
      %4623 = vmatpush2.bf16.msra.mxu0 0
      %4624 = vmatprep.subr.bf16.mxu0 0
      %4625 = vmatpush2.bf16.msra.mxu0 0
      %4626 = vmatprep.subr.bf16.mxu0 0
      %4627 = vmatpush2.bf16.msra.mxu0 0
      %4628 = vmatprep.subr.bf16.mxu0 0
      %4629 = vmatpush2.bf16.msra.mxu0 0
      %4630 = vmatprep.subr.bf16.mxu0 0
      %4631 = vmatpush2.bf16.msra.mxu0 0
      %4632 = vmatprep.subr.bf16.mxu0 0
      %4633 = vmatpush2.bf16.msra.mxu0 0
      %4634 = vmatprep.subr.bf16.mxu0 0
      %4635 = vmatpush2.bf16.msra.mxu0 0
      %4636 = vmatprep.subr.bf16.mxu0 0
      %4637 = vmatpush2.bf16.msra.mxu0 0
      %4638 = vmatprep.mubr.bf16.mxu0 0
      %4639 = vmatmul.mubr.bf16.gmra.mxu0 %v3569
      %v4640 = vpop.f32.mrf.mxu0
      %v4641 = vadd.f32 0.0, %v4640
      %v4642 = vpop.f32.mrf.mxu0
      %v4643 = vpop.f32.mrf.mxu0
      %v4644 = vadd.f32 0.0, %v4643
      %v4645 = vpop.f32.mrf.mxu0
      %4646 = vmatprep.mubr.bf16.mxu0 0
      %4647 = vmatmul.mubr.bf16.gmra.mxu0 %v3571
      %v4648 = vpop.f32.mrf.mxu0
      %v4649 = vadd.f32 0.0, %v4648
      %v4650 = vpop.f32.mrf.mxu0
      %v4651 = vpop.f32.mrf.mxu0
      %v4652 = vadd.f32 0.0, %v4651
      %v4653 = vpop.f32.mrf.mxu0
      %4654 = vmatprep.mubr.bf16.mxu0 0
      %4655 = vmatmul.mubr.bf16.gmra.mxu0 %v3573
      %v4656 = vpop.f32.mrf.mxu0
      %v4657 = vadd.f32 0.0, %v4656
      %v4658 = vpop.f32.mrf.mxu0
      %v4659 = vpop.f32.mrf.mxu0
      %v4660 = vadd.f32 0.0, %v4659
      %v4661 = vpop.f32.mrf.mxu0
      %4662 = vmatprep.mubr.bf16.mxu0 0
      %4663 = vmatmul.mubr.bf16.gmra.mxu0 %v3575
      %v4664 = vpop.f32.mrf.mxu0
      %v4665 = vadd.f32 0.0, %v4664
      %v4666 = vpop.f32.mrf.mxu0
      %v4667 = vpop.f32.mrf.mxu0
      %v4668 = vadd.f32 0.0, %v4667
      %v4669 = vpop.f32.mrf.mxu0
      %4670 = vmatprep.mubr.bf16.mxu0 0
      %4671 = vmatmul.mubr.bf16.gmra.mxu0 %v3577
      %v4672 = vpop.f32.mrf.mxu0
      %v4673 = vadd.f32 0.0, %v4672
      %v4674 = vpop.f32.mrf.mxu0
      %v4675 = vpop.f32.mrf.mxu0
      %v4676 = vadd.f32 0.0, %v4675
      %v4677 = vpop.f32.mrf.mxu0
      %4678 = vmatprep.mubr.bf16.mxu0 0
      %4679 = vmatmul.mubr.bf16.gmra.mxu0 %v3579
      %v4680 = vpop.f32.mrf.mxu0
      %v4681 = vadd.f32 0.0, %v4680
      %v4682 = vpop.f32.mrf.mxu0
      %v4683 = vpop.f32.mrf.mxu0
      %v4684 = vadd.f32 0.0, %v4683
      %v4685 = vpop.f32.mrf.mxu0
      %4686 = vmatprep.mubr.bf16.mxu0 0
      %4687 = vmatmul.mubr.bf16.gmra.mxu0 %v3581
      %v4688 = vpop.f32.mrf.mxu0
      %v4689 = vadd.f32 0.0, %v4688
      %v4690 = vpop.f32.mrf.mxu0
      %v4691 = vpop.f32.mrf.mxu0
      %v4692 = vadd.f32 0.0, %v4691
      %v4693 = vpop.f32.mrf.mxu0
      %4694 = vmatprep.mubr.bf16.mxu0 0
      %4695 = vmatmul.mubr.bf16.gmra.mxu0 %v3583
      %v4696 = vpop.f32.mrf.mxu0
      %v4697 = vadd.f32 0.0, %v4696
      %v4698 = vpop.f32.mrf.mxu0
      %v4699 = vpop.f32.mrf.mxu0
      %v4700 = vadd.f32 0.0, %v4699
      %v4701 = vpop.f32.mrf.mxu0
      %4702 = vmatprep.mubr.bf16.mxu0 0
      %4703 = vmatmul.mubr.bf16.gmra.mxu0 %v3585
      %v4704 = vpop.f32.mrf.mxu0
      %v4705 = vadd.f32 0.0, %v4704
      %v4706 = vpop.f32.mrf.mxu0
      %v4707 = vpop.f32.mrf.mxu0
      %v4708 = vadd.f32 0.0, %v4707
      %v4709 = vpop.f32.mrf.mxu0
      %4710 = vmatprep.mubr.bf16.mxu0 0
      %4711 = vmatmul.mubr.bf16.gmra.mxu0 %v3587
      %v4712 = vpop.f32.mrf.mxu0
      %v4713 = vadd.f32 0.0, %v4712
      %v4714 = vpop.f32.mrf.mxu0
      %v4715 = vpop.f32.mrf.mxu0
      %v4716 = vadd.f32 0.0, %v4715
      %v4717 = vpop.f32.mrf.mxu0
      %4718 = vmatprep.mubr.bf16.mxu0 0
      %4719 = vmatmul.mubr.bf16.gmra.mxu0 %v3589
      %v4720 = vpop.f32.mrf.mxu0
      %v4721 = vadd.f32 0.0, %v4720
      %v4722 = vpop.f32.mrf.mxu0
      %v4723 = vpop.f32.mrf.mxu0
      %v4724 = vadd.f32 0.0, %v4723
      %v4725 = vpop.f32.mrf.mxu0
      %4726 = vmatprep.mubr.bf16.mxu0 0
      %4727 = vmatmul.mubr.bf16.gmra.mxu0 %v3591
      %v4728 = vpop.f32.mrf.mxu0
      %v4729 = vadd.f32 0.0, %v4728
      %v4730 = vpop.f32.mrf.mxu0
      %v4731 = vpop.f32.mrf.mxu0
      %v4732 = vadd.f32 0.0, %v4731
      %v4733 = vpop.f32.mrf.mxu0
      %4734 = vmatprep.mubr.bf16.mxu0 0
      %4735 = vmatmul.mubr.bf16.gmra.mxu0 %v3593
      %v4736 = vpop.f32.mrf.mxu0
      %v4737 = vadd.f32 0.0, %v4736
      %v4738 = vpop.f32.mrf.mxu0
      %v4739 = vpop.f32.mrf.mxu0
      %v4740 = vadd.f32 0.0, %v4739
      %v4741 = vpop.f32.mrf.mxu0
      %4742 = vmatprep.mubr.bf16.mxu0 0
      %4743 = vmatmul.mubr.bf16.gmra.mxu0 %v3595
      %v4744 = vpop.f32.mrf.mxu0
      %v4745 = vadd.f32 0.0, %v4744
      %v4746 = vpop.f32.mrf.mxu0
      %v4747 = vpop.f32.mrf.mxu0
      %v4748 = vadd.f32 0.0, %v4747
      %v4749 = vpop.f32.mrf.mxu0
      %4750 = vmatprep.mubr.bf16.mxu0 0
      %4751 = vmatmul.mubr.bf16.gmra.mxu0 %v4005
      %v4752 = vpop.f32.mrf.mxu0
      %v4753 = vadd.f32 0.0, %v4752
      %v4754 = vpop.f32.mrf.mxu0
      %v4755 = vpop.f32.mrf.mxu0
      %v4756 = vadd.f32 0.0, %v4755
      %v4757 = vpop.f32.mrf.mxu0
      %4758 = vmatprep.mubr.bf16.mxu0 0
      %4759 = vmatmul.mubr.bf16.gmra.mxu0 %v4601
      %v4760 = vpop.f32.mrf.mxu0
      %v4761 = vadd.f32 0.0, %v4760
      %v4762 = vpop.f32.mrf.mxu0
      %v4763 = vpop.f32.mrf.mxu0
      %v4764 = vadd.f32 0.0, %v4763
      %v4765 = vpop.f32.mrf.mxu0
      %4766 = vdwg.mxu0
      %v4767 = vadd.f32 %v4569, %v4641
      %v4768 = vadd.f32 %v4570, %v4644
      %v4769 = vadd.f32 %v4571, %v4649
      %v4770 = vadd.f32 %v4572, %v4652
      %v4771 = vadd.f32 %v4573, %v4657
      %v4772 = vadd.f32 %v4574, %v4660
      %v4773 = vadd.f32 %v4575, %v4665
      %v4774 = vadd.f32 %v4576, %v4668
      %v4775 = vadd.f32 %v4577, %v4673
      %v4776 = vadd.f32 %v4578, %v4676
      %v4777 = vadd.f32 %v4579, %v4681
      %v4778 = vadd.f32 %v4580, %v4684
      %v4779 = vadd.f32 %v4581, %v4689
      %v4780 = vadd.f32 %v4582, %v4692
      %v4781 = vadd.f32 %v4583, %v4697
      %v4782 = vadd.f32 %v4584, %v4700
      %v4783 = vadd.f32 %v4585, %v4705
      %v4784 = vadd.f32 %v4586, %v4708
      %v4785 = vadd.f32 %v4587, %v4713
      %v4786 = vadd.f32 %v4588, %v4716
      %v4787 = vadd.f32 %v4589, %v4721
      %v4788 = vadd.f32 %v4590, %v4724
      %v4789 = vadd.f32 %v4591, %v4729
      %v4790 = vadd.f32 %v4592, %v4732
      %v4791 = vadd.f32 %v4593, %v4737
      %v4792 = vadd.f32 %v4594, %v4740
      %v4793 = vadd.f32 %v4595, %v4745
      %v4794 = vadd.f32 %v4596, %v4748
      %v4795 = vadd.f32 %v4597, %v4753
      %v4796 = vadd.f32 %v4598, %v4756
      %v4797 = vadd.f32 %v4599, %v4761
      %v4798 = vadd.f32 %v4600, %v4764
      %v4800 = vsel %vm205, %v3262, 0
      %v4803 = vsel %vm771, %v2955, 0
      %4805 = vmatprep.subr.bf16.mxu0 0
      %4806 = vmatpush1.bf16.msra.mxu0 0
      %4807 = vmatprep.subr.bf16.mxu0 0
      %4808 = vmatpush1.bf16.msra.mxu0 0
      %4809 = vmatprep.subr.bf16.mxu0 0
      %4810 = vmatpush1.bf16.msra.mxu0 0
      %4811 = vmatprep.subr.bf16.mxu0 0
      %4812 = vmatpush1.bf16.msra.mxu0 0
      %4813 = vmatprep.subr.bf16.mxu0 0
      %4814 = vmatpush1.bf16.msra.mxu0 0
      %4815 = vmatprep.subr.bf16.mxu0 0
      %4816 = vmatpush1.bf16.msra.mxu0 0
      %4817 = vmatprep.subr.bf16.mxu0 0
      %4818 = vmatpush1.bf16.msra.mxu0 0
      %4819 = vmatprep.subr.bf16.mxu0 0
      %4820 = vmatpush1.bf16.msra.mxu0 %v4803
      %4821 = vmatprep.subr.bf16.mxu0 0
      %4822 = vmatpush2.bf16.msra.mxu0 0
      %4823 = vmatprep.subr.bf16.mxu0 0
      %4824 = vmatpush2.bf16.msra.mxu0 0
      %4825 = vmatprep.subr.bf16.mxu0 0
      %4826 = vmatpush2.bf16.msra.mxu0 0
      %4827 = vmatprep.subr.bf16.mxu0 0
      %4828 = vmatpush2.bf16.msra.mxu0 0
      %4829 = vmatprep.subr.bf16.mxu0 0
      %4830 = vmatpush2.bf16.msra.mxu0 0
      %4831 = vmatprep.subr.bf16.mxu0 0
      %4832 = vmatpush2.bf16.msra.mxu0 0
      %4833 = vmatprep.subr.bf16.mxu0 0
      %4834 = vmatpush2.bf16.msra.mxu0 0
      %4835 = vmatprep.subr.bf16.mxu0 0
      %4836 = vmatpush2.bf16.msra.mxu0 0
      %4837 = vmatprep.mubr.bf16.mxu0 0
      %4838 = vmatmul.mubr.bf16.gmra.mxu0 %v3360
      %v4839 = vpop.f32.mrf.mxu0
      %v4840 = vadd.f32 0.0, %v4839
      %v4841 = vpop.f32.mrf.mxu0
      %v4842 = vpop.f32.mrf.mxu0
      %v4843 = vadd.f32 0.0, %v4842
      %v4844 = vpop.f32.mrf.mxu0
      %4845 = vmatprep.mubr.bf16.mxu0 0
      %4846 = vmatmul.mubr.bf16.gmra.mxu0 %v3363
      %v4847 = vpop.f32.mrf.mxu0
      %v4848 = vadd.f32 0.0, %v4847
      %v4849 = vpop.f32.mrf.mxu0
      %v4850 = vpop.f32.mrf.mxu0
      %v4851 = vadd.f32 0.0, %v4850
      %v4852 = vpop.f32.mrf.mxu0
      %4853 = vmatprep.mubr.bf16.mxu0 0
      %4854 = vmatmul.mubr.bf16.gmra.mxu0 %v3366
      %v4855 = vpop.f32.mrf.mxu0
      %v4856 = vadd.f32 0.0, %v4855
      %v4857 = vpop.f32.mrf.mxu0
      %v4858 = vpop.f32.mrf.mxu0
      %v4859 = vadd.f32 0.0, %v4858
      %v4860 = vpop.f32.mrf.mxu0
      %4861 = vmatprep.mubr.bf16.mxu0 0
      %4862 = vmatmul.mubr.bf16.gmra.mxu0 %v3369
      %v4863 = vpop.f32.mrf.mxu0
      %v4864 = vadd.f32 0.0, %v4863
      %v4865 = vpop.f32.mrf.mxu0
      %v4866 = vpop.f32.mrf.mxu0
      %v4867 = vadd.f32 0.0, %v4866
      %v4868 = vpop.f32.mrf.mxu0
      %4869 = vmatprep.mubr.bf16.mxu0 0
      %4870 = vmatmul.mubr.bf16.gmra.mxu0 %v3372
      %v4871 = vpop.f32.mrf.mxu0
      %v4872 = vadd.f32 0.0, %v4871
      %v4873 = vpop.f32.mrf.mxu0
      %v4874 = vpop.f32.mrf.mxu0
      %v4875 = vadd.f32 0.0, %v4874
      %v4876 = vpop.f32.mrf.mxu0
      %4877 = vmatprep.mubr.bf16.mxu0 0
      %4878 = vmatmul.mubr.bf16.gmra.mxu0 %v3375
      %v4879 = vpop.f32.mrf.mxu0
      %v4880 = vadd.f32 0.0, %v4879
      %v4881 = vpop.f32.mrf.mxu0
      %v4882 = vpop.f32.mrf.mxu0
      %v4883 = vadd.f32 0.0, %v4882
      %v4884 = vpop.f32.mrf.mxu0
      %4885 = vmatprep.mubr.bf16.mxu0 0
      %4886 = vmatmul.mubr.bf16.gmra.mxu0 %v3378
      %v4887 = vpop.f32.mrf.mxu0
      %v4888 = vadd.f32 0.0, %v4887
      %v4889 = vpop.f32.mrf.mxu0
      %v4890 = vpop.f32.mrf.mxu0
      %v4891 = vadd.f32 0.0, %v4890
      %v4892 = vpop.f32.mrf.mxu0
      %4893 = vmatprep.mubr.bf16.mxu0 0
      %4894 = vmatmul.mubr.bf16.gmra.mxu0 %v3381
      %v4895 = vpop.f32.mrf.mxu0
      %v4896 = vadd.f32 0.0, %v4895
      %v4897 = vpop.f32.mrf.mxu0
      %v4898 = vpop.f32.mrf.mxu0
      %v4899 = vadd.f32 0.0, %v4898
      %v4900 = vpop.f32.mrf.mxu0
      %4901 = vmatprep.mubr.bf16.mxu0 0
      %4902 = vmatmul.mubr.bf16.gmra.mxu0 %v3384
      %v4903 = vpop.f32.mrf.mxu0
      %v4904 = vadd.f32 0.0, %v4903
      %v4905 = vpop.f32.mrf.mxu0
      %v4906 = vpop.f32.mrf.mxu0
      %v4907 = vadd.f32 0.0, %v4906
      %v4908 = vpop.f32.mrf.mxu0
      %4909 = vmatprep.mubr.bf16.mxu0 0
      %4910 = vmatmul.mubr.bf16.gmra.mxu0 %v3387
      %v4911 = vpop.f32.mrf.mxu0
      %v4912 = vadd.f32 0.0, %v4911
      %v4913 = vpop.f32.mrf.mxu0
      %v4914 = vpop.f32.mrf.mxu0
      %v4915 = vadd.f32 0.0, %v4914
      %v4916 = vpop.f32.mrf.mxu0
      %4917 = vmatprep.mubr.bf16.mxu0 0
      %4918 = vmatmul.mubr.bf16.gmra.mxu0 %v3390
      %v4919 = vpop.f32.mrf.mxu0
      %v4920 = vadd.f32 0.0, %v4919
      %v4921 = vpop.f32.mrf.mxu0
      %v4922 = vpop.f32.mrf.mxu0
      %v4923 = vadd.f32 0.0, %v4922
      %v4924 = vpop.f32.mrf.mxu0
      %4925 = vmatprep.mubr.bf16.mxu0 0
      %4926 = vmatmul.mubr.bf16.gmra.mxu0 %v3393
      %v4927 = vpop.f32.mrf.mxu0
      %v4928 = vadd.f32 0.0, %v4927
      %v4929 = vpop.f32.mrf.mxu0
      %v4930 = vpop.f32.mrf.mxu0
      %v4931 = vadd.f32 0.0, %v4930
      %v4932 = vpop.f32.mrf.mxu0
      %4933 = vmatprep.mubr.bf16.mxu0 0
      %4934 = vmatmul.mubr.bf16.gmra.mxu0 %v3396
      %v4935 = vpop.f32.mrf.mxu0
      %v4936 = vadd.f32 0.0, %v4935
      %v4937 = vpop.f32.mrf.mxu0
      %v4938 = vpop.f32.mrf.mxu0
      %v4939 = vadd.f32 0.0, %v4938
      %v4940 = vpop.f32.mrf.mxu0
      %4941 = vmatprep.mubr.bf16.mxu0 0
      %4942 = vmatmul.mubr.bf16.gmra.mxu0 %v3399
      %v4943 = vpop.f32.mrf.mxu0
      %v4944 = vadd.f32 0.0, %v4943
      %v4945 = vpop.f32.mrf.mxu0
      %v4946 = vpop.f32.mrf.mxu0
      %v4947 = vadd.f32 0.0, %v4946
      %v4948 = vpop.f32.mrf.mxu0
      %4949 = vmatprep.mubr.bf16.mxu0 0
      %4950 = vmatmul.mubr.bf16.gmra.mxu0 %v4204
      %v4951 = vpop.f32.mrf.mxu0
      %v4952 = vadd.f32 0.0, %v4951
      %v4953 = vpop.f32.mrf.mxu0
      %v4954 = vpop.f32.mrf.mxu0
      %v4955 = vadd.f32 0.0, %v4954
      %v4956 = vpop.f32.mrf.mxu0
      %4957 = vmatprep.mubr.bf16.mxu0 0
      %4958 = vmatmul.mubr.bf16.gmra.mxu0 %v4800
      %v4959 = vpop.f32.mrf.mxu0
      %v4960 = vadd.f32 0.0, %v4959
      %v4961 = vpop.f32.mrf.mxu0
      %v4962 = vpop.f32.mrf.mxu0
      %v4963 = vadd.f32 0.0, %v4962
      %v4964 = vpop.f32.mrf.mxu0
      %4965 = vdwg.mxu0
      %v4966 = vadd.f32 %v4767, %v4840
      %v4967 = vadd.f32 %v4768, %v4843
      %v4968 = vadd.f32 %v4769, %v4848
      %v4969 = vadd.f32 %v4770, %v4851
      %v4970 = vadd.f32 %v4771, %v4856
      %v4971 = vadd.f32 %v4772, %v4859
      %v4972 = vadd.f32 %v4773, %v4864
      %v4973 = vadd.f32 %v4774, %v4867
      %v4974 = vadd.f32 %v4775, %v4872
      %v4975 = vadd.f32 %v4776, %v4875
      %v4976 = vadd.f32 %v4777, %v4880
      %v4977 = vadd.f32 %v4778, %v4883
      %v4978 = vadd.f32 %v4779, %v4888
      %v4979 = vadd.f32 %v4780, %v4891
      %v4980 = vadd.f32 %v4781, %v4896
      %v4981 = vadd.f32 %v4782, %v4899
      %v4982 = vadd.f32 %v4783, %v4904
      %v4983 = vadd.f32 %v4784, %v4907
      %v4984 = vadd.f32 %v4785, %v4912
      %v4985 = vadd.f32 %v4786, %v4915
      %v4986 = vadd.f32 %v4787, %v4920
      %v4987 = vadd.f32 %v4788, %v4923
      %v4988 = vadd.f32 %v4789, %v4928
      %v4989 = vadd.f32 %v4790, %v4931
      %v4990 = vadd.f32 %v4791, %v4936
      %v4991 = vadd.f32 %v4792, %v4939
      %v4992 = vadd.f32 %v4793, %v4944
      %v4993 = vadd.f32 %v4794, %v4947
      %v4994 = vadd.f32 %v4795, %v4952
      %v4995 = vadd.f32 %v4796, %v4955
      %v4996 = vadd.f32 %v4797, %v4960
      %v4997 = vadd.f32 %v4798, %v4963
      %v4999 = vsel %vm205, %v3352, 0
      %v5002 = vsel %vm771, %v2956, 0
      %5004 = vmatprep.subr.bf16.mxu0 0
      %5005 = vmatpush1.bf16.msra.mxu0 0
      %5006 = vmatprep.subr.bf16.mxu0 0
      %5007 = vmatpush1.bf16.msra.mxu0 0
      %5008 = vmatprep.subr.bf16.mxu0 0
      %5009 = vmatpush1.bf16.msra.mxu0 0
      %5010 = vmatprep.subr.bf16.mxu0 0
      %5011 = vmatpush1.bf16.msra.mxu0 0
      %5012 = vmatprep.subr.bf16.mxu0 0
      %5013 = vmatpush1.bf16.msra.mxu0 0
      %5014 = vmatprep.subr.bf16.mxu0 0
      %5015 = vmatpush1.bf16.msra.mxu0 0
      %5016 = vmatprep.subr.bf16.mxu0 0
      %5017 = vmatpush1.bf16.msra.mxu0 0
      %5018 = vmatprep.subr.bf16.mxu0 0
      %5019 = vmatpush1.bf16.msra.mxu0 %v5002
      %5020 = vmatprep.subr.bf16.mxu0 0
      %5021 = vmatpush2.bf16.msra.mxu0 0
      %5022 = vmatprep.subr.bf16.mxu0 0
      %5023 = vmatpush2.bf16.msra.mxu0 0
      %5024 = vmatprep.subr.bf16.mxu0 0
      %5025 = vmatpush2.bf16.msra.mxu0 0
      %5026 = vmatprep.subr.bf16.mxu0 0
      %5027 = vmatpush2.bf16.msra.mxu0 0
      %5028 = vmatprep.subr.bf16.mxu0 0
      %5029 = vmatpush2.bf16.msra.mxu0 0
      %5030 = vmatprep.subr.bf16.mxu0 0
      %5031 = vmatpush2.bf16.msra.mxu0 0
      %5032 = vmatprep.subr.bf16.mxu0 0
      %5033 = vmatpush2.bf16.msra.mxu0 0
      %5034 = vmatprep.subr.bf16.mxu0 0
      %5035 = vmatpush2.bf16.msra.mxu0 0
      %5036 = vmatprep.mubr.bf16.mxu0 0
      %5037 = vmatmul.mubr.bf16.gmra.mxu0 %v3768
      %v5038 = vpop.f32.mrf.mxu0
      %v5039 = vadd.f32 0.0, %v5038
      %v5040 = vpop.f32.mrf.mxu0
      %v5041 = vpop.f32.mrf.mxu0
      %v5042 = vadd.f32 0.0, %v5041
      %v5043 = vpop.f32.mrf.mxu0
      %5044 = vmatprep.mubr.bf16.mxu0 0
      %5045 = vmatmul.mubr.bf16.gmra.mxu0 %v3771
      %v5046 = vpop.f32.mrf.mxu0
      %v5047 = vadd.f32 0.0, %v5046
      %v5048 = vpop.f32.mrf.mxu0
      %v5049 = vpop.f32.mrf.mxu0
      %v5050 = vadd.f32 0.0, %v5049
      %v5051 = vpop.f32.mrf.mxu0
      %5052 = vmatprep.mubr.bf16.mxu0 0
      %5053 = vmatmul.mubr.bf16.gmra.mxu0 %v3774
      %v5054 = vpop.f32.mrf.mxu0
      %v5055 = vadd.f32 0.0, %v5054
      %v5056 = vpop.f32.mrf.mxu0
      %v5057 = vpop.f32.mrf.mxu0
      %v5058 = vadd.f32 0.0, %v5057
      %v5059 = vpop.f32.mrf.mxu0
      %5060 = vmatprep.mubr.bf16.mxu0 0
      %5061 = vmatmul.mubr.bf16.gmra.mxu0 %v3777
      %v5062 = vpop.f32.mrf.mxu0
      %v5063 = vadd.f32 0.0, %v5062
      %v5064 = vpop.f32.mrf.mxu0
      %v5065 = vpop.f32.mrf.mxu0
      %v5066 = vadd.f32 0.0, %v5065
      %v5067 = vpop.f32.mrf.mxu0
      %5068 = vmatprep.mubr.bf16.mxu0 0
      %5069 = vmatmul.mubr.bf16.gmra.mxu0 %v3780
      %v5070 = vpop.f32.mrf.mxu0
      %v5071 = vadd.f32 0.0, %v5070
      %v5072 = vpop.f32.mrf.mxu0
      %v5073 = vpop.f32.mrf.mxu0
      %v5074 = vadd.f32 0.0, %v5073
      %v5075 = vpop.f32.mrf.mxu0
      %5076 = vmatprep.mubr.bf16.mxu0 0
      %5077 = vmatmul.mubr.bf16.gmra.mxu0 %v3783
      %v5078 = vpop.f32.mrf.mxu0
      %v5079 = vadd.f32 0.0, %v5078
      %v5080 = vpop.f32.mrf.mxu0
      %v5081 = vpop.f32.mrf.mxu0
      %v5082 = vadd.f32 0.0, %v5081
      %v5083 = vpop.f32.mrf.mxu0
      %5084 = vmatprep.mubr.bf16.mxu0 0
      %5085 = vmatmul.mubr.bf16.gmra.mxu0 %v3786
      %v5086 = vpop.f32.mrf.mxu0
      %v5087 = vadd.f32 0.0, %v5086
      %v5088 = vpop.f32.mrf.mxu0
      %v5089 = vpop.f32.mrf.mxu0
      %v5090 = vadd.f32 0.0, %v5089
      %v5091 = vpop.f32.mrf.mxu0
      %5092 = vmatprep.mubr.bf16.mxu0 0
      %5093 = vmatmul.mubr.bf16.gmra.mxu0 %v3789
      %v5094 = vpop.f32.mrf.mxu0
      %v5095 = vadd.f32 0.0, %v5094
      %v5096 = vpop.f32.mrf.mxu0
      %v5097 = vpop.f32.mrf.mxu0
      %v5098 = vadd.f32 0.0, %v5097
      %v5099 = vpop.f32.mrf.mxu0
      %5100 = vmatprep.mubr.bf16.mxu0 0
      %5101 = vmatmul.mubr.bf16.gmra.mxu0 %v3792
      %v5102 = vpop.f32.mrf.mxu0
      %v5103 = vadd.f32 0.0, %v5102
      %v5104 = vpop.f32.mrf.mxu0
      %v5105 = vpop.f32.mrf.mxu0
      %v5106 = vadd.f32 0.0, %v5105
      %v5107 = vpop.f32.mrf.mxu0
      %5108 = vmatprep.mubr.bf16.mxu0 0
      %5109 = vmatmul.mubr.bf16.gmra.mxu0 %v3795
      %v5110 = vpop.f32.mrf.mxu0
      %v5111 = vadd.f32 0.0, %v5110
      %v5112 = vpop.f32.mrf.mxu0
      %v5113 = vpop.f32.mrf.mxu0
      %v5114 = vadd.f32 0.0, %v5113
      %v5115 = vpop.f32.mrf.mxu0
      %5116 = vmatprep.mubr.bf16.mxu0 0
      %5117 = vmatmul.mubr.bf16.gmra.mxu0 %v3798
      %v5118 = vpop.f32.mrf.mxu0
      %v5119 = vadd.f32 0.0, %v5118
      %v5120 = vpop.f32.mrf.mxu0
      %v5121 = vpop.f32.mrf.mxu0
      %v5122 = vadd.f32 0.0, %v5121
      %v5123 = vpop.f32.mrf.mxu0
      %5124 = vmatprep.mubr.bf16.mxu0 0
      %5125 = vmatmul.mubr.bf16.gmra.mxu0 %v3801
      %v5126 = vpop.f32.mrf.mxu0
      %v5127 = vadd.f32 0.0, %v5126
      %v5128 = vpop.f32.mrf.mxu0
      %v5129 = vpop.f32.mrf.mxu0
      %v5130 = vadd.f32 0.0, %v5129
      %v5131 = vpop.f32.mrf.mxu0
      %5132 = vmatprep.mubr.bf16.mxu0 0
      %5133 = vmatmul.mubr.bf16.gmra.mxu0 %v3804
      %v5134 = vpop.f32.mrf.mxu0
      %v5135 = vadd.f32 0.0, %v5134
      %v5136 = vpop.f32.mrf.mxu0
      %v5137 = vpop.f32.mrf.mxu0
      %v5138 = vadd.f32 0.0, %v5137
      %v5139 = vpop.f32.mrf.mxu0
      %5140 = vmatprep.mubr.bf16.mxu0 0
      %5141 = vmatmul.mubr.bf16.gmra.mxu0 %v3807
      %v5142 = vpop.f32.mrf.mxu0
      %v5143 = vadd.f32 0.0, %v5142
      %v5144 = vpop.f32.mrf.mxu0
      %v5145 = vpop.f32.mrf.mxu0
      %v5146 = vadd.f32 0.0, %v5145
      %v5147 = vpop.f32.mrf.mxu0
      %5148 = vmatprep.mubr.bf16.mxu0 0
      %5149 = vmatmul.mubr.bf16.gmra.mxu0 %v4403
      %v5150 = vpop.f32.mrf.mxu0
      %v5151 = vadd.f32 0.0, %v5150
      %v5152 = vpop.f32.mrf.mxu0
      %v5153 = vpop.f32.mrf.mxu0
      %v5154 = vadd.f32 0.0, %v5153
      %v5155 = vpop.f32.mrf.mxu0
      %5156 = vmatprep.mubr.bf16.mxu0 0
      %5157 = vmatmul.mubr.bf16.gmra.mxu0 %v4999
      %v5158 = vpop.f32.mrf.mxu0
      %v5159 = vadd.f32 0.0, %v5158
      %v5160 = vpop.f32.mrf.mxu0
      %v5161 = vpop.f32.mrf.mxu0
      %v5162 = vadd.f32 0.0, %v5161
      %v5163 = vpop.f32.mrf.mxu0
      %5164 = vdwg.mxu0
      %v5165 = vadd.f32 %v4966, %v5039
      %v5166 = vadd.f32 %v4967, %v5042
      %v5167 = vadd.f32 %v4968, %v5047
      %v5168 = vadd.f32 %v4969, %v5050
      %v5169 = vadd.f32 %v4970, %v5055
      %v5170 = vadd.f32 %v4971, %v5058
      %v5171 = vadd.f32 %v4972, %v5063
      %v5172 = vadd.f32 %v4973, %v5066
      %v5173 = vadd.f32 %v4974, %v5071
      %v5174 = vadd.f32 %v4975, %v5074
      %v5175 = vadd.f32 %v4976, %v5079
      %v5176 = vadd.f32 %v4977, %v5082
      %v5177 = vadd.f32 %v4978, %v5087
      %v5178 = vadd.f32 %v4979, %v5090
      %v5179 = vadd.f32 %v4980, %v5095
      %v5180 = vadd.f32 %v4981, %v5098
      %v5181 = vadd.f32 %v4982, %v5103
      %v5182 = vadd.f32 %v4983, %v5106
      %v5183 = vadd.f32 %v4984, %v5111
      %v5184 = vadd.f32 %v4985, %v5114
      %v5185 = vadd.f32 %v4986, %v5119
      %v5186 = vadd.f32 %v4987, %v5122
      %v5187 = vadd.f32 %v4988, %v5127
      %v5188 = vadd.f32 %v4989, %v5130
      %v5189 = vadd.f32 %v4990, %v5135
      %v5190 = vadd.f32 %v4991, %v5138
      %v5191 = vadd.f32 %v4992, %v5143
      %v5192 = vadd.f32 %v4993, %v5146
      %v5193 = vadd.f32 %v4994, %v5151
      %v5194 = vadd.f32 %v4995, %v5154
      %v5195 = vadd.f32 %v4996, %v5159
      %v5196 = vadd.f32 %v4997, %v5162
      %v5197 = vsel %vm205, %v5165, 0.0
      %v5198 = vsel %vm205, %v5166, 0.0
      %v5199 = vadd.f32 %v5197, %v5198
      %v5200 = vsel %vm205, %v5167, 0.0
      %v5201 = vadd.f32 %v5199, %v5200
      %v5202 = vsel %vm205, %v5168, 0.0
      %v5203 = vadd.f32 %v5201, %v5202
      %v5204 = vsel %vm205, %v5169, 0.0
      %v5205 = vadd.f32 %v5203, %v5204
      %v5206 = vsel %vm205, %v5170, 0.0
      %v5207 = vadd.f32 %v5205, %v5206
      %v5208 = vsel %vm205, %v5171, 0.0
      %v5209 = vadd.f32 %v5207, %v5208
      %v5210 = vsel %vm205, %v5172, 0.0
      %v5211 = vadd.f32 %v5209, %v5210
      %v5212 = vsel %vm205, %v5173, 0.0
      %v5213 = vadd.f32 %v5211, %v5212
      %v5214 = vsel %vm205, %v5174, 0.0
      %v5215 = vadd.f32 %v5213, %v5214
      %v5216 = vsel %vm205, %v5175, 0.0
      %v5217 = vadd.f32 %v5215, %v5216
      %v5218 = vsel %vm205, %v5176, 0.0
      %v5219 = vadd.f32 %v5217, %v5218
      %v5220 = vsel %vm205, %v5177, 0.0
      %v5221 = vadd.f32 %v5219, %v5220
      %v5222 = vsel %vm205, %v5178, 0.0
      %v5223 = vadd.f32 %v5221, %v5222
      %v5224 = vsel %vm205, %v5179, 0.0
      %v5225 = vadd.f32 %v5223, %v5224
      %v5226 = vsel %vm205, %v5180, 0.0
      %v5227 = vadd.f32 %v5225, %v5226
      %v5228 = vsel %vm205, %v5181, 0.0
      %v5229 = vadd.f32 %v5227, %v5228
      %v5230 = vsel %vm205, %v5182, 0.0
      %v5231 = vadd.f32 %v5229, %v5230
      %v5232 = vsel %vm205, %v5183, 0.0
      %v5233 = vadd.f32 %v5231, %v5232
      %v5234 = vsel %vm205, %v5184, 0.0
      %v5235 = vadd.f32 %v5233, %v5234
      %v5236 = vsel %vm205, %v5185, 0.0
      %v5237 = vadd.f32 %v5235, %v5236
      %v5238 = vsel %vm205, %v5186, 0.0
      %v5239 = vadd.f32 %v5237, %v5238
      %v5240 = vsel %vm205, %v5187, 0.0
      %v5241 = vadd.f32 %v5239, %v5240
      %v5242 = vsel %vm205, %v5188, 0.0
      %v5243 = vadd.f32 %v5241, %v5242
      %v5244 = vsel %vm205, %v5189, 0.0
      %v5245 = vadd.f32 %v5243, %v5244
      %v5246 = vsel %vm205, %v5190, 0.0
      %v5247 = vadd.f32 %v5245, %v5246
      %v5248 = vsel %vm205, %v5191, 0.0
      %v5249 = vadd.f32 %v5247, %v5248
      %v5250 = vsel %vm205, %v5192, 0.0
      %v5251 = vadd.f32 %v5249, %v5250
      %v5252 = vsel %vm205, %v5193, 0.0
      %v5253 = vadd.f32 %v5251, %v5252
      %v5254 = vsel %vm205, %v5194, 0.0
      %v5255 = vadd.f32 %v5253, %v5254
      %v5256 = vsel %vm205, %v5195, 0.0
      %v5257 = vadd.f32 %v5255, %v5256
      %v5258 = vsel %vm205, %v5196, 0.0
      %v5259 = vadd.f32 %v5257, %v5258
      %v5260 = vrot.slane %v5259, 4
      %v5261 = vadd.f32 %v5259, %v5260
      %v5262 = vrot.slane %v5261, 2
      %v5263 = vadd.f32 %v5261, %v5262
      %v5264 = vrot.slane %v5263, 1
      %v5265 = vadd.f32 %v5263, %v5264
      %v5266 = vmul.f32 %v5265, 0.00390625
      %v5267 = vmul.f32 %v5165, %v5165
      %v5268 = vmul.f32 %v5166, %v5166
      %v5269 = vmul.f32 %v5167, %v5167
      %v5270 = vmul.f32 %v5168, %v5168
      %v5271 = vmul.f32 %v5169, %v5169
      %v5272 = vmul.f32 %v5170, %v5170
      %v5273 = vmul.f32 %v5171, %v5171
      %v5274 = vmul.f32 %v5172, %v5172
      %v5275 = vmul.f32 %v5173, %v5173
      %v5276 = vmul.f32 %v5174, %v5174
      %v5277 = vmul.f32 %v5175, %v5175
      %v5278 = vmul.f32 %v5176, %v5176
      %v5279 = vmul.f32 %v5177, %v5177
      %v5280 = vmul.f32 %v5178, %v5178
      %v5281 = vmul.f32 %v5179, %v5179
      %v5282 = vmul.f32 %v5180, %v5180
      %v5283 = vmul.f32 %v5181, %v5181
      %v5284 = vmul.f32 %v5182, %v5182
      %v5285 = vmul.f32 %v5183, %v5183
      %v5286 = vmul.f32 %v5184, %v5184
      %v5287 = vmul.f32 %v5185, %v5185
      %v5288 = vmul.f32 %v5186, %v5186
      %v5289 = vmul.f32 %v5187, %v5187
      %v5290 = vmul.f32 %v5188, %v5188
      %v5291 = vmul.f32 %v5189, %v5189
      %v5292 = vmul.f32 %v5190, %v5190
      %v5293 = vmul.f32 %v5191, %v5191
      %v5294 = vmul.f32 %v5192, %v5192
      %v5295 = vmul.f32 %v5193, %v5193
      %v5296 = vmul.f32 %v5194, %v5194
      %v5297 = vmul.f32 %v5195, %v5195
      %v5298 = vmul.f32 %v5196, %v5196
      %v5299 = vsel %vm205, %v5267, 0.0
      %v5300 = vsel %vm205, %v5268, 0.0
      %v5301 = vadd.f32 %v5299, %v5300
      %v5302 = vsel %vm205, %v5269, 0.0
      %v5303 = vadd.f32 %v5301, %v5302
      %v5304 = vsel %vm205, %v5270, 0.0
      %v5305 = vadd.f32 %v5303, %v5304
      %v5306 = vsel %vm205, %v5271, 0.0
      %v5307 = vadd.f32 %v5305, %v5306
      %v5308 = vsel %vm205, %v5272, 0.0
      %v5309 = vadd.f32 %v5307, %v5308
      %v5310 = vsel %vm205, %v5273, 0.0
      %v5311 = vadd.f32 %v5309, %v5310
      %v5312 = vsel %vm205, %v5274, 0.0
      %v5313 = vadd.f32 %v5311, %v5312
      %v5314 = vsel %vm205, %v5275, 0.0
      %v5315 = vadd.f32 %v5313, %v5314
      %v5316 = vsel %vm205, %v5276, 0.0
      %v5317 = vadd.f32 %v5315, %v5316
      %v5318 = vsel %vm205, %v5277, 0.0
      %v5319 = vadd.f32 %v5317, %v5318
      %v5320 = vsel %vm205, %v5278, 0.0
      %v5321 = vadd.f32 %v5319, %v5320
      %v5322 = vsel %vm205, %v5279, 0.0
      %v5323 = vadd.f32 %v5321, %v5322
      %v5324 = vsel %vm205, %v5280, 0.0
      %v5325 = vadd.f32 %v5323, %v5324
      %v5326 = vsel %vm205, %v5281, 0.0
      %v5327 = vadd.f32 %v5325, %v5326
      %v5328 = vsel %vm205, %v5282, 0.0
      %v5329 = vadd.f32 %v5327, %v5328
      %v5330 = vsel %vm205, %v5283, 0.0
      %v5331 = vadd.f32 %v5329, %v5330
      %v5332 = vsel %vm205, %v5284, 0.0
      %v5333 = vadd.f32 %v5331, %v5332
      %v5334 = vsel %vm205, %v5285, 0.0
      %v5335 = vadd.f32 %v5333, %v5334
      %v5336 = vsel %vm205, %v5286, 0.0
      %v5337 = vadd.f32 %v5335, %v5336
      %v5338 = vsel %vm205, %v5287, 0.0
      %v5339 = vadd.f32 %v5337, %v5338
      %v5340 = vsel %vm205, %v5288, 0.0
      %v5341 = vadd.f32 %v5339, %v5340
      %v5342 = vsel %vm205, %v5289, 0.0
      %v5343 = vadd.f32 %v5341, %v5342
      %v5344 = vsel %vm205, %v5290, 0.0
      %v5345 = vadd.f32 %v5343, %v5344
      %v5346 = vsel %vm205, %v5291, 0.0
      %v5347 = vadd.f32 %v5345, %v5346
      %v5348 = vsel %vm205, %v5292, 0.0
      %v5349 = vadd.f32 %v5347, %v5348
      %v5350 = vsel %vm205, %v5293, 0.0
      %v5351 = vadd.f32 %v5349, %v5350
      %v5352 = vsel %vm205, %v5294, 0.0
      %v5353 = vadd.f32 %v5351, %v5352
      %v5354 = vsel %vm205, %v5295, 0.0
      %v5355 = vadd.f32 %v5353, %v5354
      %v5356 = vsel %vm205, %v5296, 0.0
      %v5357 = vadd.f32 %v5355, %v5356
      %v5358 = vsel %vm205, %v5297, 0.0
      %v5359 = vadd.f32 %v5357, %v5358
      %v5360 = vsel %vm205, %v5298, 0.0
      %v5361 = vadd.f32 %v5359, %v5360
      %v5362 = vrot.slane %v5361, 4
      %v5363 = vadd.f32 %v5361, %v5362
      %v5364 = vrot.slane %v5363, 2
      %v5365 = vadd.f32 %v5363, %v5364
      %v5366 = vrot.slane %v5365, 1
      %v5367 = vadd.f32 %v5365, %v5366
      %v5368 = vmul.f32 %v5367, 0.00390625
      %v5369 = vmul.f32 %v5266, %v5266
      %v5370 = vsub.f32 %v5368, %v5369
      %v5371 = vsub.f32 %v5165, %v5266
      %v5372 = vsub.f32 %v5166, %v5266
      %v5373 = vsub.f32 %v5167, %v5266
      %v5374 = vsub.f32 %v5168, %v5266
      %v5375 = vsub.f32 %v5169, %v5266
      %v5376 = vsub.f32 %v5170, %v5266
      %v5377 = vsub.f32 %v5171, %v5266
      %v5378 = vsub.f32 %v5172, %v5266
      %v5379 = vsub.f32 %v5173, %v5266
      %v5380 = vsub.f32 %v5174, %v5266
      %v5381 = vsub.f32 %v5175, %v5266
      %v5382 = vsub.f32 %v5176, %v5266
      %v5383 = vsub.f32 %v5177, %v5266
      %v5384 = vsub.f32 %v5178, %v5266
      %v5385 = vsub.f32 %v5179, %v5266
      %v5386 = vsub.f32 %v5180, %v5266
      %v5387 = vsub.f32 %v5181, %v5266
      %v5388 = vsub.f32 %v5182, %v5266
      %v5389 = vsub.f32 %v5183, %v5266
      %v5390 = vsub.f32 %v5184, %v5266
      %v5391 = vsub.f32 %v5185, %v5266
      %v5392 = vsub.f32 %v5186, %v5266
      %v5393 = vsub.f32 %v5187, %v5266
      %v5394 = vsub.f32 %v5188, %v5266
      %v5395 = vsub.f32 %v5189, %v5266
      %v5396 = vsub.f32 %v5190, %v5266
      %v5397 = vsub.f32 %v5191, %v5266
      %v5398 = vsub.f32 %v5192, %v5266
      %v5399 = vsub.f32 %v5193, %v5266
      %v5400 = vsub.f32 %v5194, %v5266
      %v5401 = vsub.f32 %v5195, %v5266
      %v5402 = vsub.f32 %v5196, %v5266
      %v5403 = vadd.f32 %v5370, 1e-05
      %v5404 = vrsqrt.pop %v5403
      %v5405 = vmul.f32 %v5371, %v5404
      %v5406 = vmul.f32 %v5372, %v5404
      %v5407 = vmul.f32 %v5373, %v5404
      %v5408 = vmul.f32 %v5374, %v5404
      %v5409 = vmul.f32 %v5375, %v5404
      %v5410 = vmul.f32 %v5376, %v5404
      %v5411 = vmul.f32 %v5377, %v5404
      %v5412 = vmul.f32 %v5378, %v5404
      %v5413 = vmul.f32 %v5379, %v5404
      %v5414 = vmul.f32 %v5380, %v5404
      %v5415 = vmul.f32 %v5381, %v5404
      %v5416 = vmul.f32 %v5382, %v5404
      %v5417 = vmul.f32 %v5383, %v5404
      %v5418 = vmul.f32 %v5384, %v5404
      %v5419 = vmul.f32 %v5385, %v5404
      %v5420 = vmul.f32 %v5386, %v5404
      %v5421 = vmul.f32 %v5387, %v5404
      %v5422 = vmul.f32 %v5388, %v5404
      %v5423 = vmul.f32 %v5389, %v5404
      %v5424 = vmul.f32 %v5390, %v5404
      %v5425 = vmul.f32 %v5391, %v5404
      %v5426 = vmul.f32 %v5392, %v5404
      %v5427 = vmul.f32 %v5393, %v5404
      %v5428 = vmul.f32 %v5394, %v5404
      %v5429 = vmul.f32 %v5395, %v5404
      %v5430 = vmul.f32 %v5396, %v5404
      %v5431 = vmul.f32 %v5397, %v5404
      %v5432 = vmul.f32 %v5398, %v5404
      %v5433 = vmul.f32 %v5399, %v5404
      %v5434 = vmul.f32 %v5400, %v5404
      %v5435 = vmul.f32 %v5401, %v5404
      %v5436 = vmul.f32 %v5402, %v5404
      %v5437 = vadd.f32 %v5405, %v172
      %v5438 = vadd.f32 %v5406, %v173
      %v5439 = vadd.f32 %v5407, %v174
      %v5440 = vadd.f32 %v5408, %v175
      %v5441 = vadd.f32 %v5409, %v176
      %v5442 = vadd.f32 %v5410, %v177
      %v5443 = vadd.f32 %v5411, %v178
      %v5444 = vadd.f32 %v5412, %v179
      %v5445 = vadd.f32 %v5413, %v180
      %v5446 = vadd.f32 %v5414, %v181
      %v5447 = vadd.f32 %v5415, %v182
      %v5448 = vadd.f32 %v5416, %v183
      %v5449 = vadd.f32 %v5417, %v184
      %v5450 = vadd.f32 %v5418, %v185
      %v5451 = vadd.f32 %v5419, %v186
      %v5452 = vadd.f32 %v5420, %v187
      %v5453 = vadd.f32 %v5421, %v188
      %v5454 = vadd.f32 %v5422, %v189
      %v5455 = vadd.f32 %v5423, %v190
      %v5456 = vadd.f32 %v5424, %v191
      %v5457 = vadd.f32 %v5425, %v192
      %v5458 = vadd.f32 %v5426, %v193
      %v5459 = vadd.f32 %v5427, %v194
      %v5460 = vadd.f32 %v5428, %v195
      %v5461 = vadd.f32 %v5429, %v196
      %v5462 = vadd.f32 %v5430, %v197
      %v5463 = vadd.f32 %v5431, %v198
      %v5464 = vadd.f32 %v5432, %v199
      %v5465 = vadd.f32 %v5433, %v200
      %v5466 = vadd.f32 %v5434, %v201
      %v5467 = vadd.f32 %v5435, %v202
      %v5468 = vadd.f32 %v5436, %v203
      %5469 = vst.msk [vmem:[%s170] sm:$0xff] %vm205, %v5437
      %5470 = vst.msk [vmem:[%s170 + $0x8] sm:$0xff] %vm205, %v5438
      %5471 = vst.msk [vmem:[%s170 + $0x10] sm:$0xff] %vm205, %v5439
      %5472 = vst.msk [vmem:[%s170 + $0x18] sm:$0xff] %vm205, %v5440
      %5473 = vst.msk [vmem:[%s170 + $0x20] sm:$0xff] %vm205, %v5441
      %5474 = vst.msk [vmem:[%s170 + $0x28] sm:$0xff] %vm205, %v5442
      %5475 = vst.msk [vmem:[%s170 + $0x30] sm:$0xff] %vm205, %v5443
      %5476 = vst.msk [vmem:[%s170 + $0x38] sm:$0xff] %vm205, %v5444
      %5477 = vst.msk [vmem:[%s170 + $0x40] sm:$0xff] %vm205, %v5445
      %5478 = vst.msk [vmem:[%s170 + $0x48] sm:$0xff] %vm205, %v5446
      %5479 = vst.msk [vmem:[%s170 + $0x50] sm:$0xff] %vm205, %v5447
      %5480 = vst.msk [vmem:[%s170 + $0x58] sm:$0xff] %vm205, %v5448
      %5481 = vst.msk [vmem:[%s170 + $0x60] sm:$0xff] %vm205, %v5449
      %5482 = vst.msk [vmem:[%s170 + $0x68] sm:$0xff] %vm205, %v5450
      %5483 = vst.msk [vmem:[%s170 + $0x70] sm:$0xff] %vm205, %v5451
      %5484 = vst.msk [vmem:[%s170 + $0x78] sm:$0xff] %vm205, %v5452
      %5485 = vst.msk [vmem:[%s170 + $0x80] sm:$0xff] %vm205, %v5453
      %5486 = vst.msk [vmem:[%s170 + $0x88] sm:$0xff] %vm205, %v5454
      %5487 = vst.msk [vmem:[%s170 + $0x90] sm:$0xff] %vm205, %v5455
      %5488 = vst.msk [vmem:[%s170 + $0x98] sm:$0xff] %vm205, %v5456
      %5489 = vst.msk [vmem:[%s170 + $0xa0] sm:$0xff] %vm205, %v5457
      %5490 = vst.msk [vmem:[%s170 + $0xa8] sm:$0xff] %vm205, %v5458
      %5491 = vst.msk [vmem:[%s170 + $0xb0] sm:$0xff] %vm205, %v5459
      %5492 = vst.msk [vmem:[%s170 + $0xb8] sm:$0xff] %vm205, %v5460
      %5493 = vst.msk [vmem:[%s170 + $0xc0] sm:$0xff] %vm205, %v5461
      %5494 = vst.msk [vmem:[%s170 + $0xc8] sm:$0xff] %vm205, %v5462
      %5495 = vst.msk [vmem:[%s170 + $0xd0] sm:$0xff] %vm205, %v5463
      %5496 = vst.msk [vmem:[%s170 + $0xd8] sm:$0xff] %vm205, %v5464
      %5497 = vst.msk [vmem:[%s170 + $0xe0] sm:$0xff] %vm205, %v5465
      %5498 = vst.msk [vmem:[%s170 + $0xe8] sm:$0xff] %vm205, %v5466
      %5499 = vst.msk [vmem:[%s170 + $0xf0] sm:$0xff] %vm205, %v5467
      %5500 = vst.msk [vmem:[%s170 + $0xf8] sm:$0xff] %vm205, %v5468
      %p5501 = scmp.lt.s32.totalorder %s14, 1
      %s5502 = scalar_select %p5501, %s14, 1
      %s5503 = smul.addr %s5502, 32
      %s5504 = smul.addr %s5503, 8
      %s5505 = scalar_lea.vmem %s3, %s5504
      // Predicated region
      $region33: #{resnet_block_forward.1} parent=31 // pred_check
        %p5506 = pneg %p100
      $region34: #{resnet_block_forward.1} parent=31 // pred_check_branch
        %5508 = sbr.rel (%p5506) target = $region36
      $region35: #{resnet_block_forward.1} parent=31 // pred_region
        _
      $region36: #{resnet_block_forward.1} parent=31 // pred_fallthru
        _
    $region32: #{resnet_block_forward.1} parent=5 // pred_fallthru
      _
    %p5509 = scmp.le.s32.totalorder 2, %s9
    // Predicated region
    $region37: #{resnet_block_forward.1} parent=5 // pred_check
      %p5510 = pneg %p5509
    $region38: #{resnet_block_forward.1} parent=5 // pred_check_branch
      %5512 = sbr.rel (%p5510) target = $region40
    $region39: #{resnet_block_forward.1} parent=5 // pred_region
      %s5513 = ssub.s32 %s9, 2
      // Predicated region
      $region41: #{resnet_block_forward.1} parent=39 // pred_check
        %p5514 = pneg %p106
      $region42: #{resnet_block_forward.1} parent=39 // pred_check_branch
        %5516 = sbr.rel (%p5514) target = $region44
      $region43: #{resnet_block_forward.1} parent=39 // pred_region
        %p5517 = scmp.lt.s32.totalorder %s15, 1
        %s5518 = scalar_select %p5517, %s15, 1
        %s5519 = smul.addr %s5518, 32
        %s5520 = smul.addr %s5519, 8
        %s5521 = scalar_lea.vmem %s3, %s5520
      $region44: #{resnet_block_forward.1} parent=39 // pred_fallthru
        _
    $region40: #{resnet_block_forward.1} parent=5 // pred_fallthru
      _
  $region6: #{resnet_block_forward.1} parent=0 // loop_footer
    %s13 = sadd.s32 1, %s9
  $region7: #{resnet_block_forward.1} parent=0 // loop_footer_branch
    %8 = sbr.rel target = $region3
  $region8: #{resnet_block_forward.1} parent=0 // loop_exit
    _

</llo_original>
